<compile_context>
chip_gen: v7x
topology: tpu7x:2x2x1
jax: 0.10.0
libtpu: 0.0.40
codegen_flags: <defaults>
</compile_context>

<pallas_src>
import functools

import jax
import jax.numpy as jnp
from jax import lax
from jax.experimental import pallas as pl
from jax.experimental.pallas import tpu as pltpu


def _round_up(x, m):
    return ((x + m - 1) // m) * m


def _sigmoid_fast(z):
    # EUP-friendly sigmoid for the in-loop gates: exp (EUP) + approximate
    # reciprocal (EUP) keeps the divide's Newton refinement off the VALU, which
    # matters most on the serial recurrence critical path.
    return pl.reciprocal(1.0 + jnp.exp(-z), approx=True)


# ----------------------------------------------------------------------------
# Kernel: fused multi-layer LSTM + sigmoid over one (batch block, seq chunk).
# ----------------------------------------------------------------------------
def _decoder_lstm_kernel(x_ref, *rest, num_layers, carry_in_vregs, unroll):
    """Refs:
      x_ref          : (Ts, Bb, D0p) bf16 time-major input chunk
      per layer l    : wih_l (Din_p, 4Hp) bf16, whh_l (Hp, 4Hp) bf16,
                       b_l (1, 4Hp) f32  (b_ih + b_hh, gate-padded)
      out_ref        : (Ts, Bb, Hp) bf16 sigmoid(h_t) of last layer
      h_sc, c_sc     : (L, Bb, Hp) f32 recurrent state (persists across the
                       sequence-chunk grid axis)
      gx_sc          : (Ts, Bb, 4Hp) f32 hoisted input projection
      y_sc           : (Ts, Bb, Hp) bf16 per-layer h_t sequence
    """
    w_refs = rest[:3 * num_layers]
    out_ref = rest[3 * num_layers]
    h_sc, c_sc, gx_sc, y_sc = rest[3 * num_layers + 1:]

    Ts, Bb, _ = out_ref.shape
    Hp = h_sc.shape[-1]

    # Reset recurrent state at the start of each batch block's sequence.
    @pl.when(pl.program_id(1) == 0)
    def _():
        h_sc[...] = jnp.zeros_like(h_sc)
        c_sc[...] = jnp.zeros_like(c_sc)

    for layer in range(num_layers):
        wih_ref, whh_ref, b_ref = w_refs[3 * layer:3 * layer + 3]
        d_in = wih_ref.shape[0]

        # ---- Hoisted input projection: one big lane-dense MXU GEMM ----------
        if layer == 0:
            x2d = x_ref[...].reshape(Ts * Bb, d_in)          # bf16, no cast
        else:
            x2d = y_sc[...].reshape(Ts * Bb, d_in)           # bf16, no cast
        gx = jnp.dot(x2d, wih_ref[...], preferred_element_type=jnp.float32)
        gx_sc[...] = (gx + b_ref[...]).reshape(Ts, Bb, 4 * Hp)

        whh = whh_ref[...]                                   # (Hp, 4Hp) bf16

        def gate_math(gates, c):
            # Gate order matches PyTorch: i, f, g, o (each Hp wide, lane-aligned).
            i_g = _sigmoid_fast(gates[:, 0 * Hp:1 * Hp])
            f_g = _sigmoid_fast(gates[:, 1 * Hp:2 * Hp])
            g_g = jnp.tanh(gates[:, 2 * Hp:3 * Hp])
            o_g = _sigmoid_fast(gates[:, 3 * Hp:4 * Hp])
            c_new = f_g * c + i_g * g_g
            h_new = o_g * jnp.tanh(c_new)
            return h_new, c_new

        # ---- Serial recurrence: only h @ W_hh + elementwise per step --------
        if carry_in_vregs:
            # h/c live in vregs across steps: removes 2 loads + 2 stores from
            # the per-step dependence chain feeding the MXU push.
            def step(t, carry, *, whh=whh):
                h, c = carry
                gates = gx_sc[t] + jnp.dot(
                    h.astype(jnp.bfloat16), whh,
                    preferred_element_type=jnp.float32)
                h_new, c_new = gate_math(gates, c)
                y_sc[t] = h_new.astype(y_sc.dtype)
                return (h_new, c_new)

            h_fin, c_fin = lax.fori_loop(
                0, Ts, step, (h_sc[layer], c_sc[layer]), unroll=unroll)
            h_sc[layer] = h_fin          # persist for the next sequence chunk
            c_sc[layer] = c_fin
        else:
            # Large Bb*Hp: keep state in scratch to avoid vreg spills.
            def step(t, carry, *, whh=whh, layer=layer):
                h = h_sc[layer]
                c = c_sc[layer]
                gates = gx_sc[t] + jnp.dot(
                    h.astype(jnp.bfloat16), whh,
                    preferred_element_type=jnp.float32)
                h_new, c_new = gate_math(gates, c)
                h_sc[layer] = h_new
                c_sc[layer] = c_new
                y_sc[t] = h_new.astype(y_sc.dtype)
                return carry

            lax.fori_loop(0, Ts, step, 0, unroll=unroll)

    # ---- Bulk epilogue: lane-dense sigmoid + store of the whole chunk -------
    # Hoisted off the serial recurrence (exact sigmoid keeps output in [0,1]);
    # this vectorized work overlaps the next chunk's DMA.
    out_ref[...] = jax.nn.sigmoid(
        y_sc[...].astype(jnp.float32)).astype(out_ref.dtype)


# ----------------------------------------------------------------------------
# Host-side weight prep (layout plumbing: transpose + per-gate lane padding).
# ----------------------------------------------------------------------------
def _prep_layer_params(w_ih, w_hh, b_ih, b_hh, d_pad, h_pad):
    four_h, d_in = w_ih.shape
    H = four_h // 4

    def pad_gate_cols(w_t, rows, rows_pad):
        # w_t: (rows, 4H) with gates [i,f,g,o] concatenated -> (rows_pad, 4*h_pad)
        w4 = w_t.reshape(rows, 4, H)
        w4 = jnp.pad(w4, ((0, rows_pad - rows), (0, 0), (0, h_pad - H)))
        return w4.reshape(rows_pad, 4 * h_pad)

    wih_p = pad_gate_cols(jnp.transpose(w_ih).astype(jnp.float32), d_in, d_pad)
    whh_p = pad_gate_cols(jnp.transpose(w_hh).astype(jnp.float32), H, h_pad)
    b = (b_ih + b_hh).astype(jnp.float32).reshape(4, H)
    b_p = jnp.pad(b, ((0, 0), (0, h_pad - H))).reshape(1, 4 * h_pad)
    return wih_p.astype(jnp.bfloat16), whh_p.astype(jnp.bfloat16), b_p


def _vmem_budgets():
    """Generation-aware VMEM sizing: v5e/v6e have 128 MiB/TC, v7x 64 MiB/TC."""
    cap = 64 * 1024 * 1024                       # conservative (v7x) fallback
    try:
        cap = int(pltpu.get_tpu_info().vmem_capacity_bytes)
    except Exception:
        pass
    limit = max(cap - 16 * 1024 * 1024, 32 * 1024 * 1024)   # compiler headroom
    budget = max(int(limit * 0.85), 24 * 1024 * 1024)       # chunk-sizing budget
    return budget, limit


def _choose_seq_chunk(S, Bb, Dp, Hp, num_layers, budget_bytes):
    """Largest sequence chunk whose VMEM footprint fits the budget."""
    w_bytes = 0
    for l in range(num_layers):
        d = Dp if l == 0 else Hp
        w_bytes += (d * 4 * Hp + Hp * 4 * Hp) * 2 + 4 * Hp * 4   # bf16 W + f32 b
    state_bytes = 2 * num_layers * Bb * Hp * 4
    # Weights are double-buffered by the BlockSpec pipeline even though their
    # block index never changes.
    # TODO(synk): single-buffer / stream per-layer weights (pl.Buffered(1) or
    # pl.ANY + sync_copy) for very large H on v7x, where 2*w_bytes alone can
    # exceed the 64 MiB/TC budget.
    fixed = 2 * w_bytes + state_bytes
    ts_ok = 8
    for ts in (512, 256, 128, 64, 32, 16, 8):
        x_blk = ts * Bb * Dp * 2 * 2          # bf16 input chunk, double-buffered
        o_blk = ts * Bb * Hp * 2 * 2          # bf16 output chunk, double-buffered
        gx = ts * Bb * 4 * Hp * 4             # f32 hoisted projection
        y = ts * Bb * Hp * 2                  # bf16 inter-layer activations
        if fixed + x_blk + o_blk + gx + y <= budget_bytes:
            ts_ok = ts
            break
    return max(8, min(ts_ok, _round_up(S, 8)))


# ----------------------------------------------------------------------------
# Public forward: DecoderRNN.forward (batch_first LSTM stack + sigmoid).
# ----------------------------------------------------------------------------
def decoder_rnn_forward(encoded_input, params, *, seq_chunk=None):
    """encoded_input: (B, S, hidden_size); params: [(w_ih, w_hh, b_ih, b_hh)]
    per layer with PyTorch nn.LSTM shapes. Returns (B, S, output_size) f32."""
    B, S, D_in = encoded_input.shape
    num_layers = len(params)
    H = params[0][1].shape[1]                 # w_hh: (4H, H)

    Hp = _round_up(H, 128)                    # lane-aligned gate blocks
    Dp = _round_up(D_in, 128)
    Bp8 = _round_up(B, 8)                     # sublane-aligned batch

    # Batch blocking: make >=2 independent blocks when the padded batch allows
    # it, so the leading "parallel" grid axis can be split across v7x's two
    # TensorCores (a single block on tiny batches / single-TC chips).
    if Bp8 >= 16:
        Bb = min(128, _round_up(pl.cdiv(Bp8, 2), 8))
    else:
        Bb = Bp8
    Bp = _round_up(Bp8, Bb)

    budget, vmem_limit = _vmem_budgets()
    Ts = seq_chunk or _choose_seq_chunk(S, Bb, Dp, Hp, num_layers, budget)
    S_pad = pl.cdiv(S, Ts) * Ts

    # Time-major, zero-padded, bf16 input stream (halves streamed HBM bytes and
    # the staging copy; padded rows/cols/steps are zeros and get sliced off).
    x_tm = jnp.transpose(encoded_input.astype(jnp.bfloat16), (1, 0, 2))
    x_tm = jnp.pad(x_tm, ((0, S_pad - S), (0, Bp - B), (0, Dp - D_in)))

    weight_args = []
    in_specs = [pl.BlockSpec((Ts, Bb, Dp), lambda b, s: (s, b, 0))]
    for layer, (w_ih, w_hh, b_ih, b_hh) in enumerate(params):
        d_pad = Dp if layer == 0 else Hp
        wih_p, whh_p, b_p = _prep_layer_params(w_ih, w_hh, b_ih, b_hh, d_pad, Hp)
        weight_args += [wih_p, whh_p, b_p]
        in_specs += [
            pl.BlockSpec((d_pad, 4 * Hp), lambda b, s: (0, 0)),   # resident weights
            pl.BlockSpec((Hp, 4 * Hp), lambda b, s: (0, 0)),
            pl.BlockSpec((1, 4 * Hp), lambda b, s: (0, 0)),
        ]

    out_specs = pl.BlockSpec((Ts, Bb, Hp), lambda b, s: (s, b, 0))
    scratch_shapes = [
        pltpu.VMEM((num_layers, Bb, Hp), jnp.float32),   # h state (all layers)
        pltpu.VMEM((num_layers, Bb, Hp), jnp.float32),   # c state (all layers)
        pltpu.VMEM((Ts, Bb, 4 * Hp), jnp.float32),       # hoisted input projection
        pltpu.VMEM((Ts, Bb, Hp), jnp.bfloat16),          # per-layer h_t sequence
    ]

    kernel = functools.partial(
        _decoder_lstm_kernel,
        num_layers=num_layers,
        # Keep h/c in vregs when both states fit in a handful of vregs.
        carry_in_vregs=(Bb * Hp <= 8 * 1024),
        unroll=max(1, min(8, Ts)),
    )

    out_padded = pl.pallas_call(
        kernel,
        out_shape=jax.ShapeDtypeStruct((S_pad, Bp, Hp), jnp.bfloat16),
        grid_spec=pltpu.PrefetchScalarGridSpec(
            num_scalar_prefetch=0,
            grid=(Bp // Bb, S_pad // Ts),
            in_specs=in_specs,
            out_specs=out_specs,
            scratch_shapes=scratch_shapes,
        ),
        compiler_params=pltpu.CompilerParams(
            # Batch blocks are independent (megacore split on v7x); the
            # sequence axis carries h/c state and MUST stay "arbitrary".
            # TODO(synk): verify on v7x HW that "parallel" shards the batch
            # axis across TensorCores; otherwise use pltpu.CORE_PARALLEL.
            dimension_semantics=("parallel", "arbitrary"),
            vmem_limit_bytes=vmem_limit,
        ),
    )(x_tm, *weight_args)

    out_tm = out_padded[:S, :B, :H].astype(jnp.float32)
    return jnp.transpose(out_tm, (1, 0, 2))


# ----------------------------------------------------------------------------
# Parameter init matching the PyTorch module's shapes/init.
# ----------------------------------------------------------------------------
def _xavier_uniform(key, shape, gain):
    fan_out, fan_in = shape
    bound = gain * jnp.sqrt(6.0 / (fan_in + fan_out))
    return jax.random.uniform(key, shape, jnp.float32, -bound, bound)


def init_decoder_rnn_params(key, hidden_size, output_size, num_layers):
    H = output_size
    params = []
    for layer in range(num_layers):
        d_in = hidden_size if layer == 0 else H
        key, k1, k2, k3, k4 = jax.random.split(key, 5)
        if layer == 0:
            w_ih = _xavier_uniform(k1, (4 * H, d_in), gain=jnp.sqrt(2.0))
            w_hh = _xavier_uniform(k2, (4 * H, H), gain=jnp.sqrt(2.0))
        else:
            stdv = 1.0 / jnp.sqrt(H)
            w_ih = jax.random.uniform(k1, (4 * H, d_in), jnp.float32, -stdv, stdv)
            w_hh = jax.random.uniform(k2, (4 * H, H), jnp.float32, -stdv, stdv)
        stdv = 1.0 / jnp.sqrt(H)
        b_ih = jax.random.uniform(k3, (4 * H,), jnp.float32, -stdv, stdv)
        b_hh = jax.random.uniform(k4, (4 * H,), jnp.float32, -stdv, stdv)
        params.append((w_ih, w_hh, b_ih, b_hh))
    return params


def _reference_decoder_rnn(x, params):
    """Pure-JAX f32 reference of the PyTorch forward (for verification)."""
    B, S, _ = x.shape
    h_seq = x.astype(jnp.float32)
    for (w_ih, w_hh, b_ih, b_hh) in params:
        H = w_hh.shape[1]
        h = jnp.zeros((B, H), jnp.float32)
        c = jnp.zeros((B, H), jnp.float32)
        outs = []
        for t in range(S):
            g = h_seq[:, t, :] @ w_ih.T + h @ w_hh.T + b_ih + b_hh
            i = jax.nn.sigmoid(g[:, 0 * H:1 * H])
            f = jax.nn.sigmoid(g[:, 1 * H:2 * H])
            gg = jnp.tanh(g[:, 2 * H:3 * H])
            o = jax.nn.sigmoid(g[:, 3 * H:4 * H])
            c = f * c + i * gg
            h = o * jnp.tanh(c)
            outs.append(h)
        h_seq = jnp.stack(outs, axis=1)
    return jax.nn.sigmoid(h_seq)


if __name__ == "__main__":
    # Shapes implied by the module's forward:
    # encoded_input (batch, seq, hidden_size) -> output (batch, seq, output_size)
    batch, seq = 2, 8
    hidden_size, output_size, num_layers = 32, 16, 2

    key = jax.random.PRNGKey(0)
    k_x, k_p = jax.random.split(key)
    encoded_input = jax.random.normal(k_x, (batch, seq, hidden_size), jnp.float32)
    params = init_decoder_rnn_params(k_p, hidden_size, output_size, num_layers)

    decoded_output = decoder_rnn_forward(encoded_input, params)
    decoded_output = jax.block_until_ready(decoded_output)

    assert decoded_output.shape == (batch, seq, output_size)
    assert bool(jnp.all(jnp.isfinite(decoded_output)))
    assert bool(jnp.all((decoded_output >= 0.0) & (decoded_output <= 1.0)))

    ref = _reference_decoder_rnn(encoded_input, params)
    max_err = float(jnp.max(jnp.abs(decoded_output - ref)))
    # bf16 matmuls / activations with f32 state & gate accumulation -> small
    # error on the sigmoid output.
    assert max_err < 5e-2, f"max abs err vs reference: {max_err}"

    print("KERNEL_OK")
</pallas_src>

<mosaic_0001>
module attributes {stable_mosaic.version = 11 : i64} {
  func.func @_decoder_lstm_kernel(%arg0: i32, %arg1: i32, %arg2: memref<8x8x128xbf16, #tpu.memory_space<vmem>>, %arg3: memref<128x512xbf16, #tpu.memory_space<vmem>>, %arg4: memref<128x512xbf16, #tpu.memory_space<vmem>>, %arg5: memref<1x512xf32, #tpu.memory_space<vmem>>, %arg6: memref<128x512xbf16, #tpu.memory_space<vmem>>, %arg7: memref<128x512xbf16, #tpu.memory_space<vmem>>, %arg8: memref<1x512xf32, #tpu.memory_space<vmem>>, %arg9: memref<8x8x128xbf16, #tpu.memory_space<vmem>>, %arg10: memref<2x8x128xf32, #tpu.memory_space<vmem>>, %arg11: memref<2x8x128xf32, #tpu.memory_space<vmem>>, %arg12: memref<8x8x512xf32, #tpu.memory_space<vmem>>, %arg13: memref<8x8x128xbf16, #tpu.memory_space<vmem>>) attributes {dimension_semantics = [#tpu.dimension_semantics<parallel>, #tpu.dimension_semantics<arbitrary>], iteration_bounds = array<i64: 1, 1>, scalar_prefetch = 0 : i64, scratch_operands = 4 : i64, tpu.core_type = #tpu.core_type<tc>, window_params = [{transform_indices = @transform_0, window_bounds = array<i64: 8, 8, 128>}, {pipeline_mode = #tpu.pipeline_mode<synchronous>, transform_indices = @transform_1, window_bounds = array<i64: 128, 512>}, {pipeline_mode = #tpu.pipeline_mode<synchronous>, transform_indices = @transform_2, window_bounds = array<i64: 128, 512>}, {pipeline_mode = #tpu.pipeline_mode<synchronous>, transform_indices = @transform_3, window_bounds = array<i64: 1, 512>}, {pipeline_mode = #tpu.pipeline_mode<synchronous>, transform_indices = @transform_4, window_bounds = array<i64: 128, 512>}, {pipeline_mode = #tpu.pipeline_mode<synchronous>, transform_indices = @transform_5, window_bounds = array<i64: 128, 512>}, {pipeline_mode = #tpu.pipeline_mode<synchronous>, transform_indices = @transform_6, window_bounds = array<i64: 1, 512>}, {transform_indices = @transform_7, window_bounds = array<i64: 8, 8, 128>}]} {
    %c0_i32 = arith.constant 0 : i32
    %0 = arith.cmpi eq, %arg1, %c0_i32 : i32
    %1 = arith.extui %0 : i1 to i32
    %c0_i32_0 = arith.constant 0 : i32
    %2 = arith.cmpi ne, %1, %c0_i32_0 : i32
    scf.if %2 {
      %cst_241 = arith.constant 0.000000e+00 : f32
      %676 = vector.broadcast %cst_241 : f32 to vector<2x8x128xf32>
      %c0_242 = arith.constant 0 : index
      %c0_243 = arith.constant 0 : index
      %c0_244 = arith.constant 0 : index
      %677 = vector.load %arg10[%c0_242, %c0_243, %c0_244] : memref<2x8x128xf32, #tpu.memory_space<vmem>>, vector<2x8x128xf32>
      tpu.vector_store %arg10[%c0_242, %c0_243, %c0_244], %676 {strides = array<i32>} : memref<2x8x128xf32, #tpu.memory_space<vmem>>, vector<2x8x128xf32>,
      %cst_245 = arith.constant 0.000000e+00 : f32
      %678 = vector.broadcast %cst_245 : f32 to vector<2x8x128xf32>
      %c0_246 = arith.constant 0 : index
      %c0_247 = arith.constant 0 : index
      %c0_248 = arith.constant 0 : index
      %679 = vector.load %arg11[%c0_246, %c0_247, %c0_248] : memref<2x8x128xf32, #tpu.memory_space<vmem>>, vector<2x8x128xf32>
      tpu.vector_store %arg11[%c0_246, %c0_247, %c0_248], %678 {strides = array<i32>} : memref<2x8x128xf32, #tpu.memory_space<vmem>>, vector<2x8x128xf32>,
    } else {
    }
    %c0 = arith.constant 0 : index
    %c0_1 = arith.constant 0 : index
    %c0_2 = arith.constant 0 : index
    %3 = vector.load %arg2[%c0, %c0_1, %c0_2] : memref<8x8x128xbf16, #tpu.memory_space<vmem>>, vector<8x8x128xbf16>
    %4 = vector.shape_cast %3 : vector<8x8x128xbf16> to vector<64x128xbf16>
    %c0_3 = arith.constant 0 : index
    %c0_4 = arith.constant 0 : index
    %5 = vector.load %arg3[%c0_3, %c0_4] : memref<128x512xbf16, #tpu.memory_space<vmem>>, vector<128x512xbf16>
    %cst = arith.constant dense<0.000000e+00> : vector<64x512xf32>
    %6 = tpu.matmul %4, %5, %cst {dimension_numbers = #tpu.dot_dimension_numbers<[1], [0], [0], [1], [0, 0, 1, 1], [], []>} : vector<64x128xbf16>, vector<128x512xbf16>, vector<64x512xf32> -> vector<64x512xf32>
    %c0_5 = arith.constant 0 : index
    %c0_6 = arith.constant 0 : index
    %7 = vector.load %arg5[%c0_5, %c0_6] : memref<1x512xf32, #tpu.memory_space<vmem>>, vector<1x512xf32>
    %8 = vector.broadcast %7 : vector<1x512xf32> to vector<64x512xf32>
    %9 = arith.addf %6, %8 : vector<64x512xf32>
    %10 = vector.shape_cast %9 : vector<64x512xf32> to vector<8x8x512xf32>
    %c0_7 = arith.constant 0 : index
    %c0_8 = arith.constant 0 : index
    %c0_9 = arith.constant 0 : index
    %11 = vector.load %arg12[%c0_7, %c0_8, %c0_9] : memref<8x8x512xf32, #tpu.memory_space<vmem>>, vector<8x8x512xf32>
    tpu.vector_store %arg12[%c0_7, %c0_8, %c0_9], %10 {strides = array<i32>} : memref<8x8x512xf32, #tpu.memory_space<vmem>>, vector<8x8x512xf32>,
    %c0_10 = arith.constant 0 : index
    %c0_11 = arith.constant 0 : index
    %12 = vector.load %arg4[%c0_10, %c0_11] : memref<128x512xbf16, #tpu.memory_space<vmem>>, vector<128x512xbf16>
    %c0_12 = arith.constant 0 : index
    %c0_13 = arith.constant 0 : index
    %c0_14 = arith.constant 0 : index
    %13 = vector.load %arg10[%c0_12, %c0_13, %c0_14] : memref<2x8x128xf32, #tpu.memory_space<vmem>>, vector<1x8x128xf32>
    %14 = vector.shape_cast %13 : vector<1x8x128xf32> to vector<8x128xf32>
    %c0_15 = arith.constant 0 : index
    %c0_16 = arith.constant 0 : index
    %c0_17 = arith.constant 0 : index
    %15 = vector.load %arg11[%c0_15, %c0_16, %c0_17] : memref<2x8x128xf32, #tpu.memory_space<vmem>>, vector<1x8x128xf32>
    %16 = vector.shape_cast %15 : vector<1x8x128xf32> to vector<8x128xf32>
    %c0_i32_18 = arith.constant 0 : i32
    %17 = arith.index_cast %c0_i32_18 : i32 to index
    %c0_19 = arith.constant 0 : index
    %c0_20 = arith.constant 0 : index
    %18 = vector.load %arg12[%17, %c0_19, %c0_20] : memref<8x8x512xf32, #tpu.memory_space<vmem>>, vector<1x8x512xf32>
    %19 = vector.shape_cast %18 : vector<1x8x512xf32> to vector<8x512xf32>
    %20 = arith.truncf %14 : vector<8x128xf32> to vector<8x128xbf16>
    %cst_21 = arith.constant dense<0.000000e+00> : vector<8x512xf32>
    %21 = tpu.matmul %20, %12, %cst_21 {dimension_numbers = #tpu.dot_dimension_numbers<[1], [0], [0], [1], [0, 0, 1, 1], [], []>} : vector<8x128xbf16>, vector<128x512xbf16>, vector<8x512xf32> -> vector<8x512xf32>
    %22 = arith.addf %19, %21 : vector<8x512xf32>
    %23 = vector.extract_strided_slice %22 {offsets = [0, 0], sizes = [8, 128], strides = [1, 1]} : vector<8x512xf32> to vector<8x128xf32>
    %cst_22 = arith.constant 0.000000e+00 : f32
    %24 = vector.broadcast %cst_22 : f32 to vector<8x128xf32>
    %25 = arith.subf %24, %23 : vector<8x128xf32>
    %26 = math.exp %25 : vector<8x128xf32>
    %cst_23 = arith.constant 1.000000e+00 : f32
    %27 = vector.broadcast %cst_23 : f32 to vector<8x128xf32>
    %28 = arith.addf %27, %26 : vector<8x128xf32>
    %29 = tpu.reciprocal %28 {approx = true} : vector<8x128xf32> -> vector<8x128xf32>
    %30 = vector.extract_strided_slice %22 {offsets = [0, 128], sizes = [8, 128], strides = [1, 1]} : vector<8x512xf32> to vector<8x128xf32>
    %cst_24 = arith.constant 0.000000e+00 : f32
    %31 = vector.broadcast %cst_24 : f32 to vector<8x128xf32>
    %32 = arith.subf %31, %30 : vector<8x128xf32>
    %33 = math.exp %32 : vector<8x128xf32>
    %cst_25 = arith.constant 1.000000e+00 : f32
    %34 = vector.broadcast %cst_25 : f32 to vector<8x128xf32>
    %35 = arith.addf %34, %33 : vector<8x128xf32>
    %36 = tpu.reciprocal %35 {approx = true} : vector<8x128xf32> -> vector<8x128xf32>
    %37 = vector.extract_strided_slice %22 {offsets = [0, 256], sizes = [8, 128], strides = [1, 1]} : vector<8x512xf32> to vector<8x128xf32>
    %38 = math.tanh %37 : vector<8x128xf32>
    %39 = vector.extract_strided_slice %22 {offsets = [0, 384], sizes = [8, 128], strides = [1, 1]} : vector<8x512xf32> to vector<8x128xf32>
    %cst_26 = arith.constant 0.000000e+00 : f32
    %40 = vector.broadcast %cst_26 : f32 to vector<8x128xf32>
    %41 = arith.subf %40, %39 : vector<8x128xf32>
    %42 = math.exp %41 : vector<8x128xf32>
    %cst_27 = arith.constant 1.000000e+00 : f32
    %43 = vector.broadcast %cst_27 : f32 to vector<8x128xf32>
    %44 = arith.addf %43, %42 : vector<8x128xf32>
    %45 = tpu.reciprocal %44 {approx = true} : vector<8x128xf32> -> vector<8x128xf32>
    %46 = arith.mulf %36, %16 : vector<8x128xf32>
    %47 = arith.mulf %29, %38 : vector<8x128xf32>
    %48 = arith.addf %46, %47 : vector<8x128xf32>
    %49 = math.tanh %48 : vector<8x128xf32>
    %50 = arith.mulf %45, %49 : vector<8x128xf32>
    %51 = arith.truncf %50 : vector<8x128xf32> to vector<8x128xbf16>
    %52 = arith.index_cast %c0_i32_18 : i32 to index
    %c0_28 = arith.constant 0 : index
    %c0_29 = arith.constant 0 : index
    %53 = vector.load %arg13[%52, %c0_28, %c0_29] : memref<8x8x128xbf16, #tpu.memory_space<vmem>>, vector<1x8x128xbf16>
    %54 = vector.shape_cast %53 : vector<1x8x128xbf16> to vector<8x128xbf16>
    %55 = vector.shape_cast %51 : vector<8x128xbf16> to vector<1x8x128xbf16>
    tpu.vector_store %arg13[%52, %c0_28, %c0_29], %55 {strides = array<i32>} : memref<8x8x128xbf16, #tpu.memory_space<vmem>>, vector<1x8x128xbf16>,
    %c1_i32 = arith.constant 1 : i32
    %56 = arith.index_cast %c1_i32 : i32 to index
    %c0_30 = arith.constant 0 : index
    %c0_31 = arith.constant 0 : index
    %57 = vector.load %arg12[%56, %c0_30, %c0_31] : memref<8x8x512xf32, #tpu.memory_space<vmem>>, vector<1x8x512xf32>
    %58 = vector.shape_cast %57 : vector<1x8x512xf32> to vector<8x512xf32>
    %59 = arith.truncf %50 : vector<8x128xf32> to vector<8x128xbf16>
    %cst_32 = arith.constant dense<0.000000e+00> : vector<8x512xf32>
    %60 = tpu.matmul %59, %12, %cst_32 {dimension_numbers = #tpu.dot_dimension_numbers<[1], [0], [0], [1], [0, 0, 1, 1], [], []>} : vector<8x128xbf16>, vector<128x512xbf16>, vector<8x512xf32> -> vector<8x512xf32>
    %61 = arith.addf %58, %60 : vector<8x512xf32>
    %62 = vector.extract_strided_slice %61 {offsets = [0, 0], sizes = [8, 128], strides = [1, 1]} : vector<8x512xf32> to vector<8x128xf32>
    %cst_33 = arith.constant 0.000000e+00 : f32
    %63 = vector.broadcast %cst_33 : f32 to vector<8x128xf32>
    %64 = arith.subf %63, %62 : vector<8x128xf32>
    %65 = math.exp %64 : vector<8x128xf32>
    %cst_34 = arith.constant 1.000000e+00 : f32
    %66 = vector.broadcast %cst_34 : f32 to vector<8x128xf32>
    %67 = arith.addf %66, %65 : vector<8x128xf32>
    %68 = tpu.reciprocal %67 {approx = true} : vector<8x128xf32> -> vector<8x128xf32>
    %69 = vector.extract_strided_slice %61 {offsets = [0, 128], sizes = [8, 128], strides = [1, 1]} : vector<8x512xf32> to vector<8x128xf32>
    %cst_35 = arith.constant 0.000000e+00 : f32
    %70 = vector.broadcast %cst_35 : f32 to vector<8x128xf32>
    %71 = arith.subf %70, %69 : vector<8x128xf32>
    %72 = math.exp %71 : vector<8x128xf32>
    %cst_36 = arith.constant 1.000000e+00 : f32
    %73 = vector.broadcast %cst_36 : f32 to vector<8x128xf32>
    %74 = arith.addf %73, %72 : vector<8x128xf32>
    %75 = tpu.reciprocal %74 {approx = true} : vector<8x128xf32> -> vector<8x128xf32>
    %76 = vector.extract_strided_slice %61 {offsets = [0, 256], sizes = [8, 128], strides = [1, 1]} : vector<8x512xf32> to vector<8x128xf32>
    %77 = math.tanh %76 : vector<8x128xf32>
    %78 = vector.extract_strided_slice %61 {offsets = [0, 384], sizes = [8, 128], strides = [1, 1]} : vector<8x512xf32> to vector<8x128xf32>
    %cst_37 = arith.constant 0.000000e+00 : f32
    %79 = vector.broadcast %cst_37 : f32 to vector<8x128xf32>
    %80 = arith.subf %79, %78 : vector<8x128xf32>
    %81 = math.exp %80 : vector<8x128xf32>
    %cst_38 = arith.constant 1.000000e+00 : f32
    %82 = vector.broadcast %cst_38 : f32 to vector<8x128xf32>
    %83 = arith.addf %82, %81 : vector<8x128xf32>
    %84 = tpu.reciprocal %83 {approx = true} : vector<8x128xf32> -> vector<8x128xf32>
    %85 = arith.mulf %75, %48 : vector<8x128xf32>
    %86 = arith.mulf %68, %77 : vector<8x128xf32>
    %87 = arith.addf %85, %86 : vector<8x128xf32>
    %88 = math.tanh %87 : vector<8x128xf32>
    %89 = arith.mulf %84, %88 : vector<8x128xf32>
    %90 = arith.truncf %89 : vector<8x128xf32> to vector<8x128xbf16>
    %91 = arith.index_cast %c1_i32 : i32 to index
    %c0_39 = arith.constant 0 : index
    %c0_40 = arith.constant 0 : index
    %92 = vector.load %arg13[%91, %c0_39, %c0_40] : memref<8x8x128xbf16, #tpu.memory_space<vmem>>, vector<1x8x128xbf16>
    %93 = vector.shape_cast %92 : vector<1x8x128xbf16> to vector<8x128xbf16>
    %94 = vector.shape_cast %90 : vector<8x128xbf16> to vector<1x8x128xbf16>
    tpu.vector_store %arg13[%91, %c0_39, %c0_40], %94 {strides = array<i32>} : memref<8x8x128xbf16, #tpu.memory_space<vmem>>, vector<1x8x128xbf16>,
    %c2_i32 = arith.constant 2 : i32
    %95 = arith.index_cast %c2_i32 : i32 to index
    %c0_41 = arith.constant 0 : index
    %c0_42 = arith.constant 0 : index
    %96 = vector.load %arg12[%95, %c0_41, %c0_42] : memref<8x8x512xf32, #tpu.memory_space<vmem>>, vector<1x8x512xf32>
    %97 = vector.shape_cast %96 : vector<1x8x512xf32> to vector<8x512xf32>
    %98 = arith.truncf %89 : vector<8x128xf32> to vector<8x128xbf16>
    %cst_43 = arith.constant dense<0.000000e+00> : vector<8x512xf32>
    %99 = tpu.matmul %98, %12, %cst_43 {dimension_numbers = #tpu.dot_dimension_numbers<[1], [0], [0], [1], [0, 0, 1, 1], [], []>} : vector<8x128xbf16>, vector<128x512xbf16>, vector<8x512xf32> -> vector<8x512xf32>
    %100 = arith.addf %97, %99 : vector<8x512xf32>
    %101 = vector.extract_strided_slice %100 {offsets = [0, 0], sizes = [8, 128], strides = [1, 1]} : vector<8x512xf32> to vector<8x128xf32>
    %cst_44 = arith.constant 0.000000e+00 : f32
    %102 = vector.broadcast %cst_44 : f32 to vector<8x128xf32>
    %103 = arith.subf %102, %101 : vector<8x128xf32>
    %104 = math.exp %103 : vector<8x128xf32>
    %cst_45 = arith.constant 1.000000e+00 : f32
    %105 = vector.broadcast %cst_45 : f32 to vector<8x128xf32>
    %106 = arith.addf %105, %104 : vector<8x128xf32>
    %107 = tpu.reciprocal %106 {approx = true} : vector<8x128xf32> -> vector<8x128xf32>
    %108 = vector.extract_strided_slice %100 {offsets = [0, 128], sizes = [8, 128], strides = [1, 1]} : vector<8x512xf32> to vector<8x128xf32>
    %cst_46 = arith.constant 0.000000e+00 : f32
    %109 = vector.broadcast %cst_46 : f32 to vector<8x128xf32>
    %110 = arith.subf %109, %108 : vector<8x128xf32>
    %111 = math.exp %110 : vector<8x128xf32>
    %cst_47 = arith.constant 1.000000e+00 : f32
    %112 = vector.broadcast %cst_47 : f32 to vector<8x128xf32>
    %113 = arith.addf %112, %111 : vector<8x128xf32>
    %114 = tpu.reciprocal %113 {approx = true} : vector<8x128xf32> -> vector<8x128xf32>
    %115 = vector.extract_strided_slice %100 {offsets = [0, 256], sizes = [8, 128], strides = [1, 1]} : vector<8x512xf32> to vector<8x128xf32>
    %116 = math.tanh %115 : vector<8x128xf32>
    %117 = vector.extract_strided_slice %100 {offsets = [0, 384], sizes = [8, 128], strides = [1, 1]} : vector<8x512xf32> to vector<8x128xf32>
    %cst_48 = arith.constant 0.000000e+00 : f32
    %118 = vector.broadcast %cst_48 : f32 to vector<8x128xf32>
    %119 = arith.subf %118, %117 : vector<8x128xf32>
    %120 = math.exp %119 : vector<8x128xf32>
    %cst_49 = arith.constant 1.000000e+00 : f32
    %121 = vector.broadcast %cst_49 : f32 to vector<8x128xf32>
    %122 = arith.addf %121, %120 : vector<8x128xf32>
    %123 = tpu.reciprocal %122 {approx = true} : vector<8x128xf32> -> vector<8x128xf32>
    %124 = arith.mulf %114, %87 : vector<8x128xf32>
    %125 = arith.mulf %107, %116 : vector<8x128xf32>
    %126 = arith.addf %124, %125 : vector<8x128xf32>
    %127 = math.tanh %126 : vector<8x128xf32>
    %128 = arith.mulf %123, %127 : vector<8x128xf32>
    %129 = arith.truncf %128 : vector<8x128xf32> to vector<8x128xbf16>
    %130 = arith.index_cast %c2_i32 : i32 to index
    %c0_50 = arith.constant 0 : index
    %c0_51 = arith.constant 0 : index
    %131 = vector.load %arg13[%130, %c0_50, %c0_51] : memref<8x8x128xbf16, #tpu.memory_space<vmem>>, vector<1x8x128xbf16>
    %132 = vector.shape_cast %131 : vector<1x8x128xbf16> to vector<8x128xbf16>
    %133 = vector.shape_cast %129 : vector<8x128xbf16> to vector<1x8x128xbf16>
    tpu.vector_store %arg13[%130, %c0_50, %c0_51], %133 {strides = array<i32>} : memref<8x8x128xbf16, #tpu.memory_space<vmem>>, vector<1x8x128xbf16>,
    %c3_i32 = arith.constant 3 : i32
    %134 = arith.index_cast %c3_i32 : i32 to index
    %c0_52 = arith.constant 0 : index
    %c0_53 = arith.constant 0 : index
    %135 = vector.load %arg12[%134, %c0_52, %c0_53] : memref<8x8x512xf32, #tpu.memory_space<vmem>>, vector<1x8x512xf32>
    %136 = vector.shape_cast %135 : vector<1x8x512xf32> to vector<8x512xf32>
    %137 = arith.truncf %128 : vector<8x128xf32> to vector<8x128xbf16>
    %cst_54 = arith.constant dense<0.000000e+00> : vector<8x512xf32>
    %138 = tpu.matmul %137, %12, %cst_54 {dimension_numbers = #tpu.dot_dimension_numbers<[1], [0], [0], [1], [0, 0, 1, 1], [], []>} : vector<8x128xbf16>, vector<128x512xbf16>, vector<8x512xf32> -> vector<8x512xf32>
    %139 = arith.addf %136, %138 : vector<8x512xf32>
    %140 = vector.extract_strided_slice %139 {offsets = [0, 0], sizes = [8, 128], strides = [1, 1]} : vector<8x512xf32> to vector<8x128xf32>
    %cst_55 = arith.constant 0.000000e+00 : f32
    %141 = vector.broadcast %cst_55 : f32 to vector<8x128xf32>
    %142 = arith.subf %141, %140 : vector<8x128xf32>
    %143 = math.exp %142 : vector<8x128xf32>
    %cst_56 = arith.constant 1.000000e+00 : f32
    %144 = vector.broadcast %cst_56 : f32 to vector<8x128xf32>
    %145 = arith.addf %144, %143 : vector<8x128xf32>
    %146 = tpu.reciprocal %145 {approx = true} : vector<8x128xf32> -> vector<8x128xf32>
    %147 = vector.extract_strided_slice %139 {offsets = [0, 128], sizes = [8, 128], strides = [1, 1]} : vector<8x512xf32> to vector<8x128xf32>
    %cst_57 = arith.constant 0.000000e+00 : f32
    %148 = vector.broadcast %cst_57 : f32 to vector<8x128xf32>
    %149 = arith.subf %148, %147 : vector<8x128xf32>
    %150 = math.exp %149 : vector<8x128xf32>
    %cst_58 = arith.constant 1.000000e+00 : f32
    %151 = vector.broadcast %cst_58 : f32 to vector<8x128xf32>
    %152 = arith.addf %151, %150 : vector<8x128xf32>
    %153 = tpu.reciprocal %152 {approx = true} : vector<8x128xf32> -> vector<8x128xf32>
    %154 = vector.extract_strided_slice %139 {offsets = [0, 256], sizes = [8, 128], strides = [1, 1]} : vector<8x512xf32> to vector<8x128xf32>
    %155 = math.tanh %154 : vector<8x128xf32>
    %156 = vector.extract_strided_slice %139 {offsets = [0, 384], sizes = [8, 128], strides = [1, 1]} : vector<8x512xf32> to vector<8x128xf32>
    %cst_59 = arith.constant 0.000000e+00 : f32
    %157 = vector.broadcast %cst_59 : f32 to vector<8x128xf32>
    %158 = arith.subf %157, %156 : vector<8x128xf32>
    %159 = math.exp %158 : vector<8x128xf32>
    %cst_60 = arith.constant 1.000000e+00 : f32
    %160 = vector.broadcast %cst_60 : f32 to vector<8x128xf32>
    %161 = arith.addf %160, %159 : vector<8x128xf32>
    %162 = tpu.reciprocal %161 {approx = true} : vector<8x128xf32> -> vector<8x128xf32>
    %163 = arith.mulf %153, %126 : vector<8x128xf32>
    %164 = arith.mulf %146, %155 : vector<8x128xf32>
    %165 = arith.addf %163, %164 : vector<8x128xf32>
    %166 = math.tanh %165 : vector<8x128xf32>
    %167 = arith.mulf %162, %166 : vector<8x128xf32>
    %168 = arith.truncf %167 : vector<8x128xf32> to vector<8x128xbf16>
    %169 = arith.index_cast %c3_i32 : i32 to index
    %c0_61 = arith.constant 0 : index
    %c0_62 = arith.constant 0 : index
    %170 = vector.load %arg13[%169, %c0_61, %c0_62] : memref<8x8x128xbf16, #tpu.memory_space<vmem>>, vector<1x8x128xbf16>
    %171 = vector.shape_cast %170 : vector<1x8x128xbf16> to vector<8x128xbf16>
    %172 = vector.shape_cast %168 : vector<8x128xbf16> to vector<1x8x128xbf16>
    tpu.vector_store %arg13[%169, %c0_61, %c0_62], %172 {strides = array<i32>} : memref<8x8x128xbf16, #tpu.memory_space<vmem>>, vector<1x8x128xbf16>,
    %c4_i32 = arith.constant 4 : i32
    %173 = arith.index_cast %c4_i32 : i32 to index
    %c0_63 = arith.constant 0 : index
    %c0_64 = arith.constant 0 : index
    %174 = vector.load %arg12[%173, %c0_63, %c0_64] : memref<8x8x512xf32, #tpu.memory_space<vmem>>, vector<1x8x512xf32>
    %175 = vector.shape_cast %174 : vector<1x8x512xf32> to vector<8x512xf32>
    %176 = arith.truncf %167 : vector<8x128xf32> to vector<8x128xbf16>
    %cst_65 = arith.constant dense<0.000000e+00> : vector<8x512xf32>
    %177 = tpu.matmul %176, %12, %cst_65 {dimension_numbers = #tpu.dot_dimension_numbers<[1], [0], [0], [1], [0, 0, 1, 1], [], []>} : vector<8x128xbf16>, vector<128x512xbf16>, vector<8x512xf32> -> vector<8x512xf32>
    %178 = arith.addf %175, %177 : vector<8x512xf32>
    %179 = vector.extract_strided_slice %178 {offsets = [0, 0], sizes = [8, 128], strides = [1, 1]} : vector<8x512xf32> to vector<8x128xf32>
    %cst_66 = arith.constant 0.000000e+00 : f32
    %180 = vector.broadcast %cst_66 : f32 to vector<8x128xf32>
    %181 = arith.subf %180, %179 : vector<8x128xf32>
    %182 = math.exp %181 : vector<8x128xf32>
    %cst_67 = arith.constant 1.000000e+00 : f32
    %183 = vector.broadcast %cst_67 : f32 to vector<8x128xf32>
    %184 = arith.addf %183, %182 : vector<8x128xf32>
    %185 = tpu.reciprocal %184 {approx = true} : vector<8x128xf32> -> vector<8x128xf32>
    %186 = vector.extract_strided_slice %178 {offsets = [0, 128], sizes = [8, 128], strides = [1, 1]} : vector<8x512xf32> to vector<8x128xf32>
    %cst_68 = arith.constant 0.000000e+00 : f32
    %187 = vector.broadcast %cst_68 : f32 to vector<8x128xf32>
    %188 = arith.subf %187, %186 : vector<8x128xf32>
    %189 = math.exp %188 : vector<8x128xf32>
    %cst_69 = arith.constant 1.000000e+00 : f32
    %190 = vector.broadcast %cst_69 : f32 to vector<8x128xf32>
    %191 = arith.addf %190, %189 : vector<8x128xf32>
    %192 = tpu.reciprocal %191 {approx = true} : vector<8x128xf32> -> vector<8x128xf32>
    %193 = vector.extract_strided_slice %178 {offsets = [0, 256], sizes = [8, 128], strides = [1, 1]} : vector<8x512xf32> to vector<8x128xf32>
    %194 = math.tanh %193 : vector<8x128xf32>
    %195 = vector.extract_strided_slice %178 {offsets = [0, 384], sizes = [8, 128], strides = [1, 1]} : vector<8x512xf32> to vector<8x128xf32>
    %cst_70 = arith.constant 0.000000e+00 : f32
    %196 = vector.broadcast %cst_70 : f32 to vector<8x128xf32>
    %197 = arith.subf %196, %195 : vector<8x128xf32>
    %198 = math.exp %197 : vector<8x128xf32>
    %cst_71 = arith.constant 1.000000e+00 : f32
    %199 = vector.broadcast %cst_71 : f32 to vector<8x128xf32>
    %200 = arith.addf %199, %198 : vector<8x128xf32>
    %201 = tpu.reciprocal %200 {approx = true} : vector<8x128xf32> -> vector<8x128xf32>
    %202 = arith.mulf %192, %165 : vector<8x128xf32>
    %203 = arith.mulf %185, %194 : vector<8x128xf32>
    %204 = arith.addf %202, %203 : vector<8x128xf32>
    %205 = math.tanh %204 : vector<8x128xf32>
    %206 = arith.mulf %201, %205 : vector<8x128xf32>
    %207 = arith.truncf %206 : vector<8x128xf32> to vector<8x128xbf16>
    %208 = arith.index_cast %c4_i32 : i32 to index
    %c0_72 = arith.constant 0 : index
    %c0_73 = arith.constant 0 : index
    %209 = vector.load %arg13[%208, %c0_72, %c0_73] : memref<8x8x128xbf16, #tpu.memory_space<vmem>>, vector<1x8x128xbf16>
    %210 = vector.shape_cast %209 : vector<1x8x128xbf16> to vector<8x128xbf16>
    %211 = vector.shape_cast %207 : vector<8x128xbf16> to vector<1x8x128xbf16>
    tpu.vector_store %arg13[%208, %c0_72, %c0_73], %211 {strides = array<i32>} : memref<8x8x128xbf16, #tpu.memory_space<vmem>>, vector<1x8x128xbf16>,
    %c5_i32 = arith.constant 5 : i32
    %212 = arith.index_cast %c5_i32 : i32 to index
    %c0_74 = arith.constant 0 : index
    %c0_75 = arith.constant 0 : index
    %213 = vector.load %arg12[%212, %c0_74, %c0_75] : memref<8x8x512xf32, #tpu.memory_space<vmem>>, vector<1x8x512xf32>
    %214 = vector.shape_cast %213 : vector<1x8x512xf32> to vector<8x512xf32>
    %215 = arith.truncf %206 : vector<8x128xf32> to vector<8x128xbf16>
    %cst_76 = arith.constant dense<0.000000e+00> : vector<8x512xf32>
    %216 = tpu.matmul %215, %12, %cst_76 {dimension_numbers = #tpu.dot_dimension_numbers<[1], [0], [0], [1], [0, 0, 1, 1], [], []>} : vector<8x128xbf16>, vector<128x512xbf16>, vector<8x512xf32> -> vector<8x512xf32>
    %217 = arith.addf %214, %216 : vector<8x512xf32>
    %218 = vector.extract_strided_slice %217 {offsets = [0, 0], sizes = [8, 128], strides = [1, 1]} : vector<8x512xf32> to vector<8x128xf32>
    %cst_77 = arith.constant 0.000000e+00 : f32
    %219 = vector.broadcast %cst_77 : f32 to vector<8x128xf32>
    %220 = arith.subf %219, %218 : vector<8x128xf32>
    %221 = math.exp %220 : vector<8x128xf32>
    %cst_78 = arith.constant 1.000000e+00 : f32
    %222 = vector.broadcast %cst_78 : f32 to vector<8x128xf32>
    %223 = arith.addf %222, %221 : vector<8x128xf32>
    %224 = tpu.reciprocal %223 {approx = true} : vector<8x128xf32> -> vector<8x128xf32>
    %225 = vector.extract_strided_slice %217 {offsets = [0, 128], sizes = [8, 128], strides = [1, 1]} : vector<8x512xf32> to vector<8x128xf32>
    %cst_79 = arith.constant 0.000000e+00 : f32
    %226 = vector.broadcast %cst_79 : f32 to vector<8x128xf32>
    %227 = arith.subf %226, %225 : vector<8x128xf32>
    %228 = math.exp %227 : vector<8x128xf32>
    %cst_80 = arith.constant 1.000000e+00 : f32
    %229 = vector.broadcast %cst_80 : f32 to vector<8x128xf32>
    %230 = arith.addf %229, %228 : vector<8x128xf32>
    %231 = tpu.reciprocal %230 {approx = true} : vector<8x128xf32> -> vector<8x128xf32>
    %232 = vector.extract_strided_slice %217 {offsets = [0, 256], sizes = [8, 128], strides = [1, 1]} : vector<8x512xf32> to vector<8x128xf32>
    %233 = math.tanh %232 : vector<8x128xf32>
    %234 = vector.extract_strided_slice %217 {offsets = [0, 384], sizes = [8, 128], strides = [1, 1]} : vector<8x512xf32> to vector<8x128xf32>
    %cst_81 = arith.constant 0.000000e+00 : f32
    %235 = vector.broadcast %cst_81 : f32 to vector<8x128xf32>
    %236 = arith.subf %235, %234 : vector<8x128xf32>
    %237 = math.exp %236 : vector<8x128xf32>
    %cst_82 = arith.constant 1.000000e+00 : f32
    %238 = vector.broadcast %cst_82 : f32 to vector<8x128xf32>
    %239 = arith.addf %238, %237 : vector<8x128xf32>
    %240 = tpu.reciprocal %239 {approx = true} : vector<8x128xf32> -> vector<8x128xf32>
    %241 = arith.mulf %231, %204 : vector<8x128xf32>
    %242 = arith.mulf %224, %233 : vector<8x128xf32>
    %243 = arith.addf %241, %242 : vector<8x128xf32>
    %244 = math.tanh %243 : vector<8x128xf32>
    %245 = arith.mulf %240, %244 : vector<8x128xf32>
    %246 = arith.truncf %245 : vector<8x128xf32> to vector<8x128xbf16>
    %247 = arith.index_cast %c5_i32 : i32 to index
    %c0_83 = arith.constant 0 : index
    %c0_84 = arith.constant 0 : index
    %248 = vector.load %arg13[%247, %c0_83, %c0_84] : memref<8x8x128xbf16, #tpu.memory_space<vmem>>, vector<1x8x128xbf16>
    %249 = vector.shape_cast %248 : vector<1x8x128xbf16> to vector<8x128xbf16>
    %250 = vector.shape_cast %246 : vector<8x128xbf16> to vector<1x8x128xbf16>
    tpu.vector_store %arg13[%247, %c0_83, %c0_84], %250 {strides = array<i32>} : memref<8x8x128xbf16, #tpu.memory_space<vmem>>, vector<1x8x128xbf16>,
    %c6_i32 = arith.constant 6 : i32
    %251 = arith.index_cast %c6_i32 : i32 to index
    %c0_85 = arith.constant 0 : index
    %c0_86 = arith.constant 0 : index
    %252 = vector.load %arg12[%251, %c0_85, %c0_86] : memref<8x8x512xf32, #tpu.memory_space<vmem>>, vector<1x8x512xf32>
    %253 = vector.shape_cast %252 : vector<1x8x512xf32> to vector<8x512xf32>
    %254 = arith.truncf %245 : vector<8x128xf32> to vector<8x128xbf16>
    %cst_87 = arith.constant dense<0.000000e+00> : vector<8x512xf32>
    %255 = tpu.matmul %254, %12, %cst_87 {dimension_numbers = #tpu.dot_dimension_numbers<[1], [0], [0], [1], [0, 0, 1, 1], [], []>} : vector<8x128xbf16>, vector<128x512xbf16>, vector<8x512xf32> -> vector<8x512xf32>
    %256 = arith.addf %253, %255 : vector<8x512xf32>
    %257 = vector.extract_strided_slice %256 {offsets = [0, 0], sizes = [8, 128], strides = [1, 1]} : vector<8x512xf32> to vector<8x128xf32>
    %cst_88 = arith.constant 0.000000e+00 : f32
    %258 = vector.broadcast %cst_88 : f32 to vector<8x128xf32>
    %259 = arith.subf %258, %257 : vector<8x128xf32>
    %260 = math.exp %259 : vector<8x128xf32>
    %cst_89 = arith.constant 1.000000e+00 : f32
    %261 = vector.broadcast %cst_89 : f32 to vector<8x128xf32>
    %262 = arith.addf %261, %260 : vector<8x128xf32>
    %263 = tpu.reciprocal %262 {approx = true} : vector<8x128xf32> -> vector<8x128xf32>
    %264 = vector.extract_strided_slice %256 {offsets = [0, 128], sizes = [8, 128], strides = [1, 1]} : vector<8x512xf32> to vector<8x128xf32>
    %cst_90 = arith.constant 0.000000e+00 : f32
    %265 = vector.broadcast %cst_90 : f32 to vector<8x128xf32>
    %266 = arith.subf %265, %264 : vector<8x128xf32>
    %267 = math.exp %266 : vector<8x128xf32>
    %cst_91 = arith.constant 1.000000e+00 : f32
    %268 = vector.broadcast %cst_91 : f32 to vector<8x128xf32>
    %269 = arith.addf %268, %267 : vector<8x128xf32>
    %270 = tpu.reciprocal %269 {approx = true} : vector<8x128xf32> -> vector<8x128xf32>
    %271 = vector.extract_strided_slice %256 {offsets = [0, 256], sizes = [8, 128], strides = [1, 1]} : vector<8x512xf32> to vector<8x128xf32>
    %272 = math.tanh %271 : vector<8x128xf32>
    %273 = vector.extract_strided_slice %256 {offsets = [0, 384], sizes = [8, 128], strides = [1, 1]} : vector<8x512xf32> to vector<8x128xf32>
    %cst_92 = arith.constant 0.000000e+00 : f32
    %274 = vector.broadcast %cst_92 : f32 to vector<8x128xf32>
    %275 = arith.subf %274, %273 : vector<8x128xf32>
    %276 = math.exp %275 : vector<8x128xf32>
    %cst_93 = arith.constant 1.000000e+00 : f32
    %277 = vector.broadcast %cst_93 : f32 to vector<8x128xf32>
    %278 = arith.addf %277, %276 : vector<8x128xf32>
    %279 = tpu.reciprocal %278 {approx = true} : vector<8x128xf32> -> vector<8x128xf32>
    %280 = arith.mulf %270, %243 : vector<8x128xf32>
    %281 = arith.mulf %263, %272 : vector<8x128xf32>
    %282 = arith.addf %280, %281 : vector<8x128xf32>
    %283 = math.tanh %282 : vector<8x128xf32>
    %284 = arith.mulf %279, %283 : vector<8x128xf32>
    %285 = arith.truncf %284 : vector<8x128xf32> to vector<8x128xbf16>
    %286 = arith.index_cast %c6_i32 : i32 to index
    %c0_94 = arith.constant 0 : index
    %c0_95 = arith.constant 0 : index
    %287 = vector.load %arg13[%286, %c0_94, %c0_95] : memref<8x8x128xbf16, #tpu.memory_space<vmem>>, vector<1x8x128xbf16>
    %288 = vector.shape_cast %287 : vector<1x8x128xbf16> to vector<8x128xbf16>
    %289 = vector.shape_cast %285 : vector<8x128xbf16> to vector<1x8x128xbf16>
    tpu.vector_store %arg13[%286, %c0_94, %c0_95], %289 {strides = array<i32>} : memref<8x8x128xbf16, #tpu.memory_space<vmem>>, vector<1x8x128xbf16>,
    %c7_i32 = arith.constant 7 : i32
    %290 = arith.index_cast %c7_i32 : i32 to index
    %c0_96 = arith.constant 0 : index
    %c0_97 = arith.constant 0 : index
    %291 = vector.load %arg12[%290, %c0_96, %c0_97] : memref<8x8x512xf32, #tpu.memory_space<vmem>>, vector<1x8x512xf32>
    %292 = vector.shape_cast %291 : vector<1x8x512xf32> to vector<8x512xf32>
    %293 = arith.truncf %284 : vector<8x128xf32> to vector<8x128xbf16>
    %cst_98 = arith.constant dense<0.000000e+00> : vector<8x512xf32>
    %294 = tpu.matmul %293, %12, %cst_98 {dimension_numbers = #tpu.dot_dimension_numbers<[1], [0], [0], [1], [0, 0, 1, 1], [], []>} : vector<8x128xbf16>, vector<128x512xbf16>, vector<8x512xf32> -> vector<8x512xf32>
    %295 = arith.addf %292, %294 : vector<8x512xf32>
    %296 = vector.extract_strided_slice %295 {offsets = [0, 0], sizes = [8, 128], strides = [1, 1]} : vector<8x512xf32> to vector<8x128xf32>
    %cst_99 = arith.constant 0.000000e+00 : f32
    %297 = vector.broadcast %cst_99 : f32 to vector<8x128xf32>
    %298 = arith.subf %297, %296 : vector<8x128xf32>
    %299 = math.exp %298 : vector<8x128xf32>
    %cst_100 = arith.constant 1.000000e+00 : f32
    %300 = vector.broadcast %cst_100 : f32 to vector<8x128xf32>
    %301 = arith.addf %300, %299 : vector<8x128xf32>
    %302 = tpu.reciprocal %301 {approx = true} : vector<8x128xf32> -> vector<8x128xf32>
    %303 = vector.extract_strided_slice %295 {offsets = [0, 128], sizes = [8, 128], strides = [1, 1]} : vector<8x512xf32> to vector<8x128xf32>
    %cst_101 = arith.constant 0.000000e+00 : f32
    %304 = vector.broadcast %cst_101 : f32 to vector<8x128xf32>
    %305 = arith.subf %304, %303 : vector<8x128xf32>
    %306 = math.exp %305 : vector<8x128xf32>
    %cst_102 = arith.constant 1.000000e+00 : f32
    %307 = vector.broadcast %cst_102 : f32 to vector<8x128xf32>
    %308 = arith.addf %307, %306 : vector<8x128xf32>
    %309 = tpu.reciprocal %308 {approx = true} : vector<8x128xf32> -> vector<8x128xf32>
    %310 = vector.extract_strided_slice %295 {offsets = [0, 256], sizes = [8, 128], strides = [1, 1]} : vector<8x512xf32> to vector<8x128xf32>
    %311 = math.tanh %310 : vector<8x128xf32>
    %312 = vector.extract_strided_slice %295 {offsets = [0, 384], sizes = [8, 128], strides = [1, 1]} : vector<8x512xf32> to vector<8x128xf32>
    %cst_103 = arith.constant 0.000000e+00 : f32
    %313 = vector.broadcast %cst_103 : f32 to vector<8x128xf32>
    %314 = arith.subf %313, %312 : vector<8x128xf32>
    %315 = math.exp %314 : vector<8x128xf32>
    %cst_104 = arith.constant 1.000000e+00 : f32
    %316 = vector.broadcast %cst_104 : f32 to vector<8x128xf32>
    %317 = arith.addf %316, %315 : vector<8x128xf32>
    %318 = tpu.reciprocal %317 {approx = true} : vector<8x128xf32> -> vector<8x128xf32>
    %319 = arith.mulf %309, %282 : vector<8x128xf32>
    %320 = arith.mulf %302, %311 : vector<8x128xf32>
    %321 = arith.addf %319, %320 : vector<8x128xf32>
    %322 = math.tanh %321 : vector<8x128xf32>
    %323 = arith.mulf %318, %322 : vector<8x128xf32>
    %324 = arith.truncf %323 : vector<8x128xf32> to vector<8x128xbf16>
    %325 = arith.index_cast %c7_i32 : i32 to index
    %c0_105 = arith.constant 0 : index
    %c0_106 = arith.constant 0 : index
    %326 = vector.load %arg13[%325, %c0_105, %c0_106] : memref<8x8x128xbf16, #tpu.memory_space<vmem>>, vector<1x8x128xbf16>
    %327 = vector.shape_cast %326 : vector<1x8x128xbf16> to vector<8x128xbf16>
    %328 = vector.shape_cast %324 : vector<8x128xbf16> to vector<1x8x128xbf16>
    tpu.vector_store %arg13[%325, %c0_105, %c0_106], %328 {strides = array<i32>} : memref<8x8x128xbf16, #tpu.memory_space<vmem>>, vector<1x8x128xbf16>,
    %c8_i32 = arith.constant 8 : i32
    %c0_107 = arith.constant 0 : index
    %c0_108 = arith.constant 0 : index
    %c0_109 = arith.constant 0 : index
    %329 = vector.load %arg10[%c0_107, %c0_108, %c0_109] : memref<2x8x128xf32, #tpu.memory_space<vmem>>, vector<1x8x128xf32>
    %330 = vector.shape_cast %329 : vector<1x8x128xf32> to vector<8x128xf32>
    %331 = vector.shape_cast %323 : vector<8x128xf32> to vector<1x8x128xf32>
    tpu.vector_store %arg10[%c0_107, %c0_108, %c0_109], %331 {strides = array<i32>} : memref<2x8x128xf32, #tpu.memory_space<vmem>>, vector<1x8x128xf32>,
    %c0_110 = arith.constant 0 : index
    %c0_111 = arith.constant 0 : index
    %c0_112 = arith.constant 0 : index
    %332 = vector.load %arg11[%c0_110, %c0_111, %c0_112] : memref<2x8x128xf32, #tpu.memory_space<vmem>>, vector<1x8x128xf32>
    %333 = vector.shape_cast %332 : vector<1x8x128xf32> to vector<8x128xf32>
    %334 = vector.shape_cast %321 : vector<8x128xf32> to vector<1x8x128xf32>
    tpu.vector_store %arg11[%c0_110, %c0_111, %c0_112], %334 {strides = array<i32>} : memref<2x8x128xf32, #tpu.memory_space<vmem>>, vector<1x8x128xf32>,
    %c0_113 = arith.constant 0 : index
    %c0_114 = arith.constant 0 : index
    %c0_115 = arith.constant 0 : index
    %335 = vector.load %arg13[%c0_113, %c0_114, %c0_115] : memref<8x8x128xbf16, #tpu.memory_space<vmem>>, vector<8x8x128xbf16>
    %336 = vector.shape_cast %335 : vector<8x8x128xbf16> to vector<64x128xbf16>
    %c0_116 = arith.constant 0 : index
    %c0_117 = arith.constant 0 : index
    %337 = vector.load %arg6[%c0_116, %c0_117] : memref<128x512xbf16, #tpu.memory_space<vmem>>, vector<128x512xbf16>
    %cst_118 = arith.constant dense<0.000000e+00> : vector<64x512xf32>
    %338 = tpu.matmul %336, %337, %cst_118 {dimension_numbers = #tpu.dot_dimension_numbers<[1], [0], [0], [1], [0, 0, 1, 1], [], []>} : vector<64x128xbf16>, vector<128x512xbf16>, vector<64x512xf32> -> vector<64x512xf32>
    %c0_119 = arith.constant 0 : index
    %c0_120 = arith.constant 0 : index
    %339 = vector.load %arg8[%c0_119, %c0_120] : memref<1x512xf32, #tpu.memory_space<vmem>>, vector<1x512xf32>
    %340 = vector.broadcast %339 : vector<1x512xf32> to vector<64x512xf32>
    %341 = arith.addf %338, %340 : vector<64x512xf32>
    %342 = vector.shape_cast %341 : vector<64x512xf32> to vector<8x8x512xf32>
    %c0_121 = arith.constant 0 : index
    %c0_122 = arith.constant 0 : index
    %c0_123 = arith.constant 0 : index
    %343 = vector.load %arg12[%c0_121, %c0_122, %c0_123] : memref<8x8x512xf32, #tpu.memory_space<vmem>>, vector<8x8x512xf32>
    tpu.vector_store %arg12[%c0_121, %c0_122, %c0_123], %342 {strides = array<i32>} : memref<8x8x512xf32, #tpu.memory_space<vmem>>, vector<8x8x512xf32>,
    %c0_124 = arith.constant 0 : index
    %c0_125 = arith.constant 0 : index
    %344 = vector.load %arg7[%c0_124, %c0_125] : memref<128x512xbf16, #tpu.memory_space<vmem>>, vector<128x512xbf16>
    %c1 = arith.constant 1 : index
    %c0_126 = arith.constant 0 : index
    %c0_127 = arith.constant 0 : index
    %345 = vector.load %arg10[%c1, %c0_126, %c0_127] : memref<2x8x128xf32, #tpu.memory_space<vmem>>, vector<1x8x128xf32>
    %346 = vector.shape_cast %345 : vector<1x8x128xf32> to vector<8x128xf32>
    %c1_128 = arith.constant 1 : index
    %c0_129 = arith.constant 0 : index
    %c0_130 = arith.constant 0 : index
    %347 = vector.load %arg11[%c1_128, %c0_129, %c0_130] : memref<2x8x128xf32, #tpu.memory_space<vmem>>, vector<1x8x128xf32>
    %348 = vector.shape_cast %347 : vector<1x8x128xf32> to vector<8x128xf32>
    %c0_i32_131 = arith.constant 0 : i32
    %349 = arith.index_cast %c0_i32_131 : i32 to index
    %c0_132 = arith.constant 0 : index
    %c0_133 = arith.constant 0 : index
    %350 = vector.load %arg12[%349, %c0_132, %c0_133] : memref<8x8x512xf32, #tpu.memory_space<vmem>>, vector<1x8x512xf32>
    %351 = vector.shape_cast %350 : vector<1x8x512xf32> to vector<8x512xf32>
    %352 = arith.truncf %346 : vector<8x128xf32> to vector<8x128xbf16>
    %cst_134 = arith.constant dense<0.000000e+00> : vector<8x512xf32>
    %353 = tpu.matmul %352, %344, %cst_134 {dimension_numbers = #tpu.dot_dimension_numbers<[1], [0], [0], [1], [0, 0, 1, 1], [], []>} : vector<8x128xbf16>, vector<128x512xbf16>, vector<8x512xf32> -> vector<8x512xf32>
    %354 = arith.addf %351, %353 : vector<8x512xf32>
    %355 = vector.extract_strided_slice %354 {offsets = [0, 0], sizes = [8, 128], strides = [1, 1]} : vector<8x512xf32> to vector<8x128xf32>
    %cst_135 = arith.constant 0.000000e+00 : f32
    %356 = vector.broadcast %cst_135 : f32 to vector<8x128xf32>
    %357 = arith.subf %356, %355 : vector<8x128xf32>
    %358 = math.exp %357 : vector<8x128xf32>
    %cst_136 = arith.constant 1.000000e+00 : f32
    %359 = vector.broadcast %cst_136 : f32 to vector<8x128xf32>
    %360 = arith.addf %359, %358 : vector<8x128xf32>
    %361 = tpu.reciprocal %360 {approx = true} : vector<8x128xf32> -> vector<8x128xf32>
    %362 = vector.extract_strided_slice %354 {offsets = [0, 128], sizes = [8, 128], strides = [1, 1]} : vector<8x512xf32> to vector<8x128xf32>
    %cst_137 = arith.constant 0.000000e+00 : f32
    %363 = vector.broadcast %cst_137 : f32 to vector<8x128xf32>
    %364 = arith.subf %363, %362 : vector<8x128xf32>
    %365 = math.exp %364 : vector<8x128xf32>
    %cst_138 = arith.constant 1.000000e+00 : f32
    %366 = vector.broadcast %cst_138 : f32 to vector<8x128xf32>
    %367 = arith.addf %366, %365 : vector<8x128xf32>
    %368 = tpu.reciprocal %367 {approx = true} : vector<8x128xf32> -> vector<8x128xf32>
    %369 = vector.extract_strided_slice %354 {offsets = [0, 256], sizes = [8, 128], strides = [1, 1]} : vector<8x512xf32> to vector<8x128xf32>
    %370 = math.tanh %369 : vector<8x128xf32>
    %371 = vector.extract_strided_slice %354 {offsets = [0, 384], sizes = [8, 128], strides = [1, 1]} : vector<8x512xf32> to vector<8x128xf32>
    %cst_139 = arith.constant 0.000000e+00 : f32
    %372 = vector.broadcast %cst_139 : f32 to vector<8x128xf32>
    %373 = arith.subf %372, %371 : vector<8x128xf32>
    %374 = math.exp %373 : vector<8x128xf32>
    %cst_140 = arith.constant 1.000000e+00 : f32
    %375 = vector.broadcast %cst_140 : f32 to vector<8x128xf32>
    %376 = arith.addf %375, %374 : vector<8x128xf32>
    %377 = tpu.reciprocal %376 {approx = true} : vector<8x128xf32> -> vector<8x128xf32>
    %378 = arith.mulf %368, %348 : vector<8x128xf32>
    %379 = arith.mulf %361, %370 : vector<8x128xf32>
    %380 = arith.addf %378, %379 : vector<8x128xf32>
    %381 = math.tanh %380 : vector<8x128xf32>
    %382 = arith.mulf %377, %381 : vector<8x128xf32>
    %383 = arith.truncf %382 : vector<8x128xf32> to vector<8x128xbf16>
    %384 = arith.index_cast %c0_i32_131 : i32 to index
    %c0_141 = arith.constant 0 : index
    %c0_142 = arith.constant 0 : index
    %385 = vector.load %arg13[%384, %c0_141, %c0_142] : memref<8x8x128xbf16, #tpu.memory_space<vmem>>, vector<1x8x128xbf16>
    %386 = vector.shape_cast %385 : vector<1x8x128xbf16> to vector<8x128xbf16>
    %387 = vector.shape_cast %383 : vector<8x128xbf16> to vector<1x8x128xbf16>
    tpu.vector_store %arg13[%384, %c0_141, %c0_142], %387 {strides = array<i32>} : memref<8x8x128xbf16, #tpu.memory_space<vmem>>, vector<1x8x128xbf16>,
    %c1_i32_143 = arith.constant 1 : i32
    %388 = arith.index_cast %c1_i32_143 : i32 to index
    %c0_144 = arith.constant 0 : index
    %c0_145 = arith.constant 0 : index
    %389 = vector.load %arg12[%388, %c0_144, %c0_145] : memref<8x8x512xf32, #tpu.memory_space<vmem>>, vector<1x8x512xf32>
    %390 = vector.shape_cast %389 : vector<1x8x512xf32> to vector<8x512xf32>
    %391 = arith.truncf %382 : vector<8x128xf32> to vector<8x128xbf16>
    %cst_146 = arith.constant dense<0.000000e+00> : vector<8x512xf32>
    %392 = tpu.matmul %391, %344, %cst_146 {dimension_numbers = #tpu.dot_dimension_numbers<[1], [0], [0], [1], [0, 0, 1, 1], [], []>} : vector<8x128xbf16>, vector<128x512xbf16>, vector<8x512xf32> -> vector<8x512xf32>
    %393 = arith.addf %390, %392 : vector<8x512xf32>
    %394 = vector.extract_strided_slice %393 {offsets = [0, 0], sizes = [8, 128], strides = [1, 1]} : vector<8x512xf32> to vector<8x128xf32>
    %cst_147 = arith.constant 0.000000e+00 : f32
    %395 = vector.broadcast %cst_147 : f32 to vector<8x128xf32>
    %396 = arith.subf %395, %394 : vector<8x128xf32>
    %397 = math.exp %396 : vector<8x128xf32>
    %cst_148 = arith.constant 1.000000e+00 : f32
    %398 = vector.broadcast %cst_148 : f32 to vector<8x128xf32>
    %399 = arith.addf %398, %397 : vector<8x128xf32>
    %400 = tpu.reciprocal %399 {approx = true} : vector<8x128xf32> -> vector<8x128xf32>
    %401 = vector.extract_strided_slice %393 {offsets = [0, 128], sizes = [8, 128], strides = [1, 1]} : vector<8x512xf32> to vector<8x128xf32>
    %cst_149 = arith.constant 0.000000e+00 : f32
    %402 = vector.broadcast %cst_149 : f32 to vector<8x128xf32>
    %403 = arith.subf %402, %401 : vector<8x128xf32>
    %404 = math.exp %403 : vector<8x128xf32>
    %cst_150 = arith.constant 1.000000e+00 : f32
    %405 = vector.broadcast %cst_150 : f32 to vector<8x128xf32>
    %406 = arith.addf %405, %404 : vector<8x128xf32>
    %407 = tpu.reciprocal %406 {approx = true} : vector<8x128xf32> -> vector<8x128xf32>
    %408 = vector.extract_strided_slice %393 {offsets = [0, 256], sizes = [8, 128], strides = [1, 1]} : vector<8x512xf32> to vector<8x128xf32>
    %409 = math.tanh %408 : vector<8x128xf32>
    %410 = vector.extract_strided_slice %393 {offsets = [0, 384], sizes = [8, 128], strides = [1, 1]} : vector<8x512xf32> to vector<8x128xf32>
    %cst_151 = arith.constant 0.000000e+00 : f32
    %411 = vector.broadcast %cst_151 : f32 to vector<8x128xf32>
    %412 = arith.subf %411, %410 : vector<8x128xf32>
    %413 = math.exp %412 : vector<8x128xf32>
    %cst_152 = arith.constant 1.000000e+00 : f32
    %414 = vector.broadcast %cst_152 : f32 to vector<8x128xf32>
    %415 = arith.addf %414, %413 : vector<8x128xf32>
    %416 = tpu.reciprocal %415 {approx = true} : vector<8x128xf32> -> vector<8x128xf32>
    %417 = arith.mulf %407, %380 : vector<8x128xf32>
    %418 = arith.mulf %400, %409 : vector<8x128xf32>
    %419 = arith.addf %417, %418 : vector<8x128xf32>
    %420 = math.tanh %419 : vector<8x128xf32>
    %421 = arith.mulf %416, %420 : vector<8x128xf32>
    %422 = arith.truncf %421 : vector<8x128xf32> to vector<8x128xbf16>
    %423 = arith.index_cast %c1_i32_143 : i32 to index
    %c0_153 = arith.constant 0 : index
    %c0_154 = arith.constant 0 : index
    %424 = vector.load %arg13[%423, %c0_153, %c0_154] : memref<8x8x128xbf16, #tpu.memory_space<vmem>>, vector<1x8x128xbf16>
    %425 = vector.shape_cast %424 : vector<1x8x128xbf16> to vector<8x128xbf16>
    %426 = vector.shape_cast %422 : vector<8x128xbf16> to vector<1x8x128xbf16>
    tpu.vector_store %arg13[%423, %c0_153, %c0_154], %426 {strides = array<i32>} : memref<8x8x128xbf16, #tpu.memory_space<vmem>>, vector<1x8x128xbf16>,
    %c2_i32_155 = arith.constant 2 : i32
    %427 = arith.index_cast %c2_i32_155 : i32 to index
    %c0_156 = arith.constant 0 : index
    %c0_157 = arith.constant 0 : index
    %428 = vector.load %arg12[%427, %c0_156, %c0_157] : memref<8x8x512xf32, #tpu.memory_space<vmem>>, vector<1x8x512xf32>
    %429 = vector.shape_cast %428 : vector<1x8x512xf32> to vector<8x512xf32>
    %430 = arith.truncf %421 : vector<8x128xf32> to vector<8x128xbf16>
    %cst_158 = arith.constant dense<0.000000e+00> : vector<8x512xf32>
    %431 = tpu.matmul %430, %344, %cst_158 {dimension_numbers = #tpu.dot_dimension_numbers<[1], [0], [0], [1], [0, 0, 1, 1], [], []>} : vector<8x128xbf16>, vector<128x512xbf16>, vector<8x512xf32> -> vector<8x512xf32>
    %432 = arith.addf %429, %431 : vector<8x512xf32>
    %433 = vector.extract_strided_slice %432 {offsets = [0, 0], sizes = [8, 128], strides = [1, 1]} : vector<8x512xf32> to vector<8x128xf32>
    %cst_159 = arith.constant 0.000000e+00 : f32
    %434 = vector.broadcast %cst_159 : f32 to vector<8x128xf32>
    %435 = arith.subf %434, %433 : vector<8x128xf32>
    %436 = math.exp %435 : vector<8x128xf32>
    %cst_160 = arith.constant 1.000000e+00 : f32
    %437 = vector.broadcast %cst_160 : f32 to vector<8x128xf32>
    %438 = arith.addf %437, %436 : vector<8x128xf32>
    %439 = tpu.reciprocal %438 {approx = true} : vector<8x128xf32> -> vector<8x128xf32>
    %440 = vector.extract_strided_slice %432 {offsets = [0, 128], sizes = [8, 128], strides = [1, 1]} : vector<8x512xf32> to vector<8x128xf32>
    %cst_161 = arith.constant 0.000000e+00 : f32
    %441 = vector.broadcast %cst_161 : f32 to vector<8x128xf32>
    %442 = arith.subf %441, %440 : vector<8x128xf32>
    %443 = math.exp %442 : vector<8x128xf32>
    %cst_162 = arith.constant 1.000000e+00 : f32
    %444 = vector.broadcast %cst_162 : f32 to vector<8x128xf32>
    %445 = arith.addf %444, %443 : vector<8x128xf32>
    %446 = tpu.reciprocal %445 {approx = true} : vector<8x128xf32> -> vector<8x128xf32>
    %447 = vector.extract_strided_slice %432 {offsets = [0, 256], sizes = [8, 128], strides = [1, 1]} : vector<8x512xf32> to vector<8x128xf32>
    %448 = math.tanh %447 : vector<8x128xf32>
    %449 = vector.extract_strided_slice %432 {offsets = [0, 384], sizes = [8, 128], strides = [1, 1]} : vector<8x512xf32> to vector<8x128xf32>
    %cst_163 = arith.constant 0.000000e+00 : f32
    %450 = vector.broadcast %cst_163 : f32 to vector<8x128xf32>
    %451 = arith.subf %450, %449 : vector<8x128xf32>
    %452 = math.exp %451 : vector<8x128xf32>
    %cst_164 = arith.constant 1.000000e+00 : f32
    %453 = vector.broadcast %cst_164 : f32 to vector<8x128xf32>
    %454 = arith.addf %453, %452 : vector<8x128xf32>
    %455 = tpu.reciprocal %454 {approx = true} : vector<8x128xf32> -> vector<8x128xf32>
    %456 = arith.mulf %446, %419 : vector<8x128xf32>
    %457 = arith.mulf %439, %448 : vector<8x128xf32>
    %458 = arith.addf %456, %457 : vector<8x128xf32>
    %459 = math.tanh %458 : vector<8x128xf32>
    %460 = arith.mulf %455, %459 : vector<8x128xf32>
    %461 = arith.truncf %460 : vector<8x128xf32> to vector<8x128xbf16>
    %462 = arith.index_cast %c2_i32_155 : i32 to index
    %c0_165 = arith.constant 0 : index
    %c0_166 = arith.constant 0 : index
    %463 = vector.load %arg13[%462, %c0_165, %c0_166] : memref<8x8x128xbf16, #tpu.memory_space<vmem>>, vector<1x8x128xbf16>
    %464 = vector.shape_cast %463 : vector<1x8x128xbf16> to vector<8x128xbf16>
    %465 = vector.shape_cast %461 : vector<8x128xbf16> to vector<1x8x128xbf16>
    tpu.vector_store %arg13[%462, %c0_165, %c0_166], %465 {strides = array<i32>} : memref<8x8x128xbf16, #tpu.memory_space<vmem>>, vector<1x8x128xbf16>,
    %c3_i32_167 = arith.constant 3 : i32
    %466 = arith.index_cast %c3_i32_167 : i32 to index
    %c0_168 = arith.constant 0 : index
    %c0_169 = arith.constant 0 : index
    %467 = vector.load %arg12[%466, %c0_168, %c0_169] : memref<8x8x512xf32, #tpu.memory_space<vmem>>, vector<1x8x512xf32>
    %468 = vector.shape_cast %467 : vector<1x8x512xf32> to vector<8x512xf32>
    %469 = arith.truncf %460 : vector<8x128xf32> to vector<8x128xbf16>
    %cst_170 = arith.constant dense<0.000000e+00> : vector<8x512xf32>
    %470 = tpu.matmul %469, %344, %cst_170 {dimension_numbers = #tpu.dot_dimension_numbers<[1], [0], [0], [1], [0, 0, 1, 1], [], []>} : vector<8x128xbf16>, vector<128x512xbf16>, vector<8x512xf32> -> vector<8x512xf32>
    %471 = arith.addf %468, %470 : vector<8x512xf32>
    %472 = vector.extract_strided_slice %471 {offsets = [0, 0], sizes = [8, 128], strides = [1, 1]} : vector<8x512xf32> to vector<8x128xf32>
    %cst_171 = arith.constant 0.000000e+00 : f32
    %473 = vector.broadcast %cst_171 : f32 to vector<8x128xf32>
    %474 = arith.subf %473, %472 : vector<8x128xf32>
    %475 = math.exp %474 : vector<8x128xf32>
    %cst_172 = arith.constant 1.000000e+00 : f32
    %476 = vector.broadcast %cst_172 : f32 to vector<8x128xf32>
    %477 = arith.addf %476, %475 : vector<8x128xf32>
    %478 = tpu.reciprocal %477 {approx = true} : vector<8x128xf32> -> vector<8x128xf32>
    %479 = vector.extract_strided_slice %471 {offsets = [0, 128], sizes = [8, 128], strides = [1, 1]} : vector<8x512xf32> to vector<8x128xf32>
    %cst_173 = arith.constant 0.000000e+00 : f32
    %480 = vector.broadcast %cst_173 : f32 to vector<8x128xf32>
    %481 = arith.subf %480, %479 : vector<8x128xf32>
    %482 = math.exp %481 : vector<8x128xf32>
    %cst_174 = arith.constant 1.000000e+00 : f32
    %483 = vector.broadcast %cst_174 : f32 to vector<8x128xf32>
    %484 = arith.addf %483, %482 : vector<8x128xf32>
    %485 = tpu.reciprocal %484 {approx = true} : vector<8x128xf32> -> vector<8x128xf32>
    %486 = vector.extract_strided_slice %471 {offsets = [0, 256], sizes = [8, 128], strides = [1, 1]} : vector<8x512xf32> to vector<8x128xf32>
    %487 = math.tanh %486 : vector<8x128xf32>
    %488 = vector.extract_strided_slice %471 {offsets = [0, 384], sizes = [8, 128], strides = [1, 1]} : vector<8x512xf32> to vector<8x128xf32>
    %cst_175 = arith.constant 0.000000e+00 : f32
    %489 = vector.broadcast %cst_175 : f32 to vector<8x128xf32>
    %490 = arith.subf %489, %488 : vector<8x128xf32>
    %491 = math.exp %490 : vector<8x128xf32>
    %cst_176 = arith.constant 1.000000e+00 : f32
    %492 = vector.broadcast %cst_176 : f32 to vector<8x128xf32>
    %493 = arith.addf %492, %491 : vector<8x128xf32>
    %494 = tpu.reciprocal %493 {approx = true} : vector<8x128xf32> -> vector<8x128xf32>
    %495 = arith.mulf %485, %458 : vector<8x128xf32>
    %496 = arith.mulf %478, %487 : vector<8x128xf32>
    %497 = arith.addf %495, %496 : vector<8x128xf32>
    %498 = math.tanh %497 : vector<8x128xf32>
    %499 = arith.mulf %494, %498 : vector<8x128xf32>
    %500 = arith.truncf %499 : vector<8x128xf32> to vector<8x128xbf16>
    %501 = arith.index_cast %c3_i32_167 : i32 to index
    %c0_177 = arith.constant 0 : index
    %c0_178 = arith.constant 0 : index
    %502 = vector.load %arg13[%501, %c0_177, %c0_178] : memref<8x8x128xbf16, #tpu.memory_space<vmem>>, vector<1x8x128xbf16>
    %503 = vector.shape_cast %502 : vector<1x8x128xbf16> to vector<8x128xbf16>
    %504 = vector.shape_cast %500 : vector<8x128xbf16> to vector<1x8x128xbf16>
    tpu.vector_store %arg13[%501, %c0_177, %c0_178], %504 {strides = array<i32>} : memref<8x8x128xbf16, #tpu.memory_space<vmem>>, vector<1x8x128xbf16>,
    %c4_i32_179 = arith.constant 4 : i32
    %505 = arith.index_cast %c4_i32_179 : i32 to index
    %c0_180 = arith.constant 0 : index
    %c0_181 = arith.constant 0 : index
    %506 = vector.load %arg12[%505, %c0_180, %c0_181] : memref<8x8x512xf32, #tpu.memory_space<vmem>>, vector<1x8x512xf32>
    %507 = vector.shape_cast %506 : vector<1x8x512xf32> to vector<8x512xf32>
    %508 = arith.truncf %499 : vector<8x128xf32> to vector<8x128xbf16>
    %cst_182 = arith.constant dense<0.000000e+00> : vector<8x512xf32>
    %509 = tpu.matmul %508, %344, %cst_182 {dimension_numbers = #tpu.dot_dimension_numbers<[1], [0], [0], [1], [0, 0, 1, 1], [], []>} : vector<8x128xbf16>, vector<128x512xbf16>, vector<8x512xf32> -> vector<8x512xf32>
    %510 = arith.addf %507, %509 : vector<8x512xf32>
    %511 = vector.extract_strided_slice %510 {offsets = [0, 0], sizes = [8, 128], strides = [1, 1]} : vector<8x512xf32> to vector<8x128xf32>
    %cst_183 = arith.constant 0.000000e+00 : f32
    %512 = vector.broadcast %cst_183 : f32 to vector<8x128xf32>
    %513 = arith.subf %512, %511 : vector<8x128xf32>
    %514 = math.exp %513 : vector<8x128xf32>
    %cst_184 = arith.constant 1.000000e+00 : f32
    %515 = vector.broadcast %cst_184 : f32 to vector<8x128xf32>
    %516 = arith.addf %515, %514 : vector<8x128xf32>
    %517 = tpu.reciprocal %516 {approx = true} : vector<8x128xf32> -> vector<8x128xf32>
    %518 = vector.extract_strided_slice %510 {offsets = [0, 128], sizes = [8, 128], strides = [1, 1]} : vector<8x512xf32> to vector<8x128xf32>
    %cst_185 = arith.constant 0.000000e+00 : f32
    %519 = vector.broadcast %cst_185 : f32 to vector<8x128xf32>
    %520 = arith.subf %519, %518 : vector<8x128xf32>
    %521 = math.exp %520 : vector<8x128xf32>
    %cst_186 = arith.constant 1.000000e+00 : f32
    %522 = vector.broadcast %cst_186 : f32 to vector<8x128xf32>
    %523 = arith.addf %522, %521 : vector<8x128xf32>
    %524 = tpu.reciprocal %523 {approx = true} : vector<8x128xf32> -> vector<8x128xf32>
    %525 = vector.extract_strided_slice %510 {offsets = [0, 256], sizes = [8, 128], strides = [1, 1]} : vector<8x512xf32> to vector<8x128xf32>
    %526 = math.tanh %525 : vector<8x128xf32>
    %527 = vector.extract_strided_slice %510 {offsets = [0, 384], sizes = [8, 128], strides = [1, 1]} : vector<8x512xf32> to vector<8x128xf32>
    %cst_187 = arith.constant 0.000000e+00 : f32
    %528 = vector.broadcast %cst_187 : f32 to vector<8x128xf32>
    %529 = arith.subf %528, %527 : vector<8x128xf32>
    %530 = math.exp %529 : vector<8x128xf32>
    %cst_188 = arith.constant 1.000000e+00 : f32
    %531 = vector.broadcast %cst_188 : f32 to vector<8x128xf32>
    %532 = arith.addf %531, %530 : vector<8x128xf32>
    %533 = tpu.reciprocal %532 {approx = true} : vector<8x128xf32> -> vector<8x128xf32>
    %534 = arith.mulf %524, %497 : vector<8x128xf32>
    %535 = arith.mulf %517, %526 : vector<8x128xf32>
    %536 = arith.addf %534, %535 : vector<8x128xf32>
    %537 = math.tanh %536 : vector<8x128xf32>
    %538 = arith.mulf %533, %537 : vector<8x128xf32>
    %539 = arith.truncf %538 : vector<8x128xf32> to vector<8x128xbf16>
    %540 = arith.index_cast %c4_i32_179 : i32 to index
    %c0_189 = arith.constant 0 : index
    %c0_190 = arith.constant 0 : index
    %541 = vector.load %arg13[%540, %c0_189, %c0_190] : memref<8x8x128xbf16, #tpu.memory_space<vmem>>, vector<1x8x128xbf16>
    %542 = vector.shape_cast %541 : vector<1x8x128xbf16> to vector<8x128xbf16>
    %543 = vector.shape_cast %539 : vector<8x128xbf16> to vector<1x8x128xbf16>
    tpu.vector_store %arg13[%540, %c0_189, %c0_190], %543 {strides = array<i32>} : memref<8x8x128xbf16, #tpu.memory_space<vmem>>, vector<1x8x128xbf16>,
    %c5_i32_191 = arith.constant 5 : i32
    %544 = arith.index_cast %c5_i32_191 : i32 to index
    %c0_192 = arith.constant 0 : index
    %c0_193 = arith.constant 0 : index
    %545 = vector.load %arg12[%544, %c0_192, %c0_193] : memref<8x8x512xf32, #tpu.memory_space<vmem>>, vector<1x8x512xf32>
    %546 = vector.shape_cast %545 : vector<1x8x512xf32> to vector<8x512xf32>
    %547 = arith.truncf %538 : vector<8x128xf32> to vector<8x128xbf16>
    %cst_194 = arith.constant dense<0.000000e+00> : vector<8x512xf32>
    %548 = tpu.matmul %547, %344, %cst_194 {dimension_numbers = #tpu.dot_dimension_numbers<[1], [0], [0], [1], [0, 0, 1, 1], [], []>} : vector<8x128xbf16>, vector<128x512xbf16>, vector<8x512xf32> -> vector<8x512xf32>
    %549 = arith.addf %546, %548 : vector<8x512xf32>
    %550 = vector.extract_strided_slice %549 {offsets = [0, 0], sizes = [8, 128], strides = [1, 1]} : vector<8x512xf32> to vector<8x128xf32>
    %cst_195 = arith.constant 0.000000e+00 : f32
    %551 = vector.broadcast %cst_195 : f32 to vector<8x128xf32>
    %552 = arith.subf %551, %550 : vector<8x128xf32>
    %553 = math.exp %552 : vector<8x128xf32>
    %cst_196 = arith.constant 1.000000e+00 : f32
    %554 = vector.broadcast %cst_196 : f32 to vector<8x128xf32>
    %555 = arith.addf %554, %553 : vector<8x128xf32>
    %556 = tpu.reciprocal %555 {approx = true} : vector<8x128xf32> -> vector<8x128xf32>
    %557 = vector.extract_strided_slice %549 {offsets = [0, 128], sizes = [8, 128], strides = [1, 1]} : vector<8x512xf32> to vector<8x128xf32>
    %cst_197 = arith.constant 0.000000e+00 : f32
    %558 = vector.broadcast %cst_197 : f32 to vector<8x128xf32>
    %559 = arith.subf %558, %557 : vector<8x128xf32>
    %560 = math.exp %559 : vector<8x128xf32>
    %cst_198 = arith.constant 1.000000e+00 : f32
    %561 = vector.broadcast %cst_198 : f32 to vector<8x128xf32>
    %562 = arith.addf %561, %560 : vector<8x128xf32>
    %563 = tpu.reciprocal %562 {approx = true} : vector<8x128xf32> -> vector<8x128xf32>
    %564 = vector.extract_strided_slice %549 {offsets = [0, 256], sizes = [8, 128], strides = [1, 1]} : vector<8x512xf32> to vector<8x128xf32>
    %565 = math.tanh %564 : vector<8x128xf32>
    %566 = vector.extract_strided_slice %549 {offsets = [0, 384], sizes = [8, 128], strides = [1, 1]} : vector<8x512xf32> to vector<8x128xf32>
    %cst_199 = arith.constant 0.000000e+00 : f32
    %567 = vector.broadcast %cst_199 : f32 to vector<8x128xf32>
    %568 = arith.subf %567, %566 : vector<8x128xf32>
    %569 = math.exp %568 : vector<8x128xf32>
    %cst_200 = arith.constant 1.000000e+00 : f32
    %570 = vector.broadcast %cst_200 : f32 to vector<8x128xf32>
    %571 = arith.addf %570, %569 : vector<8x128xf32>
    %572 = tpu.reciprocal %571 {approx = true} : vector<8x128xf32> -> vector<8x128xf32>
    %573 = arith.mulf %563, %536 : vector<8x128xf32>
    %574 = arith.mulf %556, %565 : vector<8x128xf32>
    %575 = arith.addf %573, %574 : vector<8x128xf32>
    %576 = math.tanh %575 : vector<8x128xf32>
    %577 = arith.mulf %572, %576 : vector<8x128xf32>
    %578 = arith.truncf %577 : vector<8x128xf32> to vector<8x128xbf16>
    %579 = arith.index_cast %c5_i32_191 : i32 to index
    %c0_201 = arith.constant 0 : index
    %c0_202 = arith.constant 0 : index
    %580 = vector.load %arg13[%579, %c0_201, %c0_202] : memref<8x8x128xbf16, #tpu.memory_space<vmem>>, vector<1x8x128xbf16>
    %581 = vector.shape_cast %580 : vector<1x8x128xbf16> to vector<8x128xbf16>
    %582 = vector.shape_cast %578 : vector<8x128xbf16> to vector<1x8x128xbf16>
    tpu.vector_store %arg13[%579, %c0_201, %c0_202], %582 {strides = array<i32>} : memref<8x8x128xbf16, #tpu.memory_space<vmem>>, vector<1x8x128xbf16>,
    %c6_i32_203 = arith.constant 6 : i32
    %583 = arith.index_cast %c6_i32_203 : i32 to index
    %c0_204 = arith.constant 0 : index
    %c0_205 = arith.constant 0 : index
    %584 = vector.load %arg12[%583, %c0_204, %c0_205] : memref<8x8x512xf32, #tpu.memory_space<vmem>>, vector<1x8x512xf32>
    %585 = vector.shape_cast %584 : vector<1x8x512xf32> to vector<8x512xf32>
    %586 = arith.truncf %577 : vector<8x128xf32> to vector<8x128xbf16>
    %cst_206 = arith.constant dense<0.000000e+00> : vector<8x512xf32>
    %587 = tpu.matmul %586, %344, %cst_206 {dimension_numbers = #tpu.dot_dimension_numbers<[1], [0], [0], [1], [0, 0, 1, 1], [], []>} : vector<8x128xbf16>, vector<128x512xbf16>, vector<8x512xf32> -> vector<8x512xf32>
    %588 = arith.addf %585, %587 : vector<8x512xf32>
    %589 = vector.extract_strided_slice %588 {offsets = [0, 0], sizes = [8, 128], strides = [1, 1]} : vector<8x512xf32> to vector<8x128xf32>
    %cst_207 = arith.constant 0.000000e+00 : f32
    %590 = vector.broadcast %cst_207 : f32 to vector<8x128xf32>
    %591 = arith.subf %590, %589 : vector<8x128xf32>
    %592 = math.exp %591 : vector<8x128xf32>
    %cst_208 = arith.constant 1.000000e+00 : f32
    %593 = vector.broadcast %cst_208 : f32 to vector<8x128xf32>
    %594 = arith.addf %593, %592 : vector<8x128xf32>
    %595 = tpu.reciprocal %594 {approx = true} : vector<8x128xf32> -> vector<8x128xf32>
    %596 = vector.extract_strided_slice %588 {offsets = [0, 128], sizes = [8, 128], strides = [1, 1]} : vector<8x512xf32> to vector<8x128xf32>
    %cst_209 = arith.constant 0.000000e+00 : f32
    %597 = vector.broadcast %cst_209 : f32 to vector<8x128xf32>
    %598 = arith.subf %597, %596 : vector<8x128xf32>
    %599 = math.exp %598 : vector<8x128xf32>
    %cst_210 = arith.constant 1.000000e+00 : f32
    %600 = vector.broadcast %cst_210 : f32 to vector<8x128xf32>
    %601 = arith.addf %600, %599 : vector<8x128xf32>
    %602 = tpu.reciprocal %601 {approx = true} : vector<8x128xf32> -> vector<8x128xf32>
    %603 = vector.extract_strided_slice %588 {offsets = [0, 256], sizes = [8, 128], strides = [1, 1]} : vector<8x512xf32> to vector<8x128xf32>
    %604 = math.tanh %603 : vector<8x128xf32>
    %605 = vector.extract_strided_slice %588 {offsets = [0, 384], sizes = [8, 128], strides = [1, 1]} : vector<8x512xf32> to vector<8x128xf32>
    %cst_211 = arith.constant 0.000000e+00 : f32
    %606 = vector.broadcast %cst_211 : f32 to vector<8x128xf32>
    %607 = arith.subf %606, %605 : vector<8x128xf32>
    %608 = math.exp %607 : vector<8x128xf32>
    %cst_212 = arith.constant 1.000000e+00 : f32
    %609 = vector.broadcast %cst_212 : f32 to vector<8x128xf32>
    %610 = arith.addf %609, %608 : vector<8x128xf32>
    %611 = tpu.reciprocal %610 {approx = true} : vector<8x128xf32> -> vector<8x128xf32>
    %612 = arith.mulf %602, %575 : vector<8x128xf32>
    %613 = arith.mulf %595, %604 : vector<8x128xf32>
    %614 = arith.addf %612, %613 : vector<8x128xf32>
    %615 = math.tanh %614 : vector<8x128xf32>
    %616 = arith.mulf %611, %615 : vector<8x128xf32>
    %617 = arith.truncf %616 : vector<8x128xf32> to vector<8x128xbf16>
    %618 = arith.index_cast %c6_i32_203 : i32 to index
    %c0_213 = arith.constant 0 : index
    %c0_214 = arith.constant 0 : index
    %619 = vector.load %arg13[%618, %c0_213, %c0_214] : memref<8x8x128xbf16, #tpu.memory_space<vmem>>, vector<1x8x128xbf16>
    %620 = vector.shape_cast %619 : vector<1x8x128xbf16> to vector<8x128xbf16>
    %621 = vector.shape_cast %617 : vector<8x128xbf16> to vector<1x8x128xbf16>
    tpu.vector_store %arg13[%618, %c0_213, %c0_214], %621 {strides = array<i32>} : memref<8x8x128xbf16, #tpu.memory_space<vmem>>, vector<1x8x128xbf16>,
    %c7_i32_215 = arith.constant 7 : i32
    %622 = arith.index_cast %c7_i32_215 : i32 to index
    %c0_216 = arith.constant 0 : index
    %c0_217 = arith.constant 0 : index
    %623 = vector.load %arg12[%622, %c0_216, %c0_217] : memref<8x8x512xf32, #tpu.memory_space<vmem>>, vector<1x8x512xf32>
    %624 = vector.shape_cast %623 : vector<1x8x512xf32> to vector<8x512xf32>
    %625 = arith.truncf %616 : vector<8x128xf32> to vector<8x128xbf16>
    %cst_218 = arith.constant dense<0.000000e+00> : vector<8x512xf32>
    %626 = tpu.matmul %625, %344, %cst_218 {dimension_numbers = #tpu.dot_dimension_numbers<[1], [0], [0], [1], [0, 0, 1, 1], [], []>} : vector<8x128xbf16>, vector<128x512xbf16>, vector<8x512xf32> -> vector<8x512xf32>
    %627 = arith.addf %624, %626 : vector<8x512xf32>
    %628 = vector.extract_strided_slice %627 {offsets = [0, 0], sizes = [8, 128], strides = [1, 1]} : vector<8x512xf32> to vector<8x128xf32>
    %cst_219 = arith.constant 0.000000e+00 : f32
    %629 = vector.broadcast %cst_219 : f32 to vector<8x128xf32>
    %630 = arith.subf %629, %628 : vector<8x128xf32>
    %631 = math.exp %630 : vector<8x128xf32>
    %cst_220 = arith.constant 1.000000e+00 : f32
    %632 = vector.broadcast %cst_220 : f32 to vector<8x128xf32>
    %633 = arith.addf %632, %631 : vector<8x128xf32>
    %634 = tpu.reciprocal %633 {approx = true} : vector<8x128xf32> -> vector<8x128xf32>
    %635 = vector.extract_strided_slice %627 {offsets = [0, 128], sizes = [8, 128], strides = [1, 1]} : vector<8x512xf32> to vector<8x128xf32>
    %cst_221 = arith.constant 0.000000e+00 : f32
    %636 = vector.broadcast %cst_221 : f32 to vector<8x128xf32>
    %637 = arith.subf %636, %635 : vector<8x128xf32>
    %638 = math.exp %637 : vector<8x128xf32>
    %cst_222 = arith.constant 1.000000e+00 : f32
    %639 = vector.broadcast %cst_222 : f32 to vector<8x128xf32>
    %640 = arith.addf %639, %638 : vector<8x128xf32>
    %641 = tpu.reciprocal %640 {approx = true} : vector<8x128xf32> -> vector<8x128xf32>
    %642 = vector.extract_strided_slice %627 {offsets = [0, 256], sizes = [8, 128], strides = [1, 1]} : vector<8x512xf32> to vector<8x128xf32>
    %643 = math.tanh %642 : vector<8x128xf32>
    %644 = vector.extract_strided_slice %627 {offsets = [0, 384], sizes = [8, 128], strides = [1, 1]} : vector<8x512xf32> to vector<8x128xf32>
    %cst_223 = arith.constant 0.000000e+00 : f32
    %645 = vector.broadcast %cst_223 : f32 to vector<8x128xf32>
    %646 = arith.subf %645, %644 : vector<8x128xf32>
    %647 = math.exp %646 : vector<8x128xf32>
    %cst_224 = arith.constant 1.000000e+00 : f32
    %648 = vector.broadcast %cst_224 : f32 to vector<8x128xf32>
    %649 = arith.addf %648, %647 : vector<8x128xf32>
    %650 = tpu.reciprocal %649 {approx = true} : vector<8x128xf32> -> vector<8x128xf32>
    %651 = arith.mulf %641, %614 : vector<8x128xf32>
    %652 = arith.mulf %634, %643 : vector<8x128xf32>
    %653 = arith.addf %651, %652 : vector<8x128xf32>
    %654 = math.tanh %653 : vector<8x128xf32>
    %655 = arith.mulf %650, %654 : vector<8x128xf32>
    %656 = arith.truncf %655 : vector<8x128xf32> to vector<8x128xbf16>
    %657 = arith.index_cast %c7_i32_215 : i32 to index
    %c0_225 = arith.constant 0 : index
    %c0_226 = arith.constant 0 : index
    %658 = vector.load %arg13[%657, %c0_225, %c0_226] : memref<8x8x128xbf16, #tpu.memory_space<vmem>>, vector<1x8x128xbf16>
    %659 = vector.shape_cast %658 : vector<1x8x128xbf16> to vector<8x128xbf16>
    %660 = vector.shape_cast %656 : vector<8x128xbf16> to vector<1x8x128xbf16>
    tpu.vector_store %arg13[%657, %c0_225, %c0_226], %660 {strides = array<i32>} : memref<8x8x128xbf16, #tpu.memory_space<vmem>>, vector<1x8x128xbf16>,
    %c8_i32_227 = arith.constant 8 : i32
    %c1_228 = arith.constant 1 : index
    %c0_229 = arith.constant 0 : index
    %c0_230 = arith.constant 0 : index
    %661 = vector.load %arg10[%c1_228, %c0_229, %c0_230] : memref<2x8x128xf32, #tpu.memory_space<vmem>>, vector<1x8x128xf32>
    %662 = vector.shape_cast %661 : vector<1x8x128xf32> to vector<8x128xf32>
    %663 = vector.shape_cast %655 : vector<8x128xf32> to vector<1x8x128xf32>
    tpu.vector_store %arg10[%c1_228, %c0_229, %c0_230], %663 {strides = array<i32>} : memref<2x8x128xf32, #tpu.memory_space<vmem>>, vector<1x8x128xf32>,
    %c1_231 = arith.constant 1 : index
    %c0_232 = arith.constant 0 : index
    %c0_233 = arith.constant 0 : index
    %664 = vector.load %arg11[%c1_231, %c0_232, %c0_233] : memref<2x8x128xf32, #tpu.memory_space<vmem>>, vector<1x8x128xf32>
    %665 = vector.shape_cast %664 : vector<1x8x128xf32> to vector<8x128xf32>
    %666 = vector.shape_cast %653 : vector<8x128xf32> to vector<1x8x128xf32>
    tpu.vector_store %arg11[%c1_231, %c0_232, %c0_233], %666 {strides = array<i32>} : memref<2x8x128xf32, #tpu.memory_space<vmem>>, vector<1x8x128xf32>,
    %c0_234 = arith.constant 0 : index
    %c0_235 = arith.constant 0 : index
    %c0_236 = arith.constant 0 : index
    %667 = vector.load %arg13[%c0_234, %c0_235, %c0_236] : memref<8x8x128xbf16, #tpu.memory_space<vmem>>, vector<8x8x128xbf16>
    %668 = arith.extf %667 : vector<8x8x128xbf16> to vector<8x8x128xf32>
    %669 = arith.negf %668 : vector<8x8x128xf32>
    %670 = math.exp %669 : vector<8x8x128xf32>
    %cst_237 = arith.constant 1.000000e+00 : f32
    %671 = vector.broadcast %cst_237 : f32 to vector<8x8x128xf32>
    %672 = arith.addf %671, %670 : vector<8x8x128xf32>
    %673 = arith.divf %671, %672 : vector<8x8x128xf32>
    %674 = arith.truncf %673 : vector<8x8x128xf32> to vector<8x8x128xbf16>
    %c0_238 = arith.constant 0 : index
    %c0_239 = arith.constant 0 : index
    %c0_240 = arith.constant 0 : index
    %675 = vector.load %arg9[%c0_238, %c0_239, %c0_240] : memref<8x8x128xbf16, #tpu.memory_space<vmem>>, vector<8x8x128xbf16>
    tpu.vector_store %arg9[%c0_238, %c0_239, %c0_240], %674 {strides = array<i32>} : memref<8x8x128xbf16, #tpu.memory_space<vmem>>, vector<8x8x128xbf16>,
    return
  }
  func.func @transform_0(%arg0: i32, %arg1: i32) -> (i32, i32, i32) {
    %c0_i32 = arith.constant 0 : i32
    %c0_i32_0 = arith.constant 0 : i32
    return %arg1, %arg0, %c0_i32 : i32, i32, i32
  }
  func.func @transform_1(%arg0: i32, %arg1: i32) -> (i32, i32) {
    %c0_i32 = arith.constant 0 : i32
    %c0_i32_0 = arith.constant 0 : i32
    %c0_i32_1 = arith.constant 0 : i32
    return %c0_i32, %c0_i32_0 : i32, i32
  }
  func.func @transform_2(%arg0: i32, %arg1: i32) -> (i32, i32) {
    %c0_i32 = arith.constant 0 : i32
    %c0_i32_0 = arith.constant 0 : i32
    %c0_i32_1 = arith.constant 0 : i32
    return %c0_i32, %c0_i32_0 : i32, i32
  }
  func.func @transform_3(%arg0: i32, %arg1: i32) -> (i32, i32) {
    %c0_i32 = arith.constant 0 : i32
    %c0_i32_0 = arith.constant 0 : i32
    %c0_i32_1 = arith.constant 0 : i32
    return %c0_i32, %c0_i32_0 : i32, i32
  }
  func.func @transform_4(%arg0: i32, %arg1: i32) -> (i32, i32) {
    %c0_i32 = arith.constant 0 : i32
    %c0_i32_0 = arith.constant 0 : i32
    %c0_i32_1 = arith.constant 0 : i32
    return %c0_i32, %c0_i32_0 : i32, i32
  }
  func.func @transform_5(%arg0: i32, %arg1: i32) -> (i32, i32) {
    %c0_i32 = arith.constant 0 : i32
    %c0_i32_0 = arith.constant 0 : i32
    %c0_i32_1 = arith.constant 0 : i32
    return %c0_i32, %c0_i32_0 : i32, i32
  }
  func.func @transform_6(%arg0: i32, %arg1: i32) -> (i32, i32) {
    %c0_i32 = arith.constant 0 : i32
    %c0_i32_0 = arith.constant 0 : i32
    %c0_i32_1 = arith.constant 0 : i32
    return %c0_i32, %c0_i32_0 : i32, i32
  }
  func.func @transform_7(%arg0: i32, %arg1: i32) -> (i32, i32, i32) {
    %c0_i32 = arith.constant 0 : i32
    %c0_i32_0 = arith.constant 0 : i32
    return %arg1, %arg0, %c0_i32 : i32, i32, i32
  }
}

</mosaic_0001>

<llo_original>
// kernel: tpu_custom_call.1
$region0: #{tpu_custom_call.1}
  #allocation0 [shape = 'u32[]', space=smem, size = 0x4, offset = 0x4, fixed_abs, tag = 'smem constant byte address 0x4 - core index']
  #allocation1 [shape = 'u32[144,128]{1,0:T(1,128)}', space=vmem, size = 0x12000, scoped, tag = 'internal scratch']
  #allocation2 [shape = 'f32[2,8,128]{2,1,0:T(8,128)}', space=vmem, size = 0x2000, scoped, tag = 'scratch operand']
  #allocation3 [shape = 'f32[2,8,128]{2,1,0:T(8,128)}', space=vmem, size = 0x2000, scoped, tag = 'scratch operand']
  #allocation4 [shape = 'f32[8,8,512]{2,1,0:T(8,128)}', space=vmem, size = 0x20000, scoped, tag = 'scratch operand']
  #allocation5 [shape = 'bf16[8,8,128]{2,1,0:T(8,128)(2,1)}', space=vmem, size = 0x4000, scoped, tag = 'scratch operand']
  %s0 = inlined_call_operand.hbm [shape: bf16[8,8,128], index: 0, kind: input, shape index: {}]
  %s1 = inlined_call_operand.hbm [shape: bf16[128,512], index: 1, kind: input, shape index: {}]
  %s2 = inlined_call_operand.hbm [shape: bf16[128,512], index: 2, kind: input, shape index: {}]
  %s3 = inlined_call_operand.vmem [shape: f32[1,512], index: 3, kind: input, shape index: {}]
  %s4 = inlined_call_operand.hbm [shape: bf16[128,512], index: 4, kind: input, shape index: {}]
  %s5 = inlined_call_operand.hbm [shape: bf16[128,512], index: 5, kind: input, shape index: {}]
  %s6 = inlined_call_operand.vmem [shape: f32[1,512], index: 6, kind: input, shape index: {}]
  %s7 = inlined_call_operand.hbm [shape: bf16[8,8,128], index: 7, kind: output, shape index: {}]
  %s8 = sld [smem:[#allocation0]]
  $region62: #{tpu_custom_call.1} parent=0
    _
  %s10 = ssub.s32 1, %s8
  %s11 = scalar_select 0, %s10, %s8
  $region1: #{tpu_custom_call.1} parent=0
    #allocation6 [shape = 'u8[16384]{0}', space=vmem, size = 0x4000, scoped, tag = 'input window, operand 0, single buffered']
    #allocation7 [shape = 's32[1]{0}', space=sflag, size = 0x4, scoped, tag = 'scoped memory for tpu_custom_call.1']
    #allocation8 [shape = 's32[1]{0}', space=sflag, size = 0x4, scoped, tag = 'scoped memory for tpu_custom_call.1']
    #allocation9 [shape = 'u8[131072]{0}', space=vmem, size = 0x20000, scoped, tag = 'input window, operand 1, single buffered']
    #allocation10 [shape = 's32[1]{0}', space=sflag, size = 0x4, scoped, tag = 'scoped memory for tpu_custom_call.1']
    #allocation11 [shape = 'u8[131072]{0}', space=vmem, size = 0x20000, scoped, tag = 'input window, operand 2, single buffered']
    #allocation12 [shape = 'u8[131072]{0}', space=vmem, size = 0x20000, scoped, tag = 'input window, operand 4, single buffered']
    #allocation13 [shape = 's32[1]{0}', space=sflag, size = 0x4, scoped, tag = 'scoped memory for tpu_custom_call.1']
    #allocation14 [shape = 'u8[131072]{0}', space=vmem, size = 0x20000, scoped, tag = 'input window, operand 5, single buffered']
    #allocation15 [shape = 'u8[16384]{0}', space=vmem, size = 0x4000, scoped, tag = 'output window, operand 0, single buffered']
    %12 = vsyncpa [#allocation7], 0
    %13 = vsyncpa [#allocation10], 0
    %14 = vsyncpa [#allocation13], 0
    %15 = vsyncpa [#allocation8], 0
    // Predicated region
    $region2: #{tpu_custom_call.1} parent=1 // pred_check
      _
    $region3: #{tpu_custom_call.1} parent=1 // pred_check_branch
      %17 = sbr.rel (0) target = $region5
    $region4: #{tpu_custom_call.1} parent=1 // pred_region
      %s19 = ssub.s32 512, 512
      %20 = vsyncadd [#allocation7], %s19
      %s21 = sshll.u32 [#allocation6], 4
      %s22 = int_to_ptr.vmem [resolvable:$true] %s21
      %27 = dma.hbm_to_vmem [thread:$0]  %s0, 512, %s22, [#allocation7], 64, 64, 4
    $region5: #{tpu_custom_call.1} parent=1 // pred_fallthru
      _
    // Predicated region
    $region6: #{tpu_custom_call.1} parent=1 // pred_check
      _
    $region7: #{tpu_custom_call.1} parent=1 // pred_check_branch
      %29 = sbr.rel (0) target = $region9
    $region8: #{tpu_custom_call.1} parent=1 // pred_region
      %s31 = ssub.s32 4096, 4096
      %32 = vsyncadd [#allocation10], %s31
      %s33 = sshll.u32 [#allocation9], 4
      %s34 = int_to_ptr.vmem [resolvable:$true] %s33
      %39 = dma.hbm_to_vmem [thread:$0]  %s1, 4096, %s34, [#allocation10], 256, 256, 16
    $region9: #{tpu_custom_call.1} parent=1 // pred_fallthru
      _
    // Predicated region
    $region10: #{tpu_custom_call.1} parent=1 // pred_check
      _
    $region11: #{tpu_custom_call.1} parent=1 // pred_check_branch
      %41 = sbr.rel (0) target = $region13
    $region12: #{tpu_custom_call.1} parent=1 // pred_region
      %s43 = ssub.s32 4096, 4096
      %44 = vsyncadd [#allocation10], %s43
      %s45 = sshll.u32 [#allocation11], 4
      %s46 = int_to_ptr.vmem [resolvable:$true] %s45
      %51 = dma.hbm_to_vmem [thread:$0]  %s2, 4096, %s46, [#allocation10], 256, 256, 16
    $region13: #{tpu_custom_call.1} parent=1 // pred_fallthru
      _
    // Predicated region
    $region14: #{tpu_custom_call.1} parent=1 // pred_check
      _
    $region15: #{tpu_custom_call.1} parent=1 // pred_check_branch
      %53 = sbr.rel (0) target = $region17
    $region16: #{tpu_custom_call.1} parent=1 // pred_region
      _
    $region17: #{tpu_custom_call.1} parent=1 // pred_fallthru
      _
    // Predicated region
    $region18: #{tpu_custom_call.1} parent=1 // pred_check
      _
    $region19: #{tpu_custom_call.1} parent=1 // pred_check_branch
      %55 = sbr.rel (0) target = $region21
    $region20: #{tpu_custom_call.1} parent=1 // pred_region
      %s57 = ssub.s32 4096, 4096
      %58 = vsyncadd [#allocation13], %s57
      %s59 = sshll.u32 [#allocation12], 4
      %s60 = int_to_ptr.vmem [resolvable:$true] %s59
      %65 = dma.hbm_to_vmem [thread:$0]  %s4, 4096, %s60, [#allocation13], 256, 256, 16
    $region21: #{tpu_custom_call.1} parent=1 // pred_fallthru
      _
    // Predicated region
    $region22: #{tpu_custom_call.1} parent=1 // pred_check
      _
    $region23: #{tpu_custom_call.1} parent=1 // pred_check_branch
      %67 = sbr.rel (0) target = $region25
    $region24: #{tpu_custom_call.1} parent=1 // pred_region
      %s69 = ssub.s32 4096, 4096
      %70 = vsyncadd [#allocation13], %s69
      %s71 = sshll.u32 [#allocation14], 4
      %s72 = int_to_ptr.vmem [resolvable:$true] %s71
      %77 = dma.hbm_to_vmem [thread:$0]  %s5, 4096, %s72, [#allocation13], 256, 256, 16
    $region25: #{tpu_custom_call.1} parent=1 // pred_fallthru
      _
    // Predicated region
    $region26: #{tpu_custom_call.1} parent=1 // pred_check
      _
    $region27: #{tpu_custom_call.1} parent=1 // pred_check_branch
      %79 = sbr.rel (0) target = $region29
    $region28: #{tpu_custom_call.1} parent=1 // pred_region
      _
    $region29: #{tpu_custom_call.1} parent=1 // pred_fallthru
      _
    // Predicated region
    $region30: #{tpu_custom_call.1} parent=1 // pred_check
      _
    $region31: #{tpu_custom_call.1} parent=1 // pred_check_branch
      %81 = sbr.rel (0) target = $region33
    $region32: #{tpu_custom_call.1} parent=1 // pred_region
      %82 = dma.done [#allocation7], 512
    $region33: #{tpu_custom_call.1} parent=1 // pred_fallthru
      _
    // Predicated region
    $region34: #{tpu_custom_call.1} parent=1 // pred_check
      _
    $region35: #{tpu_custom_call.1} parent=1 // pred_check_branch
      %84 = sbr.rel (0) target = $region37
    $region36: #{tpu_custom_call.1} parent=1 // pred_region
      %85 = dma.done [#allocation10], 4096
    $region37: #{tpu_custom_call.1} parent=1 // pred_fallthru
      _
    // Predicated region
    $region38: #{tpu_custom_call.1} parent=1 // pred_check
      _
    $region39: #{tpu_custom_call.1} parent=1 // pred_check_branch
      %87 = sbr.rel (0) target = $region41
    $region40: #{tpu_custom_call.1} parent=1 // pred_region
      %88 = dma.done [#allocation10], 4096
    $region41: #{tpu_custom_call.1} parent=1 // pred_fallthru
      _
    // Predicated region
    $region42: #{tpu_custom_call.1} parent=1 // pred_check
      _
    $region43: #{tpu_custom_call.1} parent=1 // pred_check_branch
      %90 = sbr.rel (0) target = $region45
    $region44: #{tpu_custom_call.1} parent=1 // pred_region
      %91 = dma.done [#allocation13], 4096
    $region45: #{tpu_custom_call.1} parent=1 // pred_fallthru
      _
    // Predicated region
    $region46: #{tpu_custom_call.1} parent=1 // pred_check
      _
    $region47: #{tpu_custom_call.1} parent=1 // pred_check_branch
      %93 = sbr.rel (0) target = $region49
    $region48: #{tpu_custom_call.1} parent=1 // pred_region
      %94 = dma.done [#allocation13], 4096
    $region49: #{tpu_custom_call.1} parent=1 // pred_fallthru
      _
    %p96 = scmp.eq.s32.totalorder 0, 0
    // Predicated region
    $region50: #{tpu_custom_call.1} parent=1 // pred_check
      %p97 = pneg %p96
    $region51: #{tpu_custom_call.1} parent=1 // pred_check_branch
      %99 = sbr.rel (%p97) target = $region53
    $region52: #{tpu_custom_call.1} parent=1 // pred_region
      %100 = vst [vmem:[#allocation2] sm:$0xff] 0.0
      %101 = vst [vmem:[#allocation2 + $0x8] sm:$0xff] 0.0
      %102 = vst [vmem:[#allocation3] sm:$0xff] 0.0
      %103 = vst [vmem:[#allocation3 + $0x8] sm:$0xff] 0.0
    $region53: #{tpu_custom_call.1} parent=1 // pred_fallthru
      _
    %v104 = vld [vmem:[#allocation6] sm:$0xf]
    %v105 = vld [vmem:[#allocation6 + $0x4] sm:$0xf]
    %v106 = vld [vmem:[#allocation6 + $0x8] sm:$0xf]
    %v107 = vld [vmem:[#allocation6 + $0xc] sm:$0xf]
    %v108 = vld [vmem:[#allocation6 + $0x10] sm:$0xf]
    %v109 = vld [vmem:[#allocation6 + $0x14] sm:$0xf]
    %v110 = vld [vmem:[#allocation6 + $0x18] sm:$0xf]
    %v111 = vld [vmem:[#allocation6 + $0x1c] sm:$0xf]
    %v112 = vld [vmem:[#allocation9] sm:$0xff]
    %v113 = vld [vmem:[#allocation9 + $0x8] sm:$0xff]
    %v114 = vld [vmem:[#allocation9 + $0x10] sm:$0xff]
    %v115 = vld [vmem:[#allocation9 + $0x18] sm:$0xff]
    %v116 = vld [vmem:[#allocation9 + $0x20] sm:$0xff]
    %v117 = vld [vmem:[#allocation9 + $0x28] sm:$0xff]
    %v118 = vld [vmem:[#allocation9 + $0x30] sm:$0xff]
    %v119 = vld [vmem:[#allocation9 + $0x38] sm:$0xff]
    %v120 = vld [vmem:[#allocation9 + $0x40] sm:$0xff]
    %v121 = vld [vmem:[#allocation9 + $0x48] sm:$0xff]
    %v122 = vld [vmem:[#allocation9 + $0x50] sm:$0xff]
    %v123 = vld [vmem:[#allocation9 + $0x58] sm:$0xff]
    %v124 = vld [vmem:[#allocation9 + $0x60] sm:$0xff]
    %v125 = vld [vmem:[#allocation9 + $0x68] sm:$0xff]
    %v126 = vld [vmem:[#allocation9 + $0x70] sm:$0xff]
    %v127 = vld [vmem:[#allocation9 + $0x78] sm:$0xff]
    %v128 = vld [vmem:[#allocation9 + $0x80] sm:$0xff]
    %v129 = vld [vmem:[#allocation9 + $0x88] sm:$0xff]
    %v130 = vld [vmem:[#allocation9 + $0x90] sm:$0xff]
    %v131 = vld [vmem:[#allocation9 + $0x98] sm:$0xff]
    %v132 = vld [vmem:[#allocation9 + $0xa0] sm:$0xff]
    %v133 = vld [vmem:[#allocation9 + $0xa8] sm:$0xff]
    %v134 = vld [vmem:[#allocation9 + $0xb0] sm:$0xff]
    %v135 = vld [vmem:[#allocation9 + $0xb8] sm:$0xff]
    %v136 = vld [vmem:[#allocation9 + $0xc0] sm:$0xff]
    %v137 = vld [vmem:[#allocation9 + $0xc8] sm:$0xff]
    %v138 = vld [vmem:[#allocation9 + $0xd0] sm:$0xff]
    %v139 = vld [vmem:[#allocation9 + $0xd8] sm:$0xff]
    %v140 = vld [vmem:[#allocation9 + $0xe0] sm:$0xff]
    %v141 = vld [vmem:[#allocation9 + $0xe8] sm:$0xff]
    %v142 = vld [vmem:[#allocation9 + $0xf0] sm:$0xff]
    %v143 = vld [vmem:[#allocation9 + $0xf8] sm:$0xff]
    %v144 = vld [vmem:[%s3] sm:$0xf]
    %v146 = vlaneseq
    %v147 = vshrl.u32 %v146, 7
    %v148 = vsub.s32 0, %v147
    %v149 = vrot.slane %v144, %v148
    %v150 = vlaneseq
    %v151 = vshrl.u32 %v150, 7
    %v152 = vsub.s32 1, %v151
    %v153 = vrot.slane %v144, %v152
    %v154 = vlaneseq
    %v155 = vshrl.u32 %v154, 7
    %v156 = vsub.s32 2, %v155
    %v157 = vrot.slane %v144, %v156
    %v158 = vlaneseq
    %v159 = vshrl.u32 %v158, 7
    %v160 = vsub.s32 3, %v159
    %v161 = vrot.slane %v144, %v160
    %v174 = vunpack.c.l.b16 %v104
    %v175 = vunpack.c.l.b16 %v105
    %v176 = vunpack.c.l.b16 %v106
    %v177 = vunpack.c.l.b16 %v107
    %v178 = vunpack.c.l.b16 %v108
    %v179 = vunpack.c.l.b16 %v109
    %v180 = vunpack.c.l.b16 %v110
    %v181 = vunpack.c.l.b16 %v111
    %v182 = vpack.c.b16 %v175, %v174
    %v183 = vpack.c.b16 %v177, %v176
    %v184 = vpack.c.b16 %v179, %v178
    %v185 = vpack.c.b16 %v181, %v180
    %v222 = vunpack.c.l.b16 %v112
    %v223 = vunpack.c.h.b16 %v112
    %v224 = vunpack.c.l.b16 %v113
    %v225 = vunpack.c.h.b16 %v113
    %v226 = vunpack.c.l.b16 %v114
    %v227 = vunpack.c.h.b16 %v114
    %v228 = vunpack.c.l.b16 %v115
    %v229 = vunpack.c.h.b16 %v115
    %v230 = vunpack.c.l.b16 %v116
    %v231 = vunpack.c.h.b16 %v116
    %v232 = vunpack.c.l.b16 %v117
    %v233 = vunpack.c.h.b16 %v117
    %v234 = vunpack.c.l.b16 %v118
    %v235 = vunpack.c.h.b16 %v118
    %v236 = vunpack.c.l.b16 %v119
    %v237 = vunpack.c.h.b16 %v119
    %v238 = vunpack.c.l.b16 %v120
    %v239 = vunpack.c.h.b16 %v120
    %v240 = vunpack.c.l.b16 %v121
    %v241 = vunpack.c.h.b16 %v121
    %v242 = vunpack.c.l.b16 %v122
    %v243 = vunpack.c.h.b16 %v122
    %v244 = vunpack.c.l.b16 %v123
    %v245 = vunpack.c.h.b16 %v123
    %v246 = vunpack.c.l.b16 %v124
    %v247 = vunpack.c.h.b16 %v124
    %v248 = vunpack.c.l.b16 %v125
    %v249 = vunpack.c.h.b16 %v125
    %v250 = vunpack.c.l.b16 %v126
    %v251 = vunpack.c.h.b16 %v126
    %v252 = vunpack.c.l.b16 %v127
    %v253 = vunpack.c.h.b16 %v127
    %v254 = vunpack.c.l.b16 %v128
    %v255 = vunpack.c.h.b16 %v128
    %v256 = vunpack.c.l.b16 %v129
    %v257 = vunpack.c.h.b16 %v129
    %v258 = vunpack.c.l.b16 %v130
    %v259 = vunpack.c.h.b16 %v130
    %v260 = vunpack.c.l.b16 %v131
    %v261 = vunpack.c.h.b16 %v131
    %v262 = vunpack.c.l.b16 %v132
    %v263 = vunpack.c.h.b16 %v132
    %v264 = vunpack.c.l.b16 %v133
    %v265 = vunpack.c.h.b16 %v133
    %v266 = vunpack.c.l.b16 %v134
    %v267 = vunpack.c.h.b16 %v134
    %v268 = vunpack.c.l.b16 %v135
    %v269 = vunpack.c.h.b16 %v135
    %v270 = vunpack.c.l.b16 %v136
    %v271 = vunpack.c.h.b16 %v136
    %v272 = vunpack.c.l.b16 %v137
    %v273 = vunpack.c.h.b16 %v137
    %v274 = vunpack.c.l.b16 %v138
    %v275 = vunpack.c.h.b16 %v138
    %v276 = vunpack.c.l.b16 %v139
    %v277 = vunpack.c.h.b16 %v139
    %v278 = vunpack.c.l.b16 %v140
    %v279 = vunpack.c.h.b16 %v140
    %v280 = vunpack.c.l.b16 %v141
    %v281 = vunpack.c.h.b16 %v141
    %v282 = vunpack.c.l.b16 %v142
    %v283 = vunpack.c.h.b16 %v142
    %v284 = vunpack.c.l.b16 %v143
    %v285 = vunpack.c.h.b16 %v143
    %v286 = vpack.c.b16 %v226, %v222
    %v287 = vpack.c.b16 %v227, %v223
    %v288 = vpack.c.b16 %v228, %v224
    %v289 = vpack.c.b16 %v229, %v225
    %v290 = vpack.c.b16 %v234, %v230
    %v291 = vpack.c.b16 %v235, %v231
    %v292 = vpack.c.b16 %v236, %v232
    %v293 = vpack.c.b16 %v237, %v233
    %v294 = vpack.c.b16 %v242, %v238
    %v295 = vpack.c.b16 %v243, %v239
    %v296 = vpack.c.b16 %v244, %v240
    %v297 = vpack.c.b16 %v245, %v241
    %v298 = vpack.c.b16 %v250, %v246
    %v299 = vpack.c.b16 %v251, %v247
    %v300 = vpack.c.b16 %v252, %v248
    %v301 = vpack.c.b16 %v253, %v249
    %v302 = vpack.c.b16 %v258, %v254
    %v303 = vpack.c.b16 %v259, %v255
    %v304 = vpack.c.b16 %v260, %v256
    %v305 = vpack.c.b16 %v261, %v257
    %v306 = vpack.c.b16 %v266, %v262
    %v307 = vpack.c.b16 %v267, %v263
    %v308 = vpack.c.b16 %v268, %v264
    %v309 = vpack.c.b16 %v269, %v265
    %v310 = vpack.c.b16 %v274, %v270
    %v311 = vpack.c.b16 %v275, %v271
    %v312 = vpack.c.b16 %v276, %v272
    %v313 = vpack.c.b16 %v277, %v273
    %v314 = vpack.c.b16 %v282, %v278
    %v315 = vpack.c.b16 %v283, %v279
    %v316 = vpack.c.b16 %v284, %v280
    %v317 = vpack.c.b16 %v285, %v281
    %350 = vmatprep.subr.bf16.mxu0 %v287
    %351 = vmatpush1.bf16.msra.mxu0 %v286
    %352 = vmatprep.subr.bf16.mxu0 %v291
    %353 = vmatpush1.bf16.msra.mxu0 %v290
    %354 = vmatprep.subr.bf16.mxu0 %v295
    %355 = vmatpush1.bf16.msra.mxu0 %v294
    %356 = vmatprep.subr.bf16.mxu0 %v299
    %357 = vmatpush1.bf16.msra.mxu0 %v298
    %358 = vmatprep.subr.bf16.mxu0 %v303
    %359 = vmatpush1.bf16.msra.mxu0 %v302
    %360 = vmatprep.subr.bf16.mxu0 %v307
    %361 = vmatpush1.bf16.msra.mxu0 %v306
    %362 = vmatprep.subr.bf16.mxu0 %v311
    %363 = vmatpush1.bf16.msra.mxu0 %v310
    %364 = vmatprep.subr.bf16.mxu0 %v315
    %365 = vmatpush1.bf16.msra.mxu0 %v314
    %366 = vmatprep.subr.bf16.mxu0 0
    %367 = vmatpush1.bf16.msra.mxu0 0
    %368 = vmatprep.subr.bf16.mxu0 0
    %369 = vmatpush1.bf16.msra.mxu0 0
    %370 = vmatprep.subr.bf16.mxu0 0
    %371 = vmatpush1.bf16.msra.mxu0 0
    %372 = vmatprep.subr.bf16.mxu0 0
    %373 = vmatpush1.bf16.msra.mxu0 0
    %374 = vmatprep.subr.bf16.mxu0 0
    %375 = vmatpush1.bf16.msra.mxu0 0
    %376 = vmatprep.subr.bf16.mxu0 0
    %377 = vmatpush1.bf16.msra.mxu0 0
    %378 = vmatprep.subr.bf16.mxu0 0
    %379 = vmatpush1.bf16.msra.mxu0 0
    %380 = vmatprep.subr.bf16.mxu0 0
    %381 = vmatpush1.bf16.msra.mxu0 0
    %382 = vmatprep.mubr.bf16.mxu0 0
    %383 = vmatmul.mubr.bf16.gmra.mrb[0].mxu0 %v182
    %v384 = vpop.f32.mrb[0].mxu0
    %v385 = vadd.f32 %v149, %v384
    %v386 = vpop.f32.mrb[0].mxu0
    %v387 = vadd.f32 %v153, %v386
    %v388 = vpop.f32.mrb[0].mxu0
    %v389 = vadd.f32 %v149, %v388
    %v390 = vpop.f32.mrb[0].mxu0
    %v391 = vadd.f32 %v153, %v390
    %392 = vmatprep.mubr.bf16.mxu0 0
    %393 = vmatmul.mubr.bf16.gmra.mrb[0].mxu0 %v183
    %v394 = vpop.f32.mrb[0].mxu0
    %v395 = vadd.f32 %v149, %v394
    %v396 = vpop.f32.mrb[0].mxu0
    %v397 = vadd.f32 %v153, %v396
    %v398 = vpop.f32.mrb[0].mxu0
    %v399 = vadd.f32 %v149, %v398
    %v400 = vpop.f32.mrb[0].mxu0
    %v401 = vadd.f32 %v153, %v400
    %402 = vmatprep.mubr.bf16.mxu0 0
    %403 = vmatmul.mubr.bf16.gmra.mrb[0].mxu0 %v184
    %v404 = vpop.f32.mrb[0].mxu0
    %v405 = vadd.f32 %v149, %v404
    %v406 = vpop.f32.mrb[0].mxu0
    %v407 = vadd.f32 %v153, %v406
    %v408 = vpop.f32.mrb[0].mxu0
    %v409 = vadd.f32 %v149, %v408
    %v410 = vpop.f32.mrb[0].mxu0
    %v411 = vadd.f32 %v153, %v410
    %412 = vmatprep.mubr.bf16.mxu0 0
    %413 = vmatmul.mubr.bf16.gmra.mrb[0].mxu0 %v185
    %v414 = vpop.f32.mrb[0].mxu0
    %v415 = vadd.f32 %v149, %v414
    %v416 = vpop.f32.mrb[0].mxu0
    %v417 = vadd.f32 %v153, %v416
    %v418 = vpop.f32.mrb[0].mxu0
    %v419 = vadd.f32 %v149, %v418
    %v420 = vpop.f32.mrb[0].mxu0
    %v421 = vadd.f32 %v153, %v420
    %422 = vdwg.mxu0
    %423 = vmatprep.subr.bf16.mxu0 %v289
    %424 = vmatpush1.bf16.msra.mxu0 %v288
    %425 = vmatprep.subr.bf16.mxu0 %v293
    %426 = vmatpush1.bf16.msra.mxu0 %v292
    %427 = vmatprep.subr.bf16.mxu0 %v297
    %428 = vmatpush1.bf16.msra.mxu0 %v296
    %429 = vmatprep.subr.bf16.mxu0 %v301
    %430 = vmatpush1.bf16.msra.mxu0 %v300
    %431 = vmatprep.subr.bf16.mxu0 %v305
    %432 = vmatpush1.bf16.msra.mxu0 %v304
    %433 = vmatprep.subr.bf16.mxu0 %v309
    %434 = vmatpush1.bf16.msra.mxu0 %v308
    %435 = vmatprep.subr.bf16.mxu0 %v313
    %436 = vmatpush1.bf16.msra.mxu0 %v312
    %437 = vmatprep.subr.bf16.mxu0 %v317
    %438 = vmatpush1.bf16.msra.mxu0 %v316
    %439 = vmatprep.subr.bf16.mxu0 0
    %440 = vmatpush1.bf16.msra.mxu0 0
    %441 = vmatprep.subr.bf16.mxu0 0
    %442 = vmatpush1.bf16.msra.mxu0 0
    %443 = vmatprep.subr.bf16.mxu0 0
    %444 = vmatpush1.bf16.msra.mxu0 0
    %445 = vmatprep.subr.bf16.mxu0 0
    %446 = vmatpush1.bf16.msra.mxu0 0
    %447 = vmatprep.subr.bf16.mxu0 0
    %448 = vmatpush1.bf16.msra.mxu0 0
    %449 = vmatprep.subr.bf16.mxu0 0
    %450 = vmatpush1.bf16.msra.mxu0 0
    %451 = vmatprep.subr.bf16.mxu0 0
    %452 = vmatpush1.bf16.msra.mxu0 0
    %453 = vmatprep.subr.bf16.mxu0 0
    %454 = vmatpush1.bf16.msra.mxu0 0
    %455 = vmatprep.mubr.bf16.mxu0 0
    %456 = vmatmul.mubr.bf16.gmra.mrb[0].mxu0 %v182
    %v457 = vpop.f32.mrb[0].mxu0
    %v458 = vadd.f32 %v157, %v457
    %v459 = vpop.f32.mrb[0].mxu0
    %v460 = vadd.f32 %v161, %v459
    %v461 = vpop.f32.mrb[0].mxu0
    %v462 = vadd.f32 %v157, %v461
    %v463 = vpop.f32.mrb[0].mxu0
    %v464 = vadd.f32 %v161, %v463
    %465 = vmatprep.mubr.bf16.mxu0 0
    %466 = vmatmul.mubr.bf16.gmra.mrb[0].mxu0 %v183
    %v467 = vpop.f32.mrb[0].mxu0
    %v468 = vadd.f32 %v157, %v467
    %v469 = vpop.f32.mrb[0].mxu0
    %v470 = vadd.f32 %v161, %v469
    %v471 = vpop.f32.mrb[0].mxu0
    %v472 = vadd.f32 %v157, %v471
    %v473 = vpop.f32.mrb[0].mxu0
    %v474 = vadd.f32 %v161, %v473
    %475 = vmatprep.mubr.bf16.mxu0 0
    %476 = vmatmul.mubr.bf16.gmra.mrb[0].mxu0 %v184
    %v477 = vpop.f32.mrb[0].mxu0
    %v478 = vadd.f32 %v157, %v477
    %v479 = vpop.f32.mrb[0].mxu0
    %v480 = vadd.f32 %v161, %v479
    %v481 = vpop.f32.mrb[0].mxu0
    %v482 = vadd.f32 %v157, %v481
    %v483 = vpop.f32.mrb[0].mxu0
    %v484 = vadd.f32 %v161, %v483
    %485 = vmatprep.mubr.bf16.mxu0 0
    %486 = vmatmul.mubr.bf16.gmra.mrb[0].mxu0 %v185
    %v487 = vpop.f32.mrb[0].mxu0
    %v488 = vadd.f32 %v157, %v487
    %v489 = vpop.f32.mrb[0].mxu0
    %v490 = vadd.f32 %v161, %v489
    %v491 = vpop.f32.mrb[0].mxu0
    %v492 = vadd.f32 %v157, %v491
    %v493 = vpop.f32.mrb[0].mxu0
    %v494 = vadd.f32 %v161, %v493
    %495 = vdwg.mxu0
    %496 = vst [vmem:[#allocation4] sm:$0xff] %v385
    %497 = vst [vmem:[#allocation4 + $0x8] sm:$0xff] %v387
    %498 = vst [vmem:[#allocation4 + $0x10] sm:$0xff] %v458
    %499 = vst [vmem:[#allocation4 + $0x18] sm:$0xff] %v460
    %500 = vst [vmem:[#allocation4 + $0x20] sm:$0xff] %v389
    %501 = vst [vmem:[#allocation4 + $0x28] sm:$0xff] %v391
    %502 = vst [vmem:[#allocation4 + $0x30] sm:$0xff] %v462
    %503 = vst [vmem:[#allocation4 + $0x38] sm:$0xff] %v464
    %504 = vst [vmem:[#allocation4 + $0x40] sm:$0xff] %v395
    %505 = vst [vmem:[#allocation4 + $0x48] sm:$0xff] %v397
    %506 = vst [vmem:[#allocation4 + $0x50] sm:$0xff] %v468
    %507 = vst [vmem:[#allocation4 + $0x58] sm:$0xff] %v470
    %508 = vst [vmem:[#allocation4 + $0x60] sm:$0xff] %v399
    %509 = vst [vmem:[#allocation4 + $0x68] sm:$0xff] %v401
    %510 = vst [vmem:[#allocation4 + $0x70] sm:$0xff] %v472
    %511 = vst [vmem:[#allocation4 + $0x78] sm:$0xff] %v474
    %512 = vst [vmem:[#allocation4 + $0x80] sm:$0xff] %v405
    %513 = vst [vmem:[#allocation4 + $0x88] sm:$0xff] %v407
    %514 = vst [vmem:[#allocation4 + $0x90] sm:$0xff] %v478
    %515 = vst [vmem:[#allocation4 + $0x98] sm:$0xff] %v480
    %516 = vst [vmem:[#allocation4 + $0xa0] sm:$0xff] %v409
    %517 = vst [vmem:[#allocation4 + $0xa8] sm:$0xff] %v411
    %518 = vst [vmem:[#allocation4 + $0xb0] sm:$0xff] %v482
    %519 = vst [vmem:[#allocation4 + $0xb8] sm:$0xff] %v484
    %520 = vst [vmem:[#allocation4 + $0xc0] sm:$0xff] %v415
    %521 = vst [vmem:[#allocation4 + $0xc8] sm:$0xff] %v417
    %522 = vst [vmem:[#allocation4 + $0xd0] sm:$0xff] %v488
    %523 = vst [vmem:[#allocation4 + $0xd8] sm:$0xff] %v490
    %524 = vst [vmem:[#allocation4 + $0xe0] sm:$0xff] %v419
    %525 = vst [vmem:[#allocation4 + $0xe8] sm:$0xff] %v421
    %526 = vst [vmem:[#allocation4 + $0xf0] sm:$0xff] %v492
    %527 = vst [vmem:[#allocation4 + $0xf8] sm:$0xff] %v494
    %v528 = vld [vmem:[#allocation11] sm:$0xff]
    %v529 = vld [vmem:[#allocation11 + $0x8] sm:$0xff]
    %v530 = vld [vmem:[#allocation11 + $0x10] sm:$0xff]
    %v531 = vld [vmem:[#allocation11 + $0x18] sm:$0xff]
    %v532 = vld [vmem:[#allocation11 + $0x20] sm:$0xff]
    %v533 = vld [vmem:[#allocation11 + $0x28] sm:$0xff]
    %v534 = vld [vmem:[#allocation11 + $0x30] sm:$0xff]
    %v535 = vld [vmem:[#allocation11 + $0x38] sm:$0xff]
    %v536 = vld [vmem:[#allocation11 + $0x40] sm:$0xff]
    %v537 = vld [vmem:[#allocation11 + $0x48] sm:$0xff]
    %v538 = vld [vmem:[#allocation11 + $0x50] sm:$0xff]
    %v539 = vld [vmem:[#allocation11 + $0x58] sm:$0xff]
    %v540 = vld [vmem:[#allocation11 + $0x60] sm:$0xff]
    %v541 = vld [vmem:[#allocation11 + $0x68] sm:$0xff]
    %v542 = vld [vmem:[#allocation11 + $0x70] sm:$0xff]
    %v543 = vld [vmem:[#allocation11 + $0x78] sm:$0xff]
    %v544 = vld [vmem:[#allocation11 + $0x80] sm:$0xff]
    %v545 = vld [vmem:[#allocation11 + $0x88] sm:$0xff]
    %v546 = vld [vmem:[#allocation11 + $0x90] sm:$0xff]
    %v547 = vld [vmem:[#allocation11 + $0x98] sm:$0xff]
    %v548 = vld [vmem:[#allocation11 + $0xa0] sm:$0xff]
    %v549 = vld [vmem:[#allocation11 + $0xa8] sm:$0xff]
    %v550 = vld [vmem:[#allocation11 + $0xb0] sm:$0xff]
    %v551 = vld [vmem:[#allocation11 + $0xb8] sm:$0xff]
    %v552 = vld [vmem:[#allocation11 + $0xc0] sm:$0xff]
    %v553 = vld [vmem:[#allocation11 + $0xc8] sm:$0xff]
    %v554 = vld [vmem:[#allocation11 + $0xd0] sm:$0xff]
    %v555 = vld [vmem:[#allocation11 + $0xd8] sm:$0xff]
    %v556 = vld [vmem:[#allocation11 + $0xe0] sm:$0xff]
    %v557 = vld [vmem:[#allocation11 + $0xe8] sm:$0xff]
    %v558 = vld [vmem:[#allocation11 + $0xf0] sm:$0xff]
    %v559 = vld [vmem:[#allocation11 + $0xf8] sm:$0xff]
    %v560 = vld [vmem:[#allocation2] sm:$0xff]
    %v561 = vld [vmem:[#allocation3] sm:$0xff]
    %v562 = vld [vmem:[#allocation4] sm:$0xff]
    %v563 = vld [vmem:[#allocation4 + $0x8] sm:$0xff]
    %v564 = vld [vmem:[#allocation4 + $0x10] sm:$0xff]
    %v565 = vld [vmem:[#allocation4 + $0x18] sm:$0xff]
    %v566 = vpack.c.bf16 %v560, %v560
    %v599 = vunpack.c.l.b16 %v528
    %v600 = vunpack.c.h.b16 %v528
    %v601 = vunpack.c.l.b16 %v529
    %v602 = vunpack.c.h.b16 %v529
    %v603 = vunpack.c.l.b16 %v530
    %v604 = vunpack.c.h.b16 %v530
    %v605 = vunpack.c.l.b16 %v531
    %v606 = vunpack.c.h.b16 %v531
    %v607 = vunpack.c.l.b16 %v532
    %v608 = vunpack.c.h.b16 %v532
    %v609 = vunpack.c.l.b16 %v533
    %v610 = vunpack.c.h.b16 %v533
    %v611 = vunpack.c.l.b16 %v534
    %v612 = vunpack.c.h.b16 %v534
    %v613 = vunpack.c.l.b16 %v535
    %v614 = vunpack.c.h.b16 %v535
    %v615 = vunpack.c.l.b16 %v536
    %v616 = vunpack.c.h.b16 %v536
    %v617 = vunpack.c.l.b16 %v537
    %v618 = vunpack.c.h.b16 %v537
    %v619 = vunpack.c.l.b16 %v538
    %v620 = vunpack.c.h.b16 %v538
    %v621 = vunpack.c.l.b16 %v539
    %v622 = vunpack.c.h.b16 %v539
    %v623 = vunpack.c.l.b16 %v540
    %v624 = vunpack.c.h.b16 %v540
    %v625 = vunpack.c.l.b16 %v541
    %v626 = vunpack.c.h.b16 %v541
    %v627 = vunpack.c.l.b16 %v542
    %v628 = vunpack.c.h.b16 %v542
    %v629 = vunpack.c.l.b16 %v543
    %v630 = vunpack.c.h.b16 %v543
    %v631 = vunpack.c.l.b16 %v544
    %v632 = vunpack.c.h.b16 %v544
    %v633 = vunpack.c.l.b16 %v545
    %v634 = vunpack.c.h.b16 %v545
    %v635 = vunpack.c.l.b16 %v546
    %v636 = vunpack.c.h.b16 %v546
    %v637 = vunpack.c.l.b16 %v547
    %v638 = vunpack.c.h.b16 %v547
    %v639 = vunpack.c.l.b16 %v548
    %v640 = vunpack.c.h.b16 %v548
    %v641 = vunpack.c.l.b16 %v549
    %v642 = vunpack.c.h.b16 %v549
    %v643 = vunpack.c.l.b16 %v550
    %v644 = vunpack.c.h.b16 %v550
    %v645 = vunpack.c.l.b16 %v551
    %v646 = vunpack.c.h.b16 %v551
    %v647 = vunpack.c.l.b16 %v552
    %v648 = vunpack.c.h.b16 %v552
    %v649 = vunpack.c.l.b16 %v553
    %v650 = vunpack.c.h.b16 %v553
    %v651 = vunpack.c.l.b16 %v554
    %v652 = vunpack.c.h.b16 %v554
    %v653 = vunpack.c.l.b16 %v555
    %v654 = vunpack.c.h.b16 %v555
    %v655 = vunpack.c.l.b16 %v556
    %v656 = vunpack.c.h.b16 %v556
    %v657 = vunpack.c.l.b16 %v557
    %v658 = vunpack.c.h.b16 %v557
    %v659 = vunpack.c.l.b16 %v558
    %v660 = vunpack.c.h.b16 %v558
    %v661 = vunpack.c.l.b16 %v559
    %v662 = vunpack.c.h.b16 %v559
    %v663 = vpack.c.b16 %v603, %v599
    %v664 = vpack.c.b16 %v604, %v600
    %v665 = vpack.c.b16 %v605, %v601
    %v666 = vpack.c.b16 %v606, %v602
    %v667 = vpack.c.b16 %v611, %v607
    %v668 = vpack.c.b16 %v612, %v608
    %v669 = vpack.c.b16 %v613, %v609
    %v670 = vpack.c.b16 %v614, %v610
    %v671 = vpack.c.b16 %v619, %v615
    %v672 = vpack.c.b16 %v620, %v616
    %v673 = vpack.c.b16 %v621, %v617
    %v674 = vpack.c.b16 %v622, %v618
    %v675 = vpack.c.b16 %v627, %v623
    %v676 = vpack.c.b16 %v628, %v624
    %v677 = vpack.c.b16 %v629, %v625
    %v678 = vpack.c.b16 %v630, %v626
    %v679 = vpack.c.b16 %v635, %v631
    %v680 = vpack.c.b16 %v636, %v632
    %v681 = vpack.c.b16 %v637, %v633
    %v682 = vpack.c.b16 %v638, %v634
    %v683 = vpack.c.b16 %v643, %v639
    %v684 = vpack.c.b16 %v644, %v640
    %v685 = vpack.c.b16 %v645, %v641
    %v686 = vpack.c.b16 %v646, %v642
    %v687 = vpack.c.b16 %v651, %v647
    %v688 = vpack.c.b16 %v652, %v648
    %v689 = vpack.c.b16 %v653, %v649
    %v690 = vpack.c.b16 %v654, %v650
    %v691 = vpack.c.b16 %v659, %v655
    %v692 = vpack.c.b16 %v660, %v656
    %v693 = vpack.c.b16 %v661, %v657
    %v694 = vpack.c.b16 %v662, %v658
    %727 = vmatprep.subr.bf16.mxu0 %v664
    %728 = vmatpush1.bf16.msra.mxu0 %v663
    %729 = vmatprep.subr.bf16.mxu0 %v668
    %730 = vmatpush1.bf16.msra.mxu0 %v667
    %731 = vmatprep.subr.bf16.mxu0 %v672
    %732 = vmatpush1.bf16.msra.mxu0 %v671
    %733 = vmatprep.subr.bf16.mxu0 %v676
    %734 = vmatpush1.bf16.msra.mxu0 %v675
    %735 = vmatprep.subr.bf16.mxu0 %v680
    %736 = vmatpush1.bf16.msra.mxu0 %v679
    %737 = vmatprep.subr.bf16.mxu0 %v684
    %738 = vmatpush1.bf16.msra.mxu0 %v683
    %739 = vmatprep.subr.bf16.mxu0 %v688
    %740 = vmatpush1.bf16.msra.mxu0 %v687
    %741 = vmatprep.subr.bf16.mxu0 %v692
    %742 = vmatpush1.bf16.msra.mxu0 %v691
    %743 = vmatprep.subr.bf16.mxu0 0
    %744 = vmatpush1.bf16.msra.mxu0 0
    %745 = vmatprep.subr.bf16.mxu0 0
    %746 = vmatpush1.bf16.msra.mxu0 0
    %747 = vmatprep.subr.bf16.mxu0 0
    %748 = vmatpush1.bf16.msra.mxu0 0
    %749 = vmatprep.subr.bf16.mxu0 0
    %750 = vmatpush1.bf16.msra.mxu0 0
    %751 = vmatprep.subr.bf16.mxu0 0
    %752 = vmatpush1.bf16.msra.mxu0 0
    %753 = vmatprep.subr.bf16.mxu0 0
    %754 = vmatpush1.bf16.msra.mxu0 0
    %755 = vmatprep.subr.bf16.mxu0 0
    %756 = vmatpush1.bf16.msra.mxu0 0
    %757 = vmatprep.subr.bf16.mxu0 0
    %758 = vmatpush1.bf16.msra.mxu0 0
    %759 = vmatprep.mubr.bf16.mxu0 0
    %760 = vmatmul.mubr.bf16.gmra.mrb[0].mxu0 %v566
    %v761 = vpop.f32.mrb[0].mxu0
    %v762 = vadd.f32 0.0, %v761
    %v763 = vpop.f32.mrb[0].mxu0
    %v764 = vadd.f32 0.0, %v763
    %v765 = vpop.f32.mrb[0].mxu0
    %v766 = vpop.f32.mrb[0].mxu0
    %767 = vdwg.mxu0
    %768 = vmatprep.subr.bf16.mxu0 %v666
    %769 = vmatpush1.bf16.msra.mxu0 %v665
    %770 = vmatprep.subr.bf16.mxu0 %v670
    %771 = vmatpush1.bf16.msra.mxu0 %v669
    %772 = vmatprep.subr.bf16.mxu0 %v674
    %773 = vmatpush1.bf16.msra.mxu0 %v673
    %774 = vmatprep.subr.bf16.mxu0 %v678
    %775 = vmatpush1.bf16.msra.mxu0 %v677
    %776 = vmatprep.subr.bf16.mxu0 %v682
    %777 = vmatpush1.bf16.msra.mxu0 %v681
    %778 = vmatprep.subr.bf16.mxu0 %v686
    %779 = vmatpush1.bf16.msra.mxu0 %v685
    %780 = vmatprep.subr.bf16.mxu0 %v690
    %781 = vmatpush1.bf16.msra.mxu0 %v689
    %782 = vmatprep.subr.bf16.mxu0 %v694
    %783 = vmatpush1.bf16.msra.mxu0 %v693
    %784 = vmatprep.subr.bf16.mxu0 0
    %785 = vmatpush1.bf16.msra.mxu0 0
    %786 = vmatprep.subr.bf16.mxu0 0
    %787 = vmatpush1.bf16.msra.mxu0 0
    %788 = vmatprep.subr.bf16.mxu0 0
    %789 = vmatpush1.bf16.msra.mxu0 0
    %790 = vmatprep.subr.bf16.mxu0 0
    %791 = vmatpush1.bf16.msra.mxu0 0
    %792 = vmatprep.subr.bf16.mxu0 0
    %793 = vmatpush1.bf16.msra.mxu0 0
    %794 = vmatprep.subr.bf16.mxu0 0
    %795 = vmatpush1.bf16.msra.mxu0 0
    %796 = vmatprep.subr.bf16.mxu0 0
    %797 = vmatpush1.bf16.msra.mxu0 0
    %798 = vmatprep.subr.bf16.mxu0 0
    %799 = vmatpush1.bf16.msra.mxu0 0
    %800 = vmatprep.mubr.bf16.mxu0 0
    %801 = vmatmul.mubr.bf16.gmra.mrb[0].mxu0 %v566
    %v802 = vpop.f32.mrb[0].mxu0
    %v803 = vadd.f32 0.0, %v802
    %v804 = vpop.f32.mrb[0].mxu0
    %v805 = vadd.f32 0.0, %v804
    %v806 = vpop.f32.mrb[0].mxu0
    %v807 = vpop.f32.mrb[0].mxu0
    %808 = vdwg.mxu0
    %v809 = vadd.f32 %v562, %v762
    %v810 = vadd.f32 %v563, %v764
    %v811 = vadd.f32 %v564, %v803
    %v812 = vadd.f32 %v565, %v805
    %v813 = vsub.f32 0.0, %v809
    %v814 = vmul.f32 %v813, 1.442695
    %v815 = vpow.pop %v814
    %v816 = vadd.f32 %v815, 1.0
    %v817 = vrcp.pop %v816
    %v818 = vsub.f32 0.0, %v810
    %v819 = vmul.f32 %v818, 1.442695
    %v820 = vpow.pop %v819
    %v821 = vadd.f32 %v820, 1.0
    %v822 = vrcp.pop %v821
    %v823 = vtanh.pop %v811
    %v824 = vsub.f32 0.0, %v812
    %v825 = vmul.f32 %v824, 1.442695
    %v826 = vpow.pop %v825
    %v827 = vadd.f32 %v826, 1.0
    %v828 = vrcp.pop %v827
    %v829 = vmul.f32 %v822, %v561
    %v830 = vmul.f32 %v817, %v823
    %v831 = vadd.f32 %v829, %v830
    %v832 = vtanh.pop %v831
    %v833 = vmul.f32 %v828, %v832
    %v834 = vpack.c.bf16 %v833, %v833
    %835 = vst [vmem:[#allocation5] sm:$0xf] %v834
    %s836 = scalar_lea.vmem [#allocation4], 32
    %v837 = vld [vmem:[%s836] sm:$0xff]
    %v838 = vld [vmem:[%s836 + $0x8] sm:$0xff]
    %v839 = vld [vmem:[%s836 + $0x10] sm:$0xff]
    %v840 = vld [vmem:[%s836 + $0x18] sm:$0xff]
    %841 = vmatprep.subr.bf16.mxu0 %v664
    %842 = vmatpush1.bf16.msra.mxu0 %v663
    %843 = vmatprep.subr.bf16.mxu0 %v668
    %844 = vmatpush1.bf16.msra.mxu0 %v667
    %845 = vmatprep.subr.bf16.mxu0 %v672
    %846 = vmatpush1.bf16.msra.mxu0 %v671
    %847 = vmatprep.subr.bf16.mxu0 %v676
    %848 = vmatpush1.bf16.msra.mxu0 %v675
    %849 = vmatprep.subr.bf16.mxu0 %v680
    %850 = vmatpush1.bf16.msra.mxu0 %v679
    %851 = vmatprep.subr.bf16.mxu0 %v684
    %852 = vmatpush1.bf16.msra.mxu0 %v683
    %853 = vmatprep.subr.bf16.mxu0 %v688
    %854 = vmatpush1.bf16.msra.mxu0 %v687
    %855 = vmatprep.subr.bf16.mxu0 %v692
    %856 = vmatpush1.bf16.msra.mxu0 %v691
    %857 = vmatprep.subr.bf16.mxu0 0
    %858 = vmatpush1.bf16.msra.mxu0 0
    %859 = vmatprep.subr.bf16.mxu0 0
    %860 = vmatpush1.bf16.msra.mxu0 0
    %861 = vmatprep.subr.bf16.mxu0 0
    %862 = vmatpush1.bf16.msra.mxu0 0
    %863 = vmatprep.subr.bf16.mxu0 0
    %864 = vmatpush1.bf16.msra.mxu0 0
    %865 = vmatprep.subr.bf16.mxu0 0
    %866 = vmatpush1.bf16.msra.mxu0 0
    %867 = vmatprep.subr.bf16.mxu0 0
    %868 = vmatpush1.bf16.msra.mxu0 0
    %869 = vmatprep.subr.bf16.mxu0 0
    %870 = vmatpush1.bf16.msra.mxu0 0
    %871 = vmatprep.subr.bf16.mxu0 0
    %872 = vmatpush1.bf16.msra.mxu0 0
    %873 = vmatprep.mubr.bf16.mxu0 0
    %874 = vmatmul.mubr.bf16.gmra.mrb[0].mxu0 %v834
    %v875 = vpop.f32.mrb[0].mxu0
    %v876 = vadd.f32 0.0, %v875
    %v877 = vpop.f32.mrb[0].mxu0
    %v878 = vadd.f32 0.0, %v877
    %v879 = vpop.f32.mrb[0].mxu0
    %v880 = vpop.f32.mrb[0].mxu0
    %881 = vdwg.mxu0
    %882 = vmatprep.subr.bf16.mxu0 %v666
    %883 = vmatpush1.bf16.msra.mxu0 %v665
    %884 = vmatprep.subr.bf16.mxu0 %v670
    %885 = vmatpush1.bf16.msra.mxu0 %v669
    %886 = vmatprep.subr.bf16.mxu0 %v674
    %887 = vmatpush1.bf16.msra.mxu0 %v673
    %888 = vmatprep.subr.bf16.mxu0 %v678
    %889 = vmatpush1.bf16.msra.mxu0 %v677
    %890 = vmatprep.subr.bf16.mxu0 %v682
    %891 = vmatpush1.bf16.msra.mxu0 %v681
    %892 = vmatprep.subr.bf16.mxu0 %v686
    %893 = vmatpush1.bf16.msra.mxu0 %v685
    %894 = vmatprep.subr.bf16.mxu0 %v690
    %895 = vmatpush1.bf16.msra.mxu0 %v689
    %896 = vmatprep.subr.bf16.mxu0 %v694
    %897 = vmatpush1.bf16.msra.mxu0 %v693
    %898 = vmatprep.subr.bf16.mxu0 0
    %899 = vmatpush1.bf16.msra.mxu0 0
    %900 = vmatprep.subr.bf16.mxu0 0
    %901 = vmatpush1.bf16.msra.mxu0 0
    %902 = vmatprep.subr.bf16.mxu0 0
    %903 = vmatpush1.bf16.msra.mxu0 0
    %904 = vmatprep.subr.bf16.mxu0 0
    %905 = vmatpush1.bf16.msra.mxu0 0
    %906 = vmatprep.subr.bf16.mxu0 0
    %907 = vmatpush1.bf16.msra.mxu0 0
    %908 = vmatprep.subr.bf16.mxu0 0
    %909 = vmatpush1.bf16.msra.mxu0 0
    %910 = vmatprep.subr.bf16.mxu0 0
    %911 = vmatpush1.bf16.msra.mxu0 0
    %912 = vmatprep.subr.bf16.mxu0 0
    %913 = vmatpush1.bf16.msra.mxu0 0
    %914 = vmatprep.mubr.bf16.mxu0 0
    %915 = vmatmul.mubr.bf16.gmra.mrb[0].mxu0 %v834
    %v916 = vpop.f32.mrb[0].mxu0
    %v917 = vadd.f32 0.0, %v916
    %v918 = vpop.f32.mrb[0].mxu0
    %v919 = vadd.f32 0.0, %v918
    %v920 = vpop.f32.mrb[0].mxu0
    %v921 = vpop.f32.mrb[0].mxu0
    %922 = vdwg.mxu0
    %v923 = vadd.f32 %v837, %v876
    %v924 = vadd.f32 %v838, %v878
    %v925 = vadd.f32 %v839, %v917
    %v926 = vadd.f32 %v840, %v919
    %v927 = vsub.f32 0.0, %v923
    %v928 = vmul.f32 %v927, 1.442695
    %v929 = vpow.pop %v928
    %v930 = vadd.f32 %v929, 1.0
    %v931 = vrcp.pop %v930
    %v932 = vsub.f32 0.0, %v924
    %v933 = vmul.f32 %v932, 1.442695
    %v934 = vpow.pop %v933
    %v935 = vadd.f32 %v934, 1.0
    %v936 = vrcp.pop %v935
    %v937 = vtanh.pop %v925
    %v938 = vsub.f32 0.0, %v926
    %v939 = vmul.f32 %v938, 1.442695
    %v940 = vpow.pop %v939
    %v941 = vadd.f32 %v940, 1.0
    %v942 = vrcp.pop %v941
    %v943 = vmul.f32 %v936, %v831
    %v944 = vmul.f32 %v931, %v937
    %v945 = vadd.f32 %v943, %v944
    %v946 = vtanh.pop %v945
    %v947 = vmul.f32 %v942, %v946
    %v948 = vpack.c.bf16 %v947, %v947
    %s949 = scalar_lea.vmem [#allocation5], 4
    %950 = vst [vmem:[%s949] sm:$0xf] %v948
    %s951 = scalar_lea.vmem [#allocation4], 64
    %v952 = vld [vmem:[%s951] sm:$0xff]
    %v953 = vld [vmem:[%s951 + $0x8] sm:$0xff]
    %v954 = vld [vmem:[%s951 + $0x10] sm:$0xff]
    %v955 = vld [vmem:[%s951 + $0x18] sm:$0xff]
    %956 = vmatprep.subr.bf16.mxu0 %v664
    %957 = vmatpush1.bf16.msra.mxu0 %v663
    %958 = vmatprep.subr.bf16.mxu0 %v668
    %959 = vmatpush1.bf16.msra.mxu0 %v667
    %960 = vmatprep.subr.bf16.mxu0 %v672
    %961 = vmatpush1.bf16.msra.mxu0 %v671
    %962 = vmatprep.subr.bf16.mxu0 %v676
    %963 = vmatpush1.bf16.msra.mxu0 %v675
    %964 = vmatprep.subr.bf16.mxu0 %v680
    %965 = vmatpush1.bf16.msra.mxu0 %v679
    %966 = vmatprep.subr.bf16.mxu0 %v684
    %967 = vmatpush1.bf16.msra.mxu0 %v683
    %968 = vmatprep.subr.bf16.mxu0 %v688
    %969 = vmatpush1.bf16.msra.mxu0 %v687
    %970 = vmatprep.subr.bf16.mxu0 %v692
    %971 = vmatpush1.bf16.msra.mxu0 %v691
    %972 = vmatprep.subr.bf16.mxu0 0
    %973 = vmatpush1.bf16.msra.mxu0 0
    %974 = vmatprep.subr.bf16.mxu0 0
    %975 = vmatpush1.bf16.msra.mxu0 0
    %976 = vmatprep.subr.bf16.mxu0 0
    %977 = vmatpush1.bf16.msra.mxu0 0
    %978 = vmatprep.subr.bf16.mxu0 0
    %979 = vmatpush1.bf16.msra.mxu0 0
    %980 = vmatprep.subr.bf16.mxu0 0
    %981 = vmatpush1.bf16.msra.mxu0 0
    %982 = vmatprep.subr.bf16.mxu0 0
    %983 = vmatpush1.bf16.msra.mxu0 0
    %984 = vmatprep.subr.bf16.mxu0 0
    %985 = vmatpush1.bf16.msra.mxu0 0
    %986 = vmatprep.subr.bf16.mxu0 0
    %987 = vmatpush1.bf16.msra.mxu0 0
    %988 = vmatprep.mubr.bf16.mxu0 0
    %989 = vmatmul.mubr.bf16.gmra.mrb[0].mxu0 %v948
    %v990 = vpop.f32.mrb[0].mxu0
    %v991 = vadd.f32 0.0, %v990
    %v992 = vpop.f32.mrb[0].mxu0
    %v993 = vadd.f32 0.0, %v992
    %v994 = vpop.f32.mrb[0].mxu0
    %v995 = vpop.f32.mrb[0].mxu0
    %996 = vdwg.mxu0
    %997 = vmatprep.subr.bf16.mxu0 %v666
    %998 = vmatpush1.bf16.msra.mxu0 %v665
    %999 = vmatprep.subr.bf16.mxu0 %v670
    %1000 = vmatpush1.bf16.msra.mxu0 %v669
    %1001 = vmatprep.subr.bf16.mxu0 %v674
    %1002 = vmatpush1.bf16.msra.mxu0 %v673
    %1003 = vmatprep.subr.bf16.mxu0 %v678
    %1004 = vmatpush1.bf16.msra.mxu0 %v677
    %1005 = vmatprep.subr.bf16.mxu0 %v682
    %1006 = vmatpush1.bf16.msra.mxu0 %v681
    %1007 = vmatprep.subr.bf16.mxu0 %v686
    %1008 = vmatpush1.bf16.msra.mxu0 %v685
    %1009 = vmatprep.subr.bf16.mxu0 %v690
    %1010 = vmatpush1.bf16.msra.mxu0 %v689
    %1011 = vmatprep.subr.bf16.mxu0 %v694
    %1012 = vmatpush1.bf16.msra.mxu0 %v693
    %1013 = vmatprep.subr.bf16.mxu0 0
    %1014 = vmatpush1.bf16.msra.mxu0 0
    %1015 = vmatprep.subr.bf16.mxu0 0
    %1016 = vmatpush1.bf16.msra.mxu0 0
    %1017 = vmatprep.subr.bf16.mxu0 0
    %1018 = vmatpush1.bf16.msra.mxu0 0
    %1019 = vmatprep.subr.bf16.mxu0 0
    %1020 = vmatpush1.bf16.msra.mxu0 0
    %1021 = vmatprep.subr.bf16.mxu0 0
    %1022 = vmatpush1.bf16.msra.mxu0 0
    %1023 = vmatprep.subr.bf16.mxu0 0
    %1024 = vmatpush1.bf16.msra.mxu0 0
    %1025 = vmatprep.subr.bf16.mxu0 0
    %1026 = vmatpush1.bf16.msra.mxu0 0
    %1027 = vmatprep.subr.bf16.mxu0 0
    %1028 = vmatpush1.bf16.msra.mxu0 0
    %1029 = vmatprep.mubr.bf16.mxu0 0
    %1030 = vmatmul.mubr.bf16.gmra.mrb[0].mxu0 %v948
    %v1031 = vpop.f32.mrb[0].mxu0
    %v1032 = vadd.f32 0.0, %v1031
    %v1033 = vpop.f32.mrb[0].mxu0
    %v1034 = vadd.f32 0.0, %v1033
    %v1035 = vpop.f32.mrb[0].mxu0
    %v1036 = vpop.f32.mrb[0].mxu0
    %1037 = vdwg.mxu0
    %v1038 = vadd.f32 %v952, %v991
    %v1039 = vadd.f32 %v953, %v993
    %v1040 = vadd.f32 %v954, %v1032
    %v1041 = vadd.f32 %v955, %v1034
    %v1042 = vsub.f32 0.0, %v1038
    %v1043 = vmul.f32 %v1042, 1.442695
    %v1044 = vpow.pop %v1043
    %v1045 = vadd.f32 %v1044, 1.0
    %v1046 = vrcp.pop %v1045
    %v1047 = vsub.f32 0.0, %v1039
    %v1048 = vmul.f32 %v1047, 1.442695
    %v1049 = vpow.pop %v1048
    %v1050 = vadd.f32 %v1049, 1.0
    %v1051 = vrcp.pop %v1050
    %v1052 = vtanh.pop %v1040
    %v1053 = vsub.f32 0.0, %v1041
    %v1054 = vmul.f32 %v1053, 1.442695
    %v1055 = vpow.pop %v1054
    %v1056 = vadd.f32 %v1055, 1.0
    %v1057 = vrcp.pop %v1056
    %v1058 = vmul.f32 %v1051, %v945
    %v1059 = vmul.f32 %v1046, %v1052
    %v1060 = vadd.f32 %v1058, %v1059
    %v1061 = vtanh.pop %v1060
    %v1062 = vmul.f32 %v1057, %v1061
    %v1063 = vpack.c.bf16 %v1062, %v1062
    %s1064 = scalar_lea.vmem [#allocation5], 8
    %1065 = vst [vmem:[%s1064] sm:$0xf] %v1063
    %s1066 = scalar_lea.vmem [#allocation4], 96
    %v1067 = vld [vmem:[%s1066] sm:$0xff]
    %v1068 = vld [vmem:[%s1066 + $0x8] sm:$0xff]
    %v1069 = vld [vmem:[%s1066 + $0x10] sm:$0xff]
    %v1070 = vld [vmem:[%s1066 + $0x18] sm:$0xff]
    %1071 = vmatprep.subr.bf16.mxu0 %v664
    %1072 = vmatpush1.bf16.msra.mxu0 %v663
    %1073 = vmatprep.subr.bf16.mxu0 %v668
    %1074 = vmatpush1.bf16.msra.mxu0 %v667
    %1075 = vmatprep.subr.bf16.mxu0 %v672
    %1076 = vmatpush1.bf16.msra.mxu0 %v671
    %1077 = vmatprep.subr.bf16.mxu0 %v676
    %1078 = vmatpush1.bf16.msra.mxu0 %v675
    %1079 = vmatprep.subr.bf16.mxu0 %v680
    %1080 = vmatpush1.bf16.msra.mxu0 %v679
    %1081 = vmatprep.subr.bf16.mxu0 %v684
    %1082 = vmatpush1.bf16.msra.mxu0 %v683
    %1083 = vmatprep.subr.bf16.mxu0 %v688
    %1084 = vmatpush1.bf16.msra.mxu0 %v687
    %1085 = vmatprep.subr.bf16.mxu0 %v692
    %1086 = vmatpush1.bf16.msra.mxu0 %v691
    %1087 = vmatprep.subr.bf16.mxu0 0
    %1088 = vmatpush1.bf16.msra.mxu0 0
    %1089 = vmatprep.subr.bf16.mxu0 0
    %1090 = vmatpush1.bf16.msra.mxu0 0
    %1091 = vmatprep.subr.bf16.mxu0 0
    %1092 = vmatpush1.bf16.msra.mxu0 0
    %1093 = vmatprep.subr.bf16.mxu0 0
    %1094 = vmatpush1.bf16.msra.mxu0 0
    %1095 = vmatprep.subr.bf16.mxu0 0
    %1096 = vmatpush1.bf16.msra.mxu0 0
    %1097 = vmatprep.subr.bf16.mxu0 0
    %1098 = vmatpush1.bf16.msra.mxu0 0
    %1099 = vmatprep.subr.bf16.mxu0 0
    %1100 = vmatpush1.bf16.msra.mxu0 0
    %1101 = vmatprep.subr.bf16.mxu0 0
    %1102 = vmatpush1.bf16.msra.mxu0 0
    %1103 = vmatprep.mubr.bf16.mxu0 0
    %1104 = vmatmul.mubr.bf16.gmra.mrb[0].mxu0 %v1063
    %v1105 = vpop.f32.mrb[0].mxu0
    %v1106 = vadd.f32 0.0, %v1105
    %v1107 = vpop.f32.mrb[0].mxu0
    %v1108 = vadd.f32 0.0, %v1107
    %v1109 = vpop.f32.mrb[0].mxu0
    %v1110 = vpop.f32.mrb[0].mxu0
    %1111 = vdwg.mxu0
    %1112 = vmatprep.subr.bf16.mxu0 %v666
    %1113 = vmatpush1.bf16.msra.mxu0 %v665
    %1114 = vmatprep.subr.bf16.mxu0 %v670
    %1115 = vmatpush1.bf16.msra.mxu0 %v669
    %1116 = vmatprep.subr.bf16.mxu0 %v674
    %1117 = vmatpush1.bf16.msra.mxu0 %v673
    %1118 = vmatprep.subr.bf16.mxu0 %v678
    %1119 = vmatpush1.bf16.msra.mxu0 %v677
    %1120 = vmatprep.subr.bf16.mxu0 %v682
    %1121 = vmatpush1.bf16.msra.mxu0 %v681
    %1122 = vmatprep.subr.bf16.mxu0 %v686
    %1123 = vmatpush1.bf16.msra.mxu0 %v685
    %1124 = vmatprep.subr.bf16.mxu0 %v690
    %1125 = vmatpush1.bf16.msra.mxu0 %v689
    %1126 = vmatprep.subr.bf16.mxu0 %v694
    %1127 = vmatpush1.bf16.msra.mxu0 %v693
    %1128 = vmatprep.subr.bf16.mxu0 0
    %1129 = vmatpush1.bf16.msra.mxu0 0
    %1130 = vmatprep.subr.bf16.mxu0 0
    %1131 = vmatpush1.bf16.msra.mxu0 0
    %1132 = vmatprep.subr.bf16.mxu0 0
    %1133 = vmatpush1.bf16.msra.mxu0 0
    %1134 = vmatprep.subr.bf16.mxu0 0
    %1135 = vmatpush1.bf16.msra.mxu0 0
    %1136 = vmatprep.subr.bf16.mxu0 0
    %1137 = vmatpush1.bf16.msra.mxu0 0
    %1138 = vmatprep.subr.bf16.mxu0 0
    %1139 = vmatpush1.bf16.msra.mxu0 0
    %1140 = vmatprep.subr.bf16.mxu0 0
    %1141 = vmatpush1.bf16.msra.mxu0 0
    %1142 = vmatprep.subr.bf16.mxu0 0
    %1143 = vmatpush1.bf16.msra.mxu0 0
    %1144 = vmatprep.mubr.bf16.mxu0 0
    %1145 = vmatmul.mubr.bf16.gmra.mrb[0].mxu0 %v1063
    %v1146 = vpop.f32.mrb[0].mxu0
    %v1147 = vadd.f32 0.0, %v1146
    %v1148 = vpop.f32.mrb[0].mxu0
    %v1149 = vadd.f32 0.0, %v1148
    %v1150 = vpop.f32.mrb[0].mxu0
    %v1151 = vpop.f32.mrb[0].mxu0
    %1152 = vdwg.mxu0
    %v1153 = vadd.f32 %v1067, %v1106
    %v1154 = vadd.f32 %v1068, %v1108
    %v1155 = vadd.f32 %v1069, %v1147
    %v1156 = vadd.f32 %v1070, %v1149
    %v1157 = vsub.f32 0.0, %v1153
    %v1158 = vmul.f32 %v1157, 1.442695
    %v1159 = vpow.pop %v1158
    %v1160 = vadd.f32 %v1159, 1.0
    %v1161 = vrcp.pop %v1160
    %v1162 = vsub.f32 0.0, %v1154
    %v1163 = vmul.f32 %v1162, 1.442695
    %v1164 = vpow.pop %v1163
    %v1165 = vadd.f32 %v1164, 1.0
    %v1166 = vrcp.pop %v1165
    %v1167 = vtanh.pop %v1155
    %v1168 = vsub.f32 0.0, %v1156
    %v1169 = vmul.f32 %v1168, 1.442695
    %v1170 = vpow.pop %v1169
    %v1171 = vadd.f32 %v1170, 1.0
    %v1172 = vrcp.pop %v1171
    %v1173 = vmul.f32 %v1166, %v1060
    %v1174 = vmul.f32 %v1161, %v1167
    %v1175 = vadd.f32 %v1173, %v1174
    %v1176 = vtanh.pop %v1175
    %v1177 = vmul.f32 %v1172, %v1176
    %v1178 = vpack.c.bf16 %v1177, %v1177
    %s1179 = scalar_lea.vmem [#allocation5], 12
    %1180 = vst [vmem:[%s1179] sm:$0xf] %v1178
    %s1181 = scalar_lea.vmem [#allocation4], 128
    %v1182 = vld [vmem:[%s1181] sm:$0xff]
    %v1183 = vld [vmem:[%s1181 + $0x8] sm:$0xff]
    %v1184 = vld [vmem:[%s1181 + $0x10] sm:$0xff]
    %v1185 = vld [vmem:[%s1181 + $0x18] sm:$0xff]
    %1186 = vmatprep.subr.bf16.mxu0 %v664
    %1187 = vmatpush1.bf16.msra.mxu0 %v663
    %1188 = vmatprep.subr.bf16.mxu0 %v668
    %1189 = vmatpush1.bf16.msra.mxu0 %v667
    %1190 = vmatprep.subr.bf16.mxu0 %v672
    %1191 = vmatpush1.bf16.msra.mxu0 %v671
    %1192 = vmatprep.subr.bf16.mxu0 %v676
    %1193 = vmatpush1.bf16.msra.mxu0 %v675
    %1194 = vmatprep.subr.bf16.mxu0 %v680
    %1195 = vmatpush1.bf16.msra.mxu0 %v679
    %1196 = vmatprep.subr.bf16.mxu0 %v684
    %1197 = vmatpush1.bf16.msra.mxu0 %v683
    %1198 = vmatprep.subr.bf16.mxu0 %v688
    %1199 = vmatpush1.bf16.msra.mxu0 %v687
    %1200 = vmatprep.subr.bf16.mxu0 %v692
    %1201 = vmatpush1.bf16.msra.mxu0 %v691
    %1202 = vmatprep.subr.bf16.mxu0 0
    %1203 = vmatpush1.bf16.msra.mxu0 0
    %1204 = vmatprep.subr.bf16.mxu0 0
    %1205 = vmatpush1.bf16.msra.mxu0 0
    %1206 = vmatprep.subr.bf16.mxu0 0
    %1207 = vmatpush1.bf16.msra.mxu0 0
    %1208 = vmatprep.subr.bf16.mxu0 0
    %1209 = vmatpush1.bf16.msra.mxu0 0
    %1210 = vmatprep.subr.bf16.mxu0 0
    %1211 = vmatpush1.bf16.msra.mxu0 0
    %1212 = vmatprep.subr.bf16.mxu0 0
    %1213 = vmatpush1.bf16.msra.mxu0 0
    %1214 = vmatprep.subr.bf16.mxu0 0
    %1215 = vmatpush1.bf16.msra.mxu0 0
    %1216 = vmatprep.subr.bf16.mxu0 0
    %1217 = vmatpush1.bf16.msra.mxu0 0
    %1218 = vmatprep.mubr.bf16.mxu0 0
    %1219 = vmatmul.mubr.bf16.gmra.mrb[0].mxu0 %v1178
    %v1220 = vpop.f32.mrb[0].mxu0
    %v1221 = vadd.f32 0.0, %v1220
    %v1222 = vpop.f32.mrb[0].mxu0
    %v1223 = vadd.f32 0.0, %v1222
    %v1224 = vpop.f32.mrb[0].mxu0
    %v1225 = vpop.f32.mrb[0].mxu0
    %1226 = vdwg.mxu0
    %1227 = vmatprep.subr.bf16.mxu0 %v666
    %1228 = vmatpush1.bf16.msra.mxu0 %v665
    %1229 = vmatprep.subr.bf16.mxu0 %v670
    %1230 = vmatpush1.bf16.msra.mxu0 %v669
    %1231 = vmatprep.subr.bf16.mxu0 %v674
    %1232 = vmatpush1.bf16.msra.mxu0 %v673
    %1233 = vmatprep.subr.bf16.mxu0 %v678
    %1234 = vmatpush1.bf16.msra.mxu0 %v677
    %1235 = vmatprep.subr.bf16.mxu0 %v682
    %1236 = vmatpush1.bf16.msra.mxu0 %v681
    %1237 = vmatprep.subr.bf16.mxu0 %v686
    %1238 = vmatpush1.bf16.msra.mxu0 %v685
    %1239 = vmatprep.subr.bf16.mxu0 %v690
    %1240 = vmatpush1.bf16.msra.mxu0 %v689
    %1241 = vmatprep.subr.bf16.mxu0 %v694
    %1242 = vmatpush1.bf16.msra.mxu0 %v693
    %1243 = vmatprep.subr.bf16.mxu0 0
    %1244 = vmatpush1.bf16.msra.mxu0 0
    %1245 = vmatprep.subr.bf16.mxu0 0
    %1246 = vmatpush1.bf16.msra.mxu0 0
    %1247 = vmatprep.subr.bf16.mxu0 0
    %1248 = vmatpush1.bf16.msra.mxu0 0
    %1249 = vmatprep.subr.bf16.mxu0 0
    %1250 = vmatpush1.bf16.msra.mxu0 0
    %1251 = vmatprep.subr.bf16.mxu0 0
    %1252 = vmatpush1.bf16.msra.mxu0 0
    %1253 = vmatprep.subr.bf16.mxu0 0
    %1254 = vmatpush1.bf16.msra.mxu0 0
    %1255 = vmatprep.subr.bf16.mxu0 0
    %1256 = vmatpush1.bf16.msra.mxu0 0
    %1257 = vmatprep.subr.bf16.mxu0 0
    %1258 = vmatpush1.bf16.msra.mxu0 0
    %1259 = vmatprep.mubr.bf16.mxu0 0
    %1260 = vmatmul.mubr.bf16.gmra.mrb[0].mxu0 %v1178
    %v1261 = vpop.f32.mrb[0].mxu0
    %v1262 = vadd.f32 0.0, %v1261
    %v1263 = vpop.f32.mrb[0].mxu0
    %v1264 = vadd.f32 0.0, %v1263
    %v1265 = vpop.f32.mrb[0].mxu0
    %v1266 = vpop.f32.mrb[0].mxu0
    %1267 = vdwg.mxu0
    %v1268 = vadd.f32 %v1182, %v1221
    %v1269 = vadd.f32 %v1183, %v1223
    %v1270 = vadd.f32 %v1184, %v1262
    %v1271 = vadd.f32 %v1185, %v1264
    %v1272 = vsub.f32 0.0, %v1268
    %v1273 = vmul.f32 %v1272, 1.442695
    %v1274 = vpow.pop %v1273
    %v1275 = vadd.f32 %v1274, 1.0
    %v1276 = vrcp.pop %v1275
    %v1277 = vsub.f32 0.0, %v1269
    %v1278 = vmul.f32 %v1277, 1.442695
    %v1279 = vpow.pop %v1278
    %v1280 = vadd.f32 %v1279, 1.0
    %v1281 = vrcp.pop %v1280
    %v1282 = vtanh.pop %v1270
    %v1283 = vsub.f32 0.0, %v1271
    %v1284 = vmul.f32 %v1283, 1.442695
    %v1285 = vpow.pop %v1284
    %v1286 = vadd.f32 %v1285, 1.0
    %v1287 = vrcp.pop %v1286
    %v1288 = vmul.f32 %v1281, %v1175
    %v1289 = vmul.f32 %v1276, %v1282
    %v1290 = vadd.f32 %v1288, %v1289
    %v1291 = vtanh.pop %v1290
    %v1292 = vmul.f32 %v1287, %v1291
    %v1293 = vpack.c.bf16 %v1292, %v1292
    %s1294 = scalar_lea.vmem [#allocation5], 16
    %1295 = vst [vmem:[%s1294] sm:$0xf] %v1293
    %s1296 = scalar_lea.vmem [#allocation4], 160
    %v1297 = vld [vmem:[%s1296] sm:$0xff]
    %v1298 = vld [vmem:[%s1296 + $0x8] sm:$0xff]
    %v1299 = vld [vmem:[%s1296 + $0x10] sm:$0xff]
    %v1300 = vld [vmem:[%s1296 + $0x18] sm:$0xff]
    %1301 = vmatprep.subr.bf16.mxu0 %v664
    %1302 = vmatpush1.bf16.msra.mxu0 %v663
    %1303 = vmatprep.subr.bf16.mxu0 %v668
    %1304 = vmatpush1.bf16.msra.mxu0 %v667
    %1305 = vmatprep.subr.bf16.mxu0 %v672
    %1306 = vmatpush1.bf16.msra.mxu0 %v671
    %1307 = vmatprep.subr.bf16.mxu0 %v676
    %1308 = vmatpush1.bf16.msra.mxu0 %v675
    %1309 = vmatprep.subr.bf16.mxu0 %v680
    %1310 = vmatpush1.bf16.msra.mxu0 %v679
    %1311 = vmatprep.subr.bf16.mxu0 %v684
    %1312 = vmatpush1.bf16.msra.mxu0 %v683
    %1313 = vmatprep.subr.bf16.mxu0 %v688
    %1314 = vmatpush1.bf16.msra.mxu0 %v687
    %1315 = vmatprep.subr.bf16.mxu0 %v692
    %1316 = vmatpush1.bf16.msra.mxu0 %v691
    %1317 = vmatprep.subr.bf16.mxu0 0
    %1318 = vmatpush1.bf16.msra.mxu0 0
    %1319 = vmatprep.subr.bf16.mxu0 0
    %1320 = vmatpush1.bf16.msra.mxu0 0
    %1321 = vmatprep.subr.bf16.mxu0 0
    %1322 = vmatpush1.bf16.msra.mxu0 0
    %1323 = vmatprep.subr.bf16.mxu0 0
    %1324 = vmatpush1.bf16.msra.mxu0 0
    %1325 = vmatprep.subr.bf16.mxu0 0
    %1326 = vmatpush1.bf16.msra.mxu0 0
    %1327 = vmatprep.subr.bf16.mxu0 0
    %1328 = vmatpush1.bf16.msra.mxu0 0
    %1329 = vmatprep.subr.bf16.mxu0 0
    %1330 = vmatpush1.bf16.msra.mxu0 0
    %1331 = vmatprep.subr.bf16.mxu0 0
    %1332 = vmatpush1.bf16.msra.mxu0 0
    %1333 = vmatprep.mubr.bf16.mxu0 0
    %1334 = vmatmul.mubr.bf16.gmra.mrb[0].mxu0 %v1293
    %v1335 = vpop.f32.mrb[0].mxu0
    %v1336 = vadd.f32 0.0, %v1335
    %v1337 = vpop.f32.mrb[0].mxu0
    %v1338 = vadd.f32 0.0, %v1337
    %v1339 = vpop.f32.mrb[0].mxu0
    %v1340 = vpop.f32.mrb[0].mxu0
    %1341 = vdwg.mxu0
    %1342 = vmatprep.subr.bf16.mxu0 %v666
    %1343 = vmatpush1.bf16.msra.mxu0 %v665
    %1344 = vmatprep.subr.bf16.mxu0 %v670
    %1345 = vmatpush1.bf16.msra.mxu0 %v669
    %1346 = vmatprep.subr.bf16.mxu0 %v674
    %1347 = vmatpush1.bf16.msra.mxu0 %v673
    %1348 = vmatprep.subr.bf16.mxu0 %v678
    %1349 = vmatpush1.bf16.msra.mxu0 %v677
    %1350 = vmatprep.subr.bf16.mxu0 %v682
    %1351 = vmatpush1.bf16.msra.mxu0 %v681
    %1352 = vmatprep.subr.bf16.mxu0 %v686
    %1353 = vmatpush1.bf16.msra.mxu0 %v685
    %1354 = vmatprep.subr.bf16.mxu0 %v690
    %1355 = vmatpush1.bf16.msra.mxu0 %v689
    %1356 = vmatprep.subr.bf16.mxu0 %v694
    %1357 = vmatpush1.bf16.msra.mxu0 %v693
    %1358 = vmatprep.subr.bf16.mxu0 0
    %1359 = vmatpush1.bf16.msra.mxu0 0
    %1360 = vmatprep.subr.bf16.mxu0 0
    %1361 = vmatpush1.bf16.msra.mxu0 0
    %1362 = vmatprep.subr.bf16.mxu0 0
    %1363 = vmatpush1.bf16.msra.mxu0 0
    %1364 = vmatprep.subr.bf16.mxu0 0
    %1365 = vmatpush1.bf16.msra.mxu0 0
    %1366 = vmatprep.subr.bf16.mxu0 0
    %1367 = vmatpush1.bf16.msra.mxu0 0
    %1368 = vmatprep.subr.bf16.mxu0 0
    %1369 = vmatpush1.bf16.msra.mxu0 0
    %1370 = vmatprep.subr.bf16.mxu0 0
    %1371 = vmatpush1.bf16.msra.mxu0 0
    %1372 = vmatprep.subr.bf16.mxu0 0
    %1373 = vmatpush1.bf16.msra.mxu0 0
    %1374 = vmatprep.mubr.bf16.mxu0 0
    %1375 = vmatmul.mubr.bf16.gmra.mrb[0].mxu0 %v1293
    %v1376 = vpop.f32.mrb[0].mxu0
    %v1377 = vadd.f32 0.0, %v1376
    %v1378 = vpop.f32.mrb[0].mxu0
    %v1379 = vadd.f32 0.0, %v1378
    %v1380 = vpop.f32.mrb[0].mxu0
    %v1381 = vpop.f32.mrb[0].mxu0
    %1382 = vdwg.mxu0
    %v1383 = vadd.f32 %v1297, %v1336
    %v1384 = vadd.f32 %v1298, %v1338
    %v1385 = vadd.f32 %v1299, %v1377
    %v1386 = vadd.f32 %v1300, %v1379
    %v1387 = vsub.f32 0.0, %v1383
    %v1388 = vmul.f32 %v1387, 1.442695
    %v1389 = vpow.pop %v1388
    %v1390 = vadd.f32 %v1389, 1.0
    %v1391 = vrcp.pop %v1390
    %v1392 = vsub.f32 0.0, %v1384
    %v1393 = vmul.f32 %v1392, 1.442695
    %v1394 = vpow.pop %v1393
    %v1395 = vadd.f32 %v1394, 1.0
    %v1396 = vrcp.pop %v1395
    %v1397 = vtanh.pop %v1385
    %v1398 = vsub.f32 0.0, %v1386
    %v1399 = vmul.f32 %v1398, 1.442695
    %v1400 = vpow.pop %v1399
    %v1401 = vadd.f32 %v1400, 1.0
    %v1402 = vrcp.pop %v1401
    %v1403 = vmul.f32 %v1396, %v1290
    %v1404 = vmul.f32 %v1391, %v1397
    %v1405 = vadd.f32 %v1403, %v1404
    %v1406 = vtanh.pop %v1405
    %v1407 = vmul.f32 %v1402, %v1406
    %v1408 = vpack.c.bf16 %v1407, %v1407
    %s1409 = scalar_lea.vmem [#allocation5], 20
    %1410 = vst [vmem:[%s1409] sm:$0xf] %v1408
    %s1411 = scalar_lea.vmem [#allocation4], 192
    %v1412 = vld [vmem:[%s1411] sm:$0xff]
    %v1413 = vld [vmem:[%s1411 + $0x8] sm:$0xff]
    %v1414 = vld [vmem:[%s1411 + $0x10] sm:$0xff]
    %v1415 = vld [vmem:[%s1411 + $0x18] sm:$0xff]
    %1416 = vmatprep.subr.bf16.mxu0 %v664
    %1417 = vmatpush1.bf16.msra.mxu0 %v663
    %1418 = vmatprep.subr.bf16.mxu0 %v668
    %1419 = vmatpush1.bf16.msra.mxu0 %v667
    %1420 = vmatprep.subr.bf16.mxu0 %v672
    %1421 = vmatpush1.bf16.msra.mxu0 %v671
    %1422 = vmatprep.subr.bf16.mxu0 %v676
    %1423 = vmatpush1.bf16.msra.mxu0 %v675
    %1424 = vmatprep.subr.bf16.mxu0 %v680
    %1425 = vmatpush1.bf16.msra.mxu0 %v679
    %1426 = vmatprep.subr.bf16.mxu0 %v684
    %1427 = vmatpush1.bf16.msra.mxu0 %v683
    %1428 = vmatprep.subr.bf16.mxu0 %v688
    %1429 = vmatpush1.bf16.msra.mxu0 %v687
    %1430 = vmatprep.subr.bf16.mxu0 %v692
    %1431 = vmatpush1.bf16.msra.mxu0 %v691
    %1432 = vmatprep.subr.bf16.mxu0 0
    %1433 = vmatpush1.bf16.msra.mxu0 0
    %1434 = vmatprep.subr.bf16.mxu0 0
    %1435 = vmatpush1.bf16.msra.mxu0 0
    %1436 = vmatprep.subr.bf16.mxu0 0
    %1437 = vmatpush1.bf16.msra.mxu0 0
    %1438 = vmatprep.subr.bf16.mxu0 0
    %1439 = vmatpush1.bf16.msra.mxu0 0
    %1440 = vmatprep.subr.bf16.mxu0 0
    %1441 = vmatpush1.bf16.msra.mxu0 0
    %1442 = vmatprep.subr.bf16.mxu0 0
    %1443 = vmatpush1.bf16.msra.mxu0 0
    %1444 = vmatprep.subr.bf16.mxu0 0
    %1445 = vmatpush1.bf16.msra.mxu0 0
    %1446 = vmatprep.subr.bf16.mxu0 0
    %1447 = vmatpush1.bf16.msra.mxu0 0
    %1448 = vmatprep.mubr.bf16.mxu0 0
    %1449 = vmatmul.mubr.bf16.gmra.mrb[0].mxu0 %v1408
    %v1450 = vpop.f32.mrb[0].mxu0
    %v1451 = vadd.f32 0.0, %v1450
    %v1452 = vpop.f32.mrb[0].mxu0
    %v1453 = vadd.f32 0.0, %v1452
    %v1454 = vpop.f32.mrb[0].mxu0
    %v1455 = vpop.f32.mrb[0].mxu0
    %1456 = vdwg.mxu0
    %1457 = vmatprep.subr.bf16.mxu0 %v666
    %1458 = vmatpush1.bf16.msra.mxu0 %v665
    %1459 = vmatprep.subr.bf16.mxu0 %v670
    %1460 = vmatpush1.bf16.msra.mxu0 %v669
    %1461 = vmatprep.subr.bf16.mxu0 %v674
    %1462 = vmatpush1.bf16.msra.mxu0 %v673
    %1463 = vmatprep.subr.bf16.mxu0 %v678
    %1464 = vmatpush1.bf16.msra.mxu0 %v677
    %1465 = vmatprep.subr.bf16.mxu0 %v682
    %1466 = vmatpush1.bf16.msra.mxu0 %v681
    %1467 = vmatprep.subr.bf16.mxu0 %v686
    %1468 = vmatpush1.bf16.msra.mxu0 %v685
    %1469 = vmatprep.subr.bf16.mxu0 %v690
    %1470 = vmatpush1.bf16.msra.mxu0 %v689
    %1471 = vmatprep.subr.bf16.mxu0 %v694
    %1472 = vmatpush1.bf16.msra.mxu0 %v693
    %1473 = vmatprep.subr.bf16.mxu0 0
    %1474 = vmatpush1.bf16.msra.mxu0 0
    %1475 = vmatprep.subr.bf16.mxu0 0
    %1476 = vmatpush1.bf16.msra.mxu0 0
    %1477 = vmatprep.subr.bf16.mxu0 0
    %1478 = vmatpush1.bf16.msra.mxu0 0
    %1479 = vmatprep.subr.bf16.mxu0 0
    %1480 = vmatpush1.bf16.msra.mxu0 0
    %1481 = vmatprep.subr.bf16.mxu0 0
    %1482 = vmatpush1.bf16.msra.mxu0 0
    %1483 = vmatprep.subr.bf16.mxu0 0
    %1484 = vmatpush1.bf16.msra.mxu0 0
    %1485 = vmatprep.subr.bf16.mxu0 0
    %1486 = vmatpush1.bf16.msra.mxu0 0
    %1487 = vmatprep.subr.bf16.mxu0 0
    %1488 = vmatpush1.bf16.msra.mxu0 0
    %1489 = vmatprep.mubr.bf16.mxu0 0
    %1490 = vmatmul.mubr.bf16.gmra.mrb[0].mxu0 %v1408
    %v1491 = vpop.f32.mrb[0].mxu0
    %v1492 = vadd.f32 0.0, %v1491
    %v1493 = vpop.f32.mrb[0].mxu0
    %v1494 = vadd.f32 0.0, %v1493
    %v1495 = vpop.f32.mrb[0].mxu0
    %v1496 = vpop.f32.mrb[0].mxu0
    %1497 = vdwg.mxu0
    %v1498 = vadd.f32 %v1412, %v1451
    %v1499 = vadd.f32 %v1413, %v1453
    %v1500 = vadd.f32 %v1414, %v1492
    %v1501 = vadd.f32 %v1415, %v1494
    %v1502 = vsub.f32 0.0, %v1498
    %v1503 = vmul.f32 %v1502, 1.442695
    %v1504 = vpow.pop %v1503
    %v1505 = vadd.f32 %v1504, 1.0
    %v1506 = vrcp.pop %v1505
    %v1507 = vsub.f32 0.0, %v1499
    %v1508 = vmul.f32 %v1507, 1.442695
    %v1509 = vpow.pop %v1508
    %v1510 = vadd.f32 %v1509, 1.0
    %v1511 = vrcp.pop %v1510
    %v1512 = vtanh.pop %v1500
    %v1513 = vsub.f32 0.0, %v1501
    %v1514 = vmul.f32 %v1513, 1.442695
    %v1515 = vpow.pop %v1514
    %v1516 = vadd.f32 %v1515, 1.0
    %v1517 = vrcp.pop %v1516
    %v1518 = vmul.f32 %v1511, %v1405
    %v1519 = vmul.f32 %v1506, %v1512
    %v1520 = vadd.f32 %v1518, %v1519
    %v1521 = vtanh.pop %v1520
    %v1522 = vmul.f32 %v1517, %v1521
    %v1523 = vpack.c.bf16 %v1522, %v1522
    %s1524 = scalar_lea.vmem [#allocation5], 24
    %1525 = vst [vmem:[%s1524] sm:$0xf] %v1523
    %s1526 = scalar_lea.vmem [#allocation4], 224
    %v1527 = vld [vmem:[%s1526] sm:$0xff]
    %v1528 = vld [vmem:[%s1526 + $0x8] sm:$0xff]
    %v1529 = vld [vmem:[%s1526 + $0x10] sm:$0xff]
    %v1530 = vld [vmem:[%s1526 + $0x18] sm:$0xff]
    %1531 = vmatprep.subr.bf16.mxu0 %v664
    %1532 = vmatpush1.bf16.msra.mxu0 %v663
    %1533 = vmatprep.subr.bf16.mxu0 %v668
    %1534 = vmatpush1.bf16.msra.mxu0 %v667
    %1535 = vmatprep.subr.bf16.mxu0 %v672
    %1536 = vmatpush1.bf16.msra.mxu0 %v671
    %1537 = vmatprep.subr.bf16.mxu0 %v676
    %1538 = vmatpush1.bf16.msra.mxu0 %v675
    %1539 = vmatprep.subr.bf16.mxu0 %v680
    %1540 = vmatpush1.bf16.msra.mxu0 %v679
    %1541 = vmatprep.subr.bf16.mxu0 %v684
    %1542 = vmatpush1.bf16.msra.mxu0 %v683
    %1543 = vmatprep.subr.bf16.mxu0 %v688
    %1544 = vmatpush1.bf16.msra.mxu0 %v687
    %1545 = vmatprep.subr.bf16.mxu0 %v692
    %1546 = vmatpush1.bf16.msra.mxu0 %v691
    %1547 = vmatprep.subr.bf16.mxu0 0
    %1548 = vmatpush1.bf16.msra.mxu0 0
    %1549 = vmatprep.subr.bf16.mxu0 0
    %1550 = vmatpush1.bf16.msra.mxu0 0
    %1551 = vmatprep.subr.bf16.mxu0 0
    %1552 = vmatpush1.bf16.msra.mxu0 0
    %1553 = vmatprep.subr.bf16.mxu0 0
    %1554 = vmatpush1.bf16.msra.mxu0 0
    %1555 = vmatprep.subr.bf16.mxu0 0
    %1556 = vmatpush1.bf16.msra.mxu0 0
    %1557 = vmatprep.subr.bf16.mxu0 0
    %1558 = vmatpush1.bf16.msra.mxu0 0
    %1559 = vmatprep.subr.bf16.mxu0 0
    %1560 = vmatpush1.bf16.msra.mxu0 0
    %1561 = vmatprep.subr.bf16.mxu0 0
    %1562 = vmatpush1.bf16.msra.mxu0 0
    %1563 = vmatprep.mubr.bf16.mxu0 0
    %1564 = vmatmul.mubr.bf16.gmra.mrb[0].mxu0 %v1523
    %v1565 = vpop.f32.mrb[0].mxu0
    %v1566 = vadd.f32 0.0, %v1565
    %v1567 = vpop.f32.mrb[0].mxu0
    %v1568 = vadd.f32 0.0, %v1567
    %v1569 = vpop.f32.mrb[0].mxu0
    %v1570 = vpop.f32.mrb[0].mxu0
    %1571 = vdwg.mxu0
    %1572 = vmatprep.subr.bf16.mxu0 %v666
    %1573 = vmatpush1.bf16.msra.mxu0 %v665
    %1574 = vmatprep.subr.bf16.mxu0 %v670
    %1575 = vmatpush1.bf16.msra.mxu0 %v669
    %1576 = vmatprep.subr.bf16.mxu0 %v674
    %1577 = vmatpush1.bf16.msra.mxu0 %v673
    %1578 = vmatprep.subr.bf16.mxu0 %v678
    %1579 = vmatpush1.bf16.msra.mxu0 %v677
    %1580 = vmatprep.subr.bf16.mxu0 %v682
    %1581 = vmatpush1.bf16.msra.mxu0 %v681
    %1582 = vmatprep.subr.bf16.mxu0 %v686
    %1583 = vmatpush1.bf16.msra.mxu0 %v685
    %1584 = vmatprep.subr.bf16.mxu0 %v690
    %1585 = vmatpush1.bf16.msra.mxu0 %v689
    %1586 = vmatprep.subr.bf16.mxu0 %v694
    %1587 = vmatpush1.bf16.msra.mxu0 %v693
    %1588 = vmatprep.subr.bf16.mxu0 0
    %1589 = vmatpush1.bf16.msra.mxu0 0
    %1590 = vmatprep.subr.bf16.mxu0 0
    %1591 = vmatpush1.bf16.msra.mxu0 0
    %1592 = vmatprep.subr.bf16.mxu0 0
    %1593 = vmatpush1.bf16.msra.mxu0 0
    %1594 = vmatprep.subr.bf16.mxu0 0
    %1595 = vmatpush1.bf16.msra.mxu0 0
    %1596 = vmatprep.subr.bf16.mxu0 0
    %1597 = vmatpush1.bf16.msra.mxu0 0
    %1598 = vmatprep.subr.bf16.mxu0 0
    %1599 = vmatpush1.bf16.msra.mxu0 0
    %1600 = vmatprep.subr.bf16.mxu0 0
    %1601 = vmatpush1.bf16.msra.mxu0 0
    %1602 = vmatprep.subr.bf16.mxu0 0
    %1603 = vmatpush1.bf16.msra.mxu0 0
    %1604 = vmatprep.mubr.bf16.mxu0 0
    %1605 = vmatmul.mubr.bf16.gmra.mrb[0].mxu0 %v1523
    %v1606 = vpop.f32.mrb[0].mxu0
    %v1607 = vadd.f32 0.0, %v1606
    %v1608 = vpop.f32.mrb[0].mxu0
    %v1609 = vadd.f32 0.0, %v1608
    %v1610 = vpop.f32.mrb[0].mxu0
    %v1611 = vpop.f32.mrb[0].mxu0
    %1612 = vdwg.mxu0
    %v1613 = vadd.f32 %v1527, %v1566
    %v1614 = vadd.f32 %v1528, %v1568
    %v1615 = vadd.f32 %v1529, %v1607
    %v1616 = vadd.f32 %v1530, %v1609
    %v1617 = vsub.f32 0.0, %v1613
    %v1618 = vmul.f32 %v1617, 1.442695
    %v1619 = vpow.pop %v1618
    %v1620 = vadd.f32 %v1619, 1.0
    %v1621 = vrcp.pop %v1620
    %v1622 = vsub.f32 0.0, %v1614
    %v1623 = vmul.f32 %v1622, 1.442695
    %v1624 = vpow.pop %v1623
    %v1625 = vadd.f32 %v1624, 1.0
    %v1626 = vrcp.pop %v1625
    %v1627 = vtanh.pop %v1615
    %v1628 = vsub.f32 0.0, %v1616
    %v1629 = vmul.f32 %v1628, 1.442695
    %v1630 = vpow.pop %v1629
    %v1631 = vadd.f32 %v1630, 1.0
    %v1632 = vrcp.pop %v1631
    %v1633 = vmul.f32 %v1626, %v1520
    %v1634 = vmul.f32 %v1621, %v1627
    %v1635 = vadd.f32 %v1633, %v1634
    %v1636 = vtanh.pop %v1635
    %v1637 = vmul.f32 %v1632, %v1636
    %v1638 = vpack.c.bf16 %v1637, %v1637
    %s1639 = scalar_lea.vmem [#allocation5], 28
    %1640 = vst [vmem:[%s1639] sm:$0xf] %v1638
    %1641 = vst [vmem:[#allocation2] sm:$0xff] %v1637
    %1642 = vst [vmem:[#allocation3] sm:$0xff] %v1635
    %v1643 = vld [vmem:[#allocation5] sm:$0xf]
    %v1644 = vld [vmem:[#allocation5 + $0x4] sm:$0xf]
    %v1645 = vld [vmem:[#allocation5 + $0x8] sm:$0xf]
    %v1646 = vld [vmem:[#allocation5 + $0xc] sm:$0xf]
    %v1647 = vld [vmem:[#allocation5 + $0x10] sm:$0xf]
    %v1648 = vld [vmem:[#allocation5 + $0x14] sm:$0xf]
    %v1649 = vld [vmem:[#allocation5 + $0x18] sm:$0xf]
    %v1650 = vld [vmem:[#allocation5 + $0x1c] sm:$0xf]
    %v1651 = vld [vmem:[#allocation12] sm:$0xff]
    %v1652 = vld [vmem:[#allocation12 + $0x8] sm:$0xff]
    %v1653 = vld [vmem:[#allocation12 + $0x10] sm:$0xff]
    %v1654 = vld [vmem:[#allocation12 + $0x18] sm:$0xff]
    %v1655 = vld [vmem:[#allocation12 + $0x20] sm:$0xff]
    %v1656 = vld [vmem:[#allocation12 + $0x28] sm:$0xff]
    %v1657 = vld [vmem:[#allocation12 + $0x30] sm:$0xff]
    %v1658 = vld [vmem:[#allocation12 + $0x38] sm:$0xff]
    %v1659 = vld [vmem:[#allocation12 + $0x40] sm:$0xff]
    %v1660 = vld [vmem:[#allocation12 + $0x48] sm:$0xff]
    %v1661 = vld [vmem:[#allocation12 + $0x50] sm:$0xff]
    %v1662 = vld [vmem:[#allocation12 + $0x58] sm:$0xff]
    %v1663 = vld [vmem:[#allocation12 + $0x60] sm:$0xff]
    %v1664 = vld [vmem:[#allocation12 + $0x68] sm:$0xff]
    %v1665 = vld [vmem:[#allocation12 + $0x70] sm:$0xff]
    %v1666 = vld [vmem:[#allocation12 + $0x78] sm:$0xff]
    %v1667 = vld [vmem:[#allocation12 + $0x80] sm:$0xff]
    %v1668 = vld [vmem:[#allocation12 + $0x88] sm:$0xff]
    %v1669 = vld [vmem:[#allocation12 + $0x90] sm:$0xff]
    %v1670 = vld [vmem:[#allocation12 + $0x98] sm:$0xff]
    %v1671 = vld [vmem:[#allocation12 + $0xa0] sm:$0xff]
    %v1672 = vld [vmem:[#allocation12 + $0xa8] sm:$0xff]
    %v1673 = vld [vmem:[#allocation12 + $0xb0] sm:$0xff]
    %v1674 = vld [vmem:[#allocation12 + $0xb8] sm:$0xff]
    %v1675 = vld [vmem:[#allocation12 + $0xc0] sm:$0xff]
    %v1676 = vld [vmem:[#allocation12 + $0xc8] sm:$0xff]
    %v1677 = vld [vmem:[#allocation12 + $0xd0] sm:$0xff]
    %v1678 = vld [vmem:[#allocation12 + $0xd8] sm:$0xff]
    %v1679 = vld [vmem:[#allocation12 + $0xe0] sm:$0xff]
    %v1680 = vld [vmem:[#allocation12 + $0xe8] sm:$0xff]
    %v1681 = vld [vmem:[#allocation12 + $0xf0] sm:$0xff]
    %v1682 = vld [vmem:[#allocation12 + $0xf8] sm:$0xff]
    %v1683 = vld [vmem:[%s6] sm:$0xf]
    %v1685 = vlaneseq
    %v1686 = vshrl.u32 %v1685, 7
    %v1687 = vsub.s32 0, %v1686
    %v1688 = vrot.slane %v1683, %v1687
    %v1689 = vlaneseq
    %v1690 = vshrl.u32 %v1689, 7
    %v1691 = vsub.s32 1, %v1690
    %v1692 = vrot.slane %v1683, %v1691
    %v1693 = vlaneseq
    %v1694 = vshrl.u32 %v1693, 7
    %v1695 = vsub.s32 2, %v1694
    %v1696 = vrot.slane %v1683, %v1695
    %v1697 = vlaneseq
    %v1698 = vshrl.u32 %v1697, 7
    %v1699 = vsub.s32 3, %v1698
    %v1700 = vrot.slane %v1683, %v1699
    %v1713 = vunpack.c.l.b16 %v1643
    %v1714 = vunpack.c.l.b16 %v1644
    %v1715 = vunpack.c.l.b16 %v1645
    %v1716 = vunpack.c.l.b16 %v1646
    %v1717 = vunpack.c.l.b16 %v1647
    %v1718 = vunpack.c.l.b16 %v1648
    %v1719 = vunpack.c.l.b16 %v1649
    %v1720 = vunpack.c.l.b16 %v1650
    %v1721 = vpack.c.b16 %v1714, %v1713
    %v1722 = vpack.c.b16 %v1716, %v1715
    %v1723 = vpack.c.b16 %v1718, %v1717
    %v1724 = vpack.c.b16 %v1720, %v1719
    %v1761 = vunpack.c.l.b16 %v1651
    %v1762 = vunpack.c.h.b16 %v1651
    %v1763 = vunpack.c.l.b16 %v1652
    %v1764 = vunpack.c.h.b16 %v1652
    %v1765 = vunpack.c.l.b16 %v1653
    %v1766 = vunpack.c.h.b16 %v1653
    %v1767 = vunpack.c.l.b16 %v1654
    %v1768 = vunpack.c.h.b16 %v1654
    %v1769 = vunpack.c.l.b16 %v1655
    %v1770 = vunpack.c.h.b16 %v1655
    %v1771 = vunpack.c.l.b16 %v1656
    %v1772 = vunpack.c.h.b16 %v1656
    %v1773 = vunpack.c.l.b16 %v1657
    %v1774 = vunpack.c.h.b16 %v1657
    %v1775 = vunpack.c.l.b16 %v1658
    %v1776 = vunpack.c.h.b16 %v1658
    %v1777 = vunpack.c.l.b16 %v1659
    %v1778 = vunpack.c.h.b16 %v1659
    %v1779 = vunpack.c.l.b16 %v1660
    %v1780 = vunpack.c.h.b16 %v1660
    %v1781 = vunpack.c.l.b16 %v1661
    %v1782 = vunpack.c.h.b16 %v1661
    %v1783 = vunpack.c.l.b16 %v1662
    %v1784 = vunpack.c.h.b16 %v1662
    %v1785 = vunpack.c.l.b16 %v1663
    %v1786 = vunpack.c.h.b16 %v1663
    %v1787 = vunpack.c.l.b16 %v1664
    %v1788 = vunpack.c.h.b16 %v1664
    %v1789 = vunpack.c.l.b16 %v1665
    %v1790 = vunpack.c.h.b16 %v1665
    %v1791 = vunpack.c.l.b16 %v1666
    %v1792 = vunpack.c.h.b16 %v1666
    %v1793 = vunpack.c.l.b16 %v1667
    %v1794 = vunpack.c.h.b16 %v1667
    %v1795 = vunpack.c.l.b16 %v1668
    %v1796 = vunpack.c.h.b16 %v1668
    %v1797 = vunpack.c.l.b16 %v1669
    %v1798 = vunpack.c.h.b16 %v1669
    %v1799 = vunpack.c.l.b16 %v1670
    %v1800 = vunpack.c.h.b16 %v1670
    %v1801 = vunpack.c.l.b16 %v1671
    %v1802 = vunpack.c.h.b16 %v1671
    %v1803 = vunpack.c.l.b16 %v1672
    %v1804 = vunpack.c.h.b16 %v1672
    %v1805 = vunpack.c.l.b16 %v1673
    %v1806 = vunpack.c.h.b16 %v1673
    %v1807 = vunpack.c.l.b16 %v1674
    %v1808 = vunpack.c.h.b16 %v1674
    %v1809 = vunpack.c.l.b16 %v1675
    %v1810 = vunpack.c.h.b16 %v1675
    %v1811 = vunpack.c.l.b16 %v1676
    %v1812 = vunpack.c.h.b16 %v1676
    %v1813 = vunpack.c.l.b16 %v1677
    %v1814 = vunpack.c.h.b16 %v1677
    %v1815 = vunpack.c.l.b16 %v1678
    %v1816 = vunpack.c.h.b16 %v1678
    %v1817 = vunpack.c.l.b16 %v1679
    %v1818 = vunpack.c.h.b16 %v1679
    %v1819 = vunpack.c.l.b16 %v1680
    %v1820 = vunpack.c.h.b16 %v1680
    %v1821 = vunpack.c.l.b16 %v1681
    %v1822 = vunpack.c.h.b16 %v1681
    %v1823 = vunpack.c.l.b16 %v1682
    %v1824 = vunpack.c.h.b16 %v1682
    %v1825 = vpack.c.b16 %v1765, %v1761
    %v1826 = vpack.c.b16 %v1766, %v1762
    %v1827 = vpack.c.b16 %v1767, %v1763
    %v1828 = vpack.c.b16 %v1768, %v1764
    %v1829 = vpack.c.b16 %v1773, %v1769
    %v1830 = vpack.c.b16 %v1774, %v1770
    %v1831 = vpack.c.b16 %v1775, %v1771
    %v1832 = vpack.c.b16 %v1776, %v1772
    %v1833 = vpack.c.b16 %v1781, %v1777
    %v1834 = vpack.c.b16 %v1782, %v1778
    %v1835 = vpack.c.b16 %v1783, %v1779
    %v1836 = vpack.c.b16 %v1784, %v1780
    %v1837 = vpack.c.b16 %v1789, %v1785
    %v1838 = vpack.c.b16 %v1790, %v1786
    %v1839 = vpack.c.b16 %v1791, %v1787
    %v1840 = vpack.c.b16 %v1792, %v1788
    %v1841 = vpack.c.b16 %v1797, %v1793
    %v1842 = vpack.c.b16 %v1798, %v1794
    %v1843 = vpack.c.b16 %v1799, %v1795
    %v1844 = vpack.c.b16 %v1800, %v1796
    %v1845 = vpack.c.b16 %v1805, %v1801
    %v1846 = vpack.c.b16 %v1806, %v1802
    %v1847 = vpack.c.b16 %v1807, %v1803
    %v1848 = vpack.c.b16 %v1808, %v1804
    %v1849 = vpack.c.b16 %v1813, %v1809
    %v1850 = vpack.c.b16 %v1814, %v1810
    %v1851 = vpack.c.b16 %v1815, %v1811
    %v1852 = vpack.c.b16 %v1816, %v1812
    %v1853 = vpack.c.b16 %v1821, %v1817
    %v1854 = vpack.c.b16 %v1822, %v1818
    %v1855 = vpack.c.b16 %v1823, %v1819
    %v1856 = vpack.c.b16 %v1824, %v1820
    %1889 = vmatprep.subr.bf16.mxu0 %v1826
    %1890 = vmatpush1.bf16.msra.mxu0 %v1825
    %1891 = vmatprep.subr.bf16.mxu0 %v1830
    %1892 = vmatpush1.bf16.msra.mxu0 %v1829
    %1893 = vmatprep.subr.bf16.mxu0 %v1834
    %1894 = vmatpush1.bf16.msra.mxu0 %v1833
    %1895 = vmatprep.subr.bf16.mxu0 %v1838
    %1896 = vmatpush1.bf16.msra.mxu0 %v1837
    %1897 = vmatprep.subr.bf16.mxu0 %v1842
    %1898 = vmatpush1.bf16.msra.mxu0 %v1841
    %1899 = vmatprep.subr.bf16.mxu0 %v1846
    %1900 = vmatpush1.bf16.msra.mxu0 %v1845
    %1901 = vmatprep.subr.bf16.mxu0 %v1850
    %1902 = vmatpush1.bf16.msra.mxu0 %v1849
    %1903 = vmatprep.subr.bf16.mxu0 %v1854
    %1904 = vmatpush1.bf16.msra.mxu0 %v1853
    %1905 = vmatprep.subr.bf16.mxu0 0
    %1906 = vmatpush1.bf16.msra.mxu0 0
    %1907 = vmatprep.subr.bf16.mxu0 0
    %1908 = vmatpush1.bf16.msra.mxu0 0
    %1909 = vmatprep.subr.bf16.mxu0 0
    %1910 = vmatpush1.bf16.msra.mxu0 0
    %1911 = vmatprep.subr.bf16.mxu0 0
    %1912 = vmatpush1.bf16.msra.mxu0 0
    %1913 = vmatprep.subr.bf16.mxu0 0
    %1914 = vmatpush1.bf16.msra.mxu0 0
    %1915 = vmatprep.subr.bf16.mxu0 0
    %1916 = vmatpush1.bf16.msra.mxu0 0
    %1917 = vmatprep.subr.bf16.mxu0 0
    %1918 = vmatpush1.bf16.msra.mxu0 0
    %1919 = vmatprep.subr.bf16.mxu0 0
    %1920 = vmatpush1.bf16.msra.mxu0 0
    %1921 = vmatprep.mubr.bf16.mxu0 0
    %1922 = vmatmul.mubr.bf16.gmra.mrb[0].mxu0 %v1721
    %v1923 = vpop.f32.mrb[0].mxu0
    %v1924 = vadd.f32 %v1688, %v1923
    %v1925 = vpop.f32.mrb[0].mxu0
    %v1926 = vadd.f32 %v1692, %v1925
    %v1927 = vpop.f32.mrb[0].mxu0
    %v1928 = vadd.f32 %v1688, %v1927
    %v1929 = vpop.f32.mrb[0].mxu0
    %v1930 = vadd.f32 %v1692, %v1929
    %1931 = vmatprep.mubr.bf16.mxu0 0
    %1932 = vmatmul.mubr.bf16.gmra.mrb[0].mxu0 %v1722
    %v1933 = vpop.f32.mrb[0].mxu0
    %v1934 = vadd.f32 %v1688, %v1933
    %v1935 = vpop.f32.mrb[0].mxu0
    %v1936 = vadd.f32 %v1692, %v1935
    %v1937 = vpop.f32.mrb[0].mxu0
    %v1938 = vadd.f32 %v1688, %v1937
    %v1939 = vpop.f32.mrb[0].mxu0
    %v1940 = vadd.f32 %v1692, %v1939
    %1941 = vmatprep.mubr.bf16.mxu0 0
    %1942 = vmatmul.mubr.bf16.gmra.mrb[0].mxu0 %v1723
    %v1943 = vpop.f32.mrb[0].mxu0
    %v1944 = vadd.f32 %v1688, %v1943
    %v1945 = vpop.f32.mrb[0].mxu0
    %v1946 = vadd.f32 %v1692, %v1945
    %v1947 = vpop.f32.mrb[0].mxu0
    %v1948 = vadd.f32 %v1688, %v1947
    %v1949 = vpop.f32.mrb[0].mxu0
    %v1950 = vadd.f32 %v1692, %v1949
    %1951 = vmatprep.mubr.bf16.mxu0 0
    %1952 = vmatmul.mubr.bf16.gmra.mrb[0].mxu0 %v1724
    %v1953 = vpop.f32.mrb[0].mxu0
    %v1954 = vadd.f32 %v1688, %v1953
    %v1955 = vpop.f32.mrb[0].mxu0
    %v1956 = vadd.f32 %v1692, %v1955
    %v1957 = vpop.f32.mrb[0].mxu0
    %v1958 = vadd.f32 %v1688, %v1957
    %v1959 = vpop.f32.mrb[0].mxu0
    %v1960 = vadd.f32 %v1692, %v1959
    %1961 = vdwg.mxu0
    %1962 = vmatprep.subr.bf16.mxu0 %v1828
    %1963 = vmatpush1.bf16.msra.mxu0 %v1827
    %1964 = vmatprep.subr.bf16.mxu0 %v1832
    %1965 = vmatpush1.bf16.msra.mxu0 %v1831
    %1966 = vmatprep.subr.bf16.mxu0 %v1836
    %1967 = vmatpush1.bf16.msra.mxu0 %v1835
    %1968 = vmatprep.subr.bf16.mxu0 %v1840
    %1969 = vmatpush1.bf16.msra.mxu0 %v1839
    %1970 = vmatprep.subr.bf16.mxu0 %v1844
    %1971 = vmatpush1.bf16.msra.mxu0 %v1843
    %1972 = vmatprep.subr.bf16.mxu0 %v1848
    %1973 = vmatpush1.bf16.msra.mxu0 %v1847
    %1974 = vmatprep.subr.bf16.mxu0 %v1852
    %1975 = vmatpush1.bf16.msra.mxu0 %v1851
    %1976 = vmatprep.subr.bf16.mxu0 %v1856
    %1977 = vmatpush1.bf16.msra.mxu0 %v1855
    %1978 = vmatprep.subr.bf16.mxu0 0
    %1979 = vmatpush1.bf16.msra.mxu0 0
    %1980 = vmatprep.subr.bf16.mxu0 0
    %1981 = vmatpush1.bf16.msra.mxu0 0
    %1982 = vmatprep.subr.bf16.mxu0 0
    %1983 = vmatpush1.bf16.msra.mxu0 0
    %1984 = vmatprep.subr.bf16.mxu0 0
    %1985 = vmatpush1.bf16.msra.mxu0 0
    %1986 = vmatprep.subr.bf16.mxu0 0
    %1987 = vmatpush1.bf16.msra.mxu0 0
    %1988 = vmatprep.subr.bf16.mxu0 0
    %1989 = vmatpush1.bf16.msra.mxu0 0
    %1990 = vmatprep.subr.bf16.mxu0 0
    %1991 = vmatpush1.bf16.msra.mxu0 0
    %1992 = vmatprep.subr.bf16.mxu0 0
    %1993 = vmatpush1.bf16.msra.mxu0 0
    %1994 = vmatprep.mubr.bf16.mxu0 0
    %1995 = vmatmul.mubr.bf16.gmra.mrb[0].mxu0 %v1721
    %v1996 = vpop.f32.mrb[0].mxu0
    %v1997 = vadd.f32 %v1696, %v1996
    %v1998 = vpop.f32.mrb[0].mxu0
    %v1999 = vadd.f32 %v1700, %v1998
    %v2000 = vpop.f32.mrb[0].mxu0
    %v2001 = vadd.f32 %v1696, %v2000
    %v2002 = vpop.f32.mrb[0].mxu0
    %v2003 = vadd.f32 %v1700, %v2002
    %2004 = vmatprep.mubr.bf16.mxu0 0
    %2005 = vmatmul.mubr.bf16.gmra.mrb[0].mxu0 %v1722
    %v2006 = vpop.f32.mrb[0].mxu0
    %v2007 = vadd.f32 %v1696, %v2006
    %v2008 = vpop.f32.mrb[0].mxu0
    %v2009 = vadd.f32 %v1700, %v2008
    %v2010 = vpop.f32.mrb[0].mxu0
    %v2011 = vadd.f32 %v1696, %v2010
    %v2012 = vpop.f32.mrb[0].mxu0
    %v2013 = vadd.f32 %v1700, %v2012
    %2014 = vmatprep.mubr.bf16.mxu0 0
    %2015 = vmatmul.mubr.bf16.gmra.mrb[0].mxu0 %v1723
    %v2016 = vpop.f32.mrb[0].mxu0
    %v2017 = vadd.f32 %v1696, %v2016
    %v2018 = vpop.f32.mrb[0].mxu0
    %v2019 = vadd.f32 %v1700, %v2018
    %v2020 = vpop.f32.mrb[0].mxu0
    %v2021 = vadd.f32 %v1696, %v2020
    %v2022 = vpop.f32.mrb[0].mxu0
    %v2023 = vadd.f32 %v1700, %v2022
    %2024 = vmatprep.mubr.bf16.mxu0 0
    %2025 = vmatmul.mubr.bf16.gmra.mrb[0].mxu0 %v1724
    %v2026 = vpop.f32.mrb[0].mxu0
    %v2027 = vadd.f32 %v1696, %v2026
    %v2028 = vpop.f32.mrb[0].mxu0
    %v2029 = vadd.f32 %v1700, %v2028
    %v2030 = vpop.f32.mrb[0].mxu0
    %v2031 = vadd.f32 %v1696, %v2030
    %v2032 = vpop.f32.mrb[0].mxu0
    %v2033 = vadd.f32 %v1700, %v2032
    %2034 = vdwg.mxu0
    %2035 = vst [vmem:[#allocation4] sm:$0xff] %v1924
    %2036 = vst [vmem:[#allocation4 + $0x8] sm:$0xff] %v1926
    %2037 = vst [vmem:[#allocation4 + $0x10] sm:$0xff] %v1997
    %2038 = vst [vmem:[#allocation4 + $0x18] sm:$0xff] %v1999
    %2039 = vst [vmem:[#allocation4 + $0x20] sm:$0xff] %v1928
    %2040 = vst [vmem:[#allocation4 + $0x28] sm:$0xff] %v1930
    %2041 = vst [vmem:[#allocation4 + $0x30] sm:$0xff] %v2001
    %2042 = vst [vmem:[#allocation4 + $0x38] sm:$0xff] %v2003
    %2043 = vst [vmem:[#allocation4 + $0x40] sm:$0xff] %v1934
    %2044 = vst [vmem:[#allocation4 + $0x48] sm:$0xff] %v1936
    %2045 = vst [vmem:[#allocation4 + $0x50] sm:$0xff] %v2007
    %2046 = vst [vmem:[#allocation4 + $0x58] sm:$0xff] %v2009
    %2047 = vst [vmem:[#allocation4 + $0x60] sm:$0xff] %v1938
    %2048 = vst [vmem:[#allocation4 + $0x68] sm:$0xff] %v1940
    %2049 = vst [vmem:[#allocation4 + $0x70] sm:$0xff] %v2011
    %2050 = vst [vmem:[#allocation4 + $0x78] sm:$0xff] %v2013
    %2051 = vst [vmem:[#allocation4 + $0x80] sm:$0xff] %v1944
    %2052 = vst [vmem:[#allocation4 + $0x88] sm:$0xff] %v1946
    %2053 = vst [vmem:[#allocation4 + $0x90] sm:$0xff] %v2017
    %2054 = vst [vmem:[#allocation4 + $0x98] sm:$0xff] %v2019
    %2055 = vst [vmem:[#allocation4 + $0xa0] sm:$0xff] %v1948
    %2056 = vst [vmem:[#allocation4 + $0xa8] sm:$0xff] %v1950
    %2057 = vst [vmem:[#allocation4 + $0xb0] sm:$0xff] %v2021
    %2058 = vst [vmem:[#allocation4 + $0xb8] sm:$0xff] %v2023
    %2059 = vst [vmem:[#allocation4 + $0xc0] sm:$0xff] %v1954
    %2060 = vst [vmem:[#allocation4 + $0xc8] sm:$0xff] %v1956
    %2061 = vst [vmem:[#allocation4 + $0xd0] sm:$0xff] %v2027
    %2062 = vst [vmem:[#allocation4 + $0xd8] sm:$0xff] %v2029
    %2063 = vst [vmem:[#allocation4 + $0xe0] sm:$0xff] %v1958
    %2064 = vst [vmem:[#allocation4 + $0xe8] sm:$0xff] %v1960
    %2065 = vst [vmem:[#allocation4 + $0xf0] sm:$0xff] %v2031
    %2066 = vst [vmem:[#allocation4 + $0xf8] sm:$0xff] %v2033
    %v2067 = vld [vmem:[#allocation14] sm:$0xff]
    %v2068 = vld [vmem:[#allocation14 + $0x8] sm:$0xff]
    %v2069 = vld [vmem:[#allocation14 + $0x10] sm:$0xff]
    %v2070 = vld [vmem:[#allocation14 + $0x18] sm:$0xff]
    %v2071 = vld [vmem:[#allocation14 + $0x20] sm:$0xff]
    %v2072 = vld [vmem:[#allocation14 + $0x28] sm:$0xff]
    %v2073 = vld [vmem:[#allocation14 + $0x30] sm:$0xff]
    %v2074 = vld [vmem:[#allocation14 + $0x38] sm:$0xff]
    %v2075 = vld [vmem:[#allocation14 + $0x40] sm:$0xff]
    %v2076 = vld [vmem:[#allocation14 + $0x48] sm:$0xff]
    %v2077 = vld [vmem:[#allocation14 + $0x50] sm:$0xff]
    %v2078 = vld [vmem:[#allocation14 + $0x58] sm:$0xff]
    %v2079 = vld [vmem:[#allocation14 + $0x60] sm:$0xff]
    %v2080 = vld [vmem:[#allocation14 + $0x68] sm:$0xff]
    %v2081 = vld [vmem:[#allocation14 + $0x70] sm:$0xff]
    %v2082 = vld [vmem:[#allocation14 + $0x78] sm:$0xff]
    %v2083 = vld [vmem:[#allocation14 + $0x80] sm:$0xff]
    %v2084 = vld [vmem:[#allocation14 + $0x88] sm:$0xff]
    %v2085 = vld [vmem:[#allocation14 + $0x90] sm:$0xff]
    %v2086 = vld [vmem:[#allocation14 + $0x98] sm:$0xff]
    %v2087 = vld [vmem:[#allocation14 + $0xa0] sm:$0xff]
    %v2088 = vld [vmem:[#allocation14 + $0xa8] sm:$0xff]
    %v2089 = vld [vmem:[#allocation14 + $0xb0] sm:$0xff]
    %v2090 = vld [vmem:[#allocation14 + $0xb8] sm:$0xff]
    %v2091 = vld [vmem:[#allocation14 + $0xc0] sm:$0xff]
    %v2092 = vld [vmem:[#allocation14 + $0xc8] sm:$0xff]
    %v2093 = vld [vmem:[#allocation14 + $0xd0] sm:$0xff]
    %v2094 = vld [vmem:[#allocation14 + $0xd8] sm:$0xff]
    %v2095 = vld [vmem:[#allocation14 + $0xe0] sm:$0xff]
    %v2096 = vld [vmem:[#allocation14 + $0xe8] sm:$0xff]
    %v2097 = vld [vmem:[#allocation14 + $0xf0] sm:$0xff]
    %v2098 = vld [vmem:[#allocation14 + $0xf8] sm:$0xff]
    %s2099 = scalar_lea.vmem [#allocation2], 8
    %v2100 = vld [vmem:[%s2099] sm:$0xff]
    %s2101 = scalar_lea.vmem [#allocation3], 8
    %v2102 = vld [vmem:[%s2101] sm:$0xff]
    %v2103 = vld [vmem:[#allocation4] sm:$0xff]
    %v2104 = vld [vmem:[#allocation4 + $0x8] sm:$0xff]
    %v2105 = vld [vmem:[#allocation4 + $0x10] sm:$0xff]
    %v2106 = vld [vmem:[#allocation4 + $0x18] sm:$0xff]
    %v2107 = vpack.c.bf16 %v2100, %v2100
    %v2140 = vunpack.c.l.b16 %v2067
    %v2141 = vunpack.c.h.b16 %v2067
    %v2142 = vunpack.c.l.b16 %v2068
    %v2143 = vunpack.c.h.b16 %v2068
    %v2144 = vunpack.c.l.b16 %v2069
    %v2145 = vunpack.c.h.b16 %v2069
    %v2146 = vunpack.c.l.b16 %v2070
    %v2147 = vunpack.c.h.b16 %v2070
    %v2148 = vunpack.c.l.b16 %v2071
    %v2149 = vunpack.c.h.b16 %v2071
    %v2150 = vunpack.c.l.b16 %v2072
    %v2151 = vunpack.c.h.b16 %v2072
    %v2152 = vunpack.c.l.b16 %v2073
    %v2153 = vunpack.c.h.b16 %v2073
    %v2154 = vunpack.c.l.b16 %v2074
    %v2155 = vunpack.c.h.b16 %v2074
    %v2156 = vunpack.c.l.b16 %v2075
    %v2157 = vunpack.c.h.b16 %v2075
    %v2158 = vunpack.c.l.b16 %v2076
    %v2159 = vunpack.c.h.b16 %v2076
    %v2160 = vunpack.c.l.b16 %v2077
    %v2161 = vunpack.c.h.b16 %v2077
    %v2162 = vunpack.c.l.b16 %v2078
    %v2163 = vunpack.c.h.b16 %v2078
    %v2164 = vunpack.c.l.b16 %v2079
    %v2165 = vunpack.c.h.b16 %v2079
    %v2166 = vunpack.c.l.b16 %v2080
    %v2167 = vunpack.c.h.b16 %v2080
    %v2168 = vunpack.c.l.b16 %v2081
    %v2169 = vunpack.c.h.b16 %v2081
    %v2170 = vunpack.c.l.b16 %v2082
    %v2171 = vunpack.c.h.b16 %v2082
    %v2172 = vunpack.c.l.b16 %v2083
    %v2173 = vunpack.c.h.b16 %v2083
    %v2174 = vunpack.c.l.b16 %v2084
    %v2175 = vunpack.c.h.b16 %v2084
    %v2176 = vunpack.c.l.b16 %v2085
    %v2177 = vunpack.c.h.b16 %v2085
    %v2178 = vunpack.c.l.b16 %v2086
    %v2179 = vunpack.c.h.b16 %v2086
    %v2180 = vunpack.c.l.b16 %v2087
    %v2181 = vunpack.c.h.b16 %v2087
    %v2182 = vunpack.c.l.b16 %v2088
    %v2183 = vunpack.c.h.b16 %v2088
    %v2184 = vunpack.c.l.b16 %v2089
    %v2185 = vunpack.c.h.b16 %v2089
    %v2186 = vunpack.c.l.b16 %v2090
    %v2187 = vunpack.c.h.b16 %v2090
    %v2188 = vunpack.c.l.b16 %v2091
    %v2189 = vunpack.c.h.b16 %v2091
    %v2190 = vunpack.c.l.b16 %v2092
    %v2191 = vunpack.c.h.b16 %v2092
    %v2192 = vunpack.c.l.b16 %v2093
    %v2193 = vunpack.c.h.b16 %v2093
    %v2194 = vunpack.c.l.b16 %v2094
    %v2195 = vunpack.c.h.b16 %v2094
    %v2196 = vunpack.c.l.b16 %v2095
    %v2197 = vunpack.c.h.b16 %v2095
    %v2198 = vunpack.c.l.b16 %v2096
    %v2199 = vunpack.c.h.b16 %v2096
    %v2200 = vunpack.c.l.b16 %v2097
    %v2201 = vunpack.c.h.b16 %v2097
    %v2202 = vunpack.c.l.b16 %v2098
    %v2203 = vunpack.c.h.b16 %v2098
    %v2204 = vpack.c.b16 %v2144, %v2140
    %v2205 = vpack.c.b16 %v2145, %v2141
    %v2206 = vpack.c.b16 %v2146, %v2142
    %v2207 = vpack.c.b16 %v2147, %v2143
    %v2208 = vpack.c.b16 %v2152, %v2148
    %v2209 = vpack.c.b16 %v2153, %v2149
    %v2210 = vpack.c.b16 %v2154, %v2150
    %v2211 = vpack.c.b16 %v2155, %v2151
    %v2212 = vpack.c.b16 %v2160, %v2156
    %v2213 = vpack.c.b16 %v2161, %v2157
    %v2214 = vpack.c.b16 %v2162, %v2158
    %v2215 = vpack.c.b16 %v2163, %v2159
    %v2216 = vpack.c.b16 %v2168, %v2164
    %v2217 = vpack.c.b16 %v2169, %v2165
    %v2218 = vpack.c.b16 %v2170, %v2166
    %v2219 = vpack.c.b16 %v2171, %v2167
    %v2220 = vpack.c.b16 %v2176, %v2172
    %v2221 = vpack.c.b16 %v2177, %v2173
    %v2222 = vpack.c.b16 %v2178, %v2174
    %v2223 = vpack.c.b16 %v2179, %v2175
    %v2224 = vpack.c.b16 %v2184, %v2180
    %v2225 = vpack.c.b16 %v2185, %v2181
    %v2226 = vpack.c.b16 %v2186, %v2182
    %v2227 = vpack.c.b16 %v2187, %v2183
    %v2228 = vpack.c.b16 %v2192, %v2188
    %v2229 = vpack.c.b16 %v2193, %v2189
    %v2230 = vpack.c.b16 %v2194, %v2190
    %v2231 = vpack.c.b16 %v2195, %v2191
    %v2232 = vpack.c.b16 %v2200, %v2196
    %v2233 = vpack.c.b16 %v2201, %v2197
    %v2234 = vpack.c.b16 %v2202, %v2198
    %v2235 = vpack.c.b16 %v2203, %v2199
    %2268 = vmatprep.subr.bf16.mxu0 %v2205
    %2269 = vmatpush1.bf16.msra.mxu0 %v2204
    %2270 = vmatprep.subr.bf16.mxu0 %v2209
    %2271 = vmatpush1.bf16.msra.mxu0 %v2208
    %2272 = vmatprep.subr.bf16.mxu0 %v2213
    %2273 = vmatpush1.bf16.msra.mxu0 %v2212
    %2274 = vmatprep.subr.bf16.mxu0 %v2217
    %2275 = vmatpush1.bf16.msra.mxu0 %v2216
    %2276 = vmatprep.subr.bf16.mxu0 %v2221
    %2277 = vmatpush1.bf16.msra.mxu0 %v2220
    %2278 = vmatprep.subr.bf16.mxu0 %v2225
    %2279 = vmatpush1.bf16.msra.mxu0 %v2224
    %2280 = vmatprep.subr.bf16.mxu0 %v2229
    %2281 = vmatpush1.bf16.msra.mxu0 %v2228
    %2282 = vmatprep.subr.bf16.mxu0 %v2233
    %2283 = vmatpush1.bf16.msra.mxu0 %v2232
    %2284 = vmatprep.subr.bf16.mxu0 0
    %2285 = vmatpush1.bf16.msra.mxu0 0
    %2286 = vmatprep.subr.bf16.mxu0 0
    %2287 = vmatpush1.bf16.msra.mxu0 0
    %2288 = vmatprep.subr.bf16.mxu0 0
    %2289 = vmatpush1.bf16.msra.mxu0 0
    %2290 = vmatprep.subr.bf16.mxu0 0
    %2291 = vmatpush1.bf16.msra.mxu0 0
    %2292 = vmatprep.subr.bf16.mxu0 0
    %2293 = vmatpush1.bf16.msra.mxu0 0
    %2294 = vmatprep.subr.bf16.mxu0 0
    %2295 = vmatpush1.bf16.msra.mxu0 0
    %2296 = vmatprep.subr.bf16.mxu0 0
    %2297 = vmatpush1.bf16.msra.mxu0 0
    %2298 = vmatprep.subr.bf16.mxu0 0
    %2299 = vmatpush1.bf16.msra.mxu0 0
    %2300 = vmatprep.mubr.bf16.mxu0 0
    %2301 = vmatmul.mubr.bf16.gmra.mrb[0].mxu0 %v2107
    %v2302 = vpop.f32.mrb[0].mxu0
    %v2303 = vadd.f32 0.0, %v2302
    %v2304 = vpop.f32.mrb[0].mxu0
    %v2305 = vadd.f32 0.0, %v2304
    %v2306 = vpop.f32.mrb[0].mxu0
    %v2307 = vpop.f32.mrb[0].mxu0
    %2308 = vdwg.mxu0
    %2309 = vmatprep.subr.bf16.mxu0 %v2207
    %2310 = vmatpush1.bf16.msra.mxu0 %v2206
    %2311 = vmatprep.subr.bf16.mxu0 %v2211
    %2312 = vmatpush1.bf16.msra.mxu0 %v2210
    %2313 = vmatprep.subr.bf16.mxu0 %v2215
    %2314 = vmatpush1.bf16.msra.mxu0 %v2214
    %2315 = vmatprep.subr.bf16.mxu0 %v2219
    %2316 = vmatpush1.bf16.msra.mxu0 %v2218
    %2317 = vmatprep.subr.bf16.mxu0 %v2223
    %2318 = vmatpush1.bf16.msra.mxu0 %v2222
    %2319 = vmatprep.subr.bf16.mxu0 %v2227
    %2320 = vmatpush1.bf16.msra.mxu0 %v2226
    %2321 = vmatprep.subr.bf16.mxu0 %v2231
    %2322 = vmatpush1.bf16.msra.mxu0 %v2230
    %2323 = vmatprep.subr.bf16.mxu0 %v2235
    %2324 = vmatpush1.bf16.msra.mxu0 %v2234
    %2325 = vmatprep.subr.bf16.mxu0 0
    %2326 = vmatpush1.bf16.msra.mxu0 0
    %2327 = vmatprep.subr.bf16.mxu0 0
    %2328 = vmatpush1.bf16.msra.mxu0 0
    %2329 = vmatprep.subr.bf16.mxu0 0
    %2330 = vmatpush1.bf16.msra.mxu0 0
    %2331 = vmatprep.subr.bf16.mxu0 0
    %2332 = vmatpush1.bf16.msra.mxu0 0
    %2333 = vmatprep.subr.bf16.mxu0 0
    %2334 = vmatpush1.bf16.msra.mxu0 0
    %2335 = vmatprep.subr.bf16.mxu0 0
    %2336 = vmatpush1.bf16.msra.mxu0 0
    %2337 = vmatprep.subr.bf16.mxu0 0
    %2338 = vmatpush1.bf16.msra.mxu0 0
    %2339 = vmatprep.subr.bf16.mxu0 0
    %2340 = vmatpush1.bf16.msra.mxu0 0
    %2341 = vmatprep.mubr.bf16.mxu0 0
    %2342 = vmatmul.mubr.bf16.gmra.mrb[0].mxu0 %v2107
    %v2343 = vpop.f32.mrb[0].mxu0
    %v2344 = vadd.f32 0.0, %v2343
    %v2345 = vpop.f32.mrb[0].mxu0
    %v2346 = vadd.f32 0.0, %v2345
    %v2347 = vpop.f32.mrb[0].mxu0
    %v2348 = vpop.f32.mrb[0].mxu0
    %2349 = vdwg.mxu0
    %v2350 = vadd.f32 %v2103, %v2303
    %v2351 = vadd.f32 %v2104, %v2305
    %v2352 = vadd.f32 %v2105, %v2344
    %v2353 = vadd.f32 %v2106, %v2346
    %v2354 = vsub.f32 0.0, %v2350
    %v2355 = vmul.f32 %v2354, 1.442695
    %v2356 = vpow.pop %v2355
    %v2357 = vadd.f32 %v2356, 1.0
    %v2358 = vrcp.pop %v2357
    %v2359 = vsub.f32 0.0, %v2351
    %v2360 = vmul.f32 %v2359, 1.442695
    %v2361 = vpow.pop %v2360
    %v2362 = vadd.f32 %v2361, 1.0
    %v2363 = vrcp.pop %v2362
    %v2364 = vtanh.pop %v2352
    %v2365 = vsub.f32 0.0, %v2353
    %v2366 = vmul.f32 %v2365, 1.442695
    %v2367 = vpow.pop %v2366
    %v2368 = vadd.f32 %v2367, 1.0
    %v2369 = vrcp.pop %v2368
    %v2370 = vmul.f32 %v2363, %v2102
    %v2371 = vmul.f32 %v2358, %v2364
    %v2372 = vadd.f32 %v2370, %v2371
    %v2373 = vtanh.pop %v2372
    %v2374 = vmul.f32 %v2369, %v2373
    %v2375 = vpack.c.bf16 %v2374, %v2374
    %2376 = vst [vmem:[#allocation5] sm:$0xf] %v2375
    %v2377 = vld [vmem:[%s836] sm:$0xff]
    %v2378 = vld [vmem:[%s836 + $0x8] sm:$0xff]
    %v2379 = vld [vmem:[%s836 + $0x10] sm:$0xff]
    %v2380 = vld [vmem:[%s836 + $0x18] sm:$0xff]
    %2381 = vmatprep.subr.bf16.mxu0 %v2205
    %2382 = vmatpush1.bf16.msra.mxu0 %v2204
    %2383 = vmatprep.subr.bf16.mxu0 %v2209
    %2384 = vmatpush1.bf16.msra.mxu0 %v2208
    %2385 = vmatprep.subr.bf16.mxu0 %v2213
    %2386 = vmatpush1.bf16.msra.mxu0 %v2212
    %2387 = vmatprep.subr.bf16.mxu0 %v2217
    %2388 = vmatpush1.bf16.msra.mxu0 %v2216
    %2389 = vmatprep.subr.bf16.mxu0 %v2221
    %2390 = vmatpush1.bf16.msra.mxu0 %v2220
    %2391 = vmatprep.subr.bf16.mxu0 %v2225
    %2392 = vmatpush1.bf16.msra.mxu0 %v2224
    %2393 = vmatprep.subr.bf16.mxu0 %v2229
    %2394 = vmatpush1.bf16.msra.mxu0 %v2228
    %2395 = vmatprep.subr.bf16.mxu0 %v2233
    %2396 = vmatpush1.bf16.msra.mxu0 %v2232
    %2397 = vmatprep.subr.bf16.mxu0 0
    %2398 = vmatpush1.bf16.msra.mxu0 0
    %2399 = vmatprep.subr.bf16.mxu0 0
    %2400 = vmatpush1.bf16.msra.mxu0 0
    %2401 = vmatprep.subr.bf16.mxu0 0
    %2402 = vmatpush1.bf16.msra.mxu0 0
    %2403 = vmatprep.subr.bf16.mxu0 0
    %2404 = vmatpush1.bf16.msra.mxu0 0
    %2405 = vmatprep.subr.bf16.mxu0 0
    %2406 = vmatpush1.bf16.msra.mxu0 0
    %2407 = vmatprep.subr.bf16.mxu0 0
    %2408 = vmatpush1.bf16.msra.mxu0 0
    %2409 = vmatprep.subr.bf16.mxu0 0
    %2410 = vmatpush1.bf16.msra.mxu0 0
    %2411 = vmatprep.subr.bf16.mxu0 0
    %2412 = vmatpush1.bf16.msra.mxu0 0
    %2413 = vmatprep.mubr.bf16.mxu0 0
    %2414 = vmatmul.mubr.bf16.gmra.mrb[0].mxu0 %v2375
    %v2415 = vpop.f32.mrb[0].mxu0
    %v2416 = vadd.f32 0.0, %v2415
    %v2417 = vpop.f32.mrb[0].mxu0
    %v2418 = vadd.f32 0.0, %v2417
    %v2419 = vpop.f32.mrb[0].mxu0
    %v2420 = vpop.f32.mrb[0].mxu0
    %2421 = vdwg.mxu0
    %2422 = vmatprep.subr.bf16.mxu0 %v2207
    %2423 = vmatpush1.bf16.msra.mxu0 %v2206
    %2424 = vmatprep.subr.bf16.mxu0 %v2211
    %2425 = vmatpush1.bf16.msra.mxu0 %v2210
    %2426 = vmatprep.subr.bf16.mxu0 %v2215
    %2427 = vmatpush1.bf16.msra.mxu0 %v2214
    %2428 = vmatprep.subr.bf16.mxu0 %v2219
    %2429 = vmatpush1.bf16.msra.mxu0 %v2218
    %2430 = vmatprep.subr.bf16.mxu0 %v2223
    %2431 = vmatpush1.bf16.msra.mxu0 %v2222
    %2432 = vmatprep.subr.bf16.mxu0 %v2227
    %2433 = vmatpush1.bf16.msra.mxu0 %v2226
    %2434 = vmatprep.subr.bf16.mxu0 %v2231
    %2435 = vmatpush1.bf16.msra.mxu0 %v2230
    %2436 = vmatprep.subr.bf16.mxu0 %v2235
    %2437 = vmatpush1.bf16.msra.mxu0 %v2234
    %2438 = vmatprep.subr.bf16.mxu0 0
    %2439 = vmatpush1.bf16.msra.mxu0 0
    %2440 = vmatprep.subr.bf16.mxu0 0
    %2441 = vmatpush1.bf16.msra.mxu0 0
    %2442 = vmatprep.subr.bf16.mxu0 0
    %2443 = vmatpush1.bf16.msra.mxu0 0
    %2444 = vmatprep.subr.bf16.mxu0 0
    %2445 = vmatpush1.bf16.msra.mxu0 0
    %2446 = vmatprep.subr.bf16.mxu0 0
    %2447 = vmatpush1.bf16.msra.mxu0 0
    %2448 = vmatprep.subr.bf16.mxu0 0
    %2449 = vmatpush1.bf16.msra.mxu0 0
    %2450 = vmatprep.subr.bf16.mxu0 0
    %2451 = vmatpush1.bf16.msra.mxu0 0
    %2452 = vmatprep.subr.bf16.mxu0 0
    %2453 = vmatpush1.bf16.msra.mxu0 0
    %2454 = vmatprep.mubr.bf16.mxu0 0
    %2455 = vmatmul.mubr.bf16.gmra.mrb[0].mxu0 %v2375
    %v2456 = vpop.f32.mrb[0].mxu0
    %v2457 = vadd.f32 0.0, %v2456
    %v2458 = vpop.f32.mrb[0].mxu0
    %v2459 = vadd.f32 0.0, %v2458
    %v2460 = vpop.f32.mrb[0].mxu0
    %v2461 = vpop.f32.mrb[0].mxu0
    %2462 = vdwg.mxu0
    %v2463 = vadd.f32 %v2377, %v2416
    %v2464 = vadd.f32 %v2378, %v2418
    %v2465 = vadd.f32 %v2379, %v2457
    %v2466 = vadd.f32 %v2380, %v2459
    %v2467 = vsub.f32 0.0, %v2463
    %v2468 = vmul.f32 %v2467, 1.442695
    %v2469 = vpow.pop %v2468
    %v2470 = vadd.f32 %v2469, 1.0
    %v2471 = vrcp.pop %v2470
    %v2472 = vsub.f32 0.0, %v2464
    %v2473 = vmul.f32 %v2472, 1.442695
    %v2474 = vpow.pop %v2473
    %v2475 = vadd.f32 %v2474, 1.0
    %v2476 = vrcp.pop %v2475
    %v2477 = vtanh.pop %v2465
    %v2478 = vsub.f32 0.0, %v2466
    %v2479 = vmul.f32 %v2478, 1.442695
    %v2480 = vpow.pop %v2479
    %v2481 = vadd.f32 %v2480, 1.0
    %v2482 = vrcp.pop %v2481
    %v2483 = vmul.f32 %v2476, %v2372
    %v2484 = vmul.f32 %v2471, %v2477
    %v2485 = vadd.f32 %v2483, %v2484
    %v2486 = vtanh.pop %v2485
    %v2487 = vmul.f32 %v2482, %v2486
    %v2488 = vpack.c.bf16 %v2487, %v2487
    %2489 = vst [vmem:[%s949] sm:$0xf] %v2488
    %v2490 = vld [vmem:[%s951] sm:$0xff]
    %v2491 = vld [vmem:[%s951 + $0x8] sm:$0xff]
    %v2492 = vld [vmem:[%s951 + $0x10] sm:$0xff]
    %v2493 = vld [vmem:[%s951 + $0x18] sm:$0xff]
    %2494 = vmatprep.subr.bf16.mxu0 %v2205
    %2495 = vmatpush1.bf16.msra.mxu0 %v2204
    %2496 = vmatprep.subr.bf16.mxu0 %v2209
    %2497 = vmatpush1.bf16.msra.mxu0 %v2208
    %2498 = vmatprep.subr.bf16.mxu0 %v2213
    %2499 = vmatpush1.bf16.msra.mxu0 %v2212
    %2500 = vmatprep.subr.bf16.mxu0 %v2217
    %2501 = vmatpush1.bf16.msra.mxu0 %v2216
    %2502 = vmatprep.subr.bf16.mxu0 %v2221
    %2503 = vmatpush1.bf16.msra.mxu0 %v2220
    %2504 = vmatprep.subr.bf16.mxu0 %v2225
    %2505 = vmatpush1.bf16.msra.mxu0 %v2224
    %2506 = vmatprep.subr.bf16.mxu0 %v2229
    %2507 = vmatpush1.bf16.msra.mxu0 %v2228
    %2508 = vmatprep.subr.bf16.mxu0 %v2233
    %2509 = vmatpush1.bf16.msra.mxu0 %v2232
    %2510 = vmatprep.subr.bf16.mxu0 0
    %2511 = vmatpush1.bf16.msra.mxu0 0
    %2512 = vmatprep.subr.bf16.mxu0 0
    %2513 = vmatpush1.bf16.msra.mxu0 0
    %2514 = vmatprep.subr.bf16.mxu0 0
    %2515 = vmatpush1.bf16.msra.mxu0 0
    %2516 = vmatprep.subr.bf16.mxu0 0
    %2517 = vmatpush1.bf16.msra.mxu0 0
    %2518 = vmatprep.subr.bf16.mxu0 0
    %2519 = vmatpush1.bf16.msra.mxu0 0
    %2520 = vmatprep.subr.bf16.mxu0 0
    %2521 = vmatpush1.bf16.msra.mxu0 0
    %2522 = vmatprep.subr.bf16.mxu0 0
    %2523 = vmatpush1.bf16.msra.mxu0 0
    %2524 = vmatprep.subr.bf16.mxu0 0
    %2525 = vmatpush1.bf16.msra.mxu0 0
    %2526 = vmatprep.mubr.bf16.mxu0 0
    %2527 = vmatmul.mubr.bf16.gmra.mrb[0].mxu0 %v2488
    %v2528 = vpop.f32.mrb[0].mxu0
    %v2529 = vadd.f32 0.0, %v2528
    %v2530 = vpop.f32.mrb[0].mxu0
    %v2531 = vadd.f32 0.0, %v2530
    %v2532 = vpop.f32.mrb[0].mxu0
    %v2533 = vpop.f32.mrb[0].mxu0
    %2534 = vdwg.mxu0
    %2535 = vmatprep.subr.bf16.mxu0 %v2207
    %2536 = vmatpush1.bf16.msra.mxu0 %v2206
    %2537 = vmatprep.subr.bf16.mxu0 %v2211
    %2538 = vmatpush1.bf16.msra.mxu0 %v2210
    %2539 = vmatprep.subr.bf16.mxu0 %v2215
    %2540 = vmatpush1.bf16.msra.mxu0 %v2214
    %2541 = vmatprep.subr.bf16.mxu0 %v2219
    %2542 = vmatpush1.bf16.msra.mxu0 %v2218
    %2543 = vmatprep.subr.bf16.mxu0 %v2223
    %2544 = vmatpush1.bf16.msra.mxu0 %v2222
    %2545 = vmatprep.subr.bf16.mxu0 %v2227
    %2546 = vmatpush1.bf16.msra.mxu0 %v2226
    %2547 = vmatprep.subr.bf16.mxu0 %v2231
    %2548 = vmatpush1.bf16.msra.mxu0 %v2230
    %2549 = vmatprep.subr.bf16.mxu0 %v2235
    %2550 = vmatpush1.bf16.msra.mxu0 %v2234
    %2551 = vmatprep.subr.bf16.mxu0 0
    %2552 = vmatpush1.bf16.msra.mxu0 0
    %2553 = vmatprep.subr.bf16.mxu0 0
    %2554 = vmatpush1.bf16.msra.mxu0 0
    %2555 = vmatprep.subr.bf16.mxu0 0
    %2556 = vmatpush1.bf16.msra.mxu0 0
    %2557 = vmatprep.subr.bf16.mxu0 0
    %2558 = vmatpush1.bf16.msra.mxu0 0
    %2559 = vmatprep.subr.bf16.mxu0 0
    %2560 = vmatpush1.bf16.msra.mxu0 0
    %2561 = vmatprep.subr.bf16.mxu0 0
    %2562 = vmatpush1.bf16.msra.mxu0 0
    %2563 = vmatprep.subr.bf16.mxu0 0
    %2564 = vmatpush1.bf16.msra.mxu0 0
    %2565 = vmatprep.subr.bf16.mxu0 0
    %2566 = vmatpush1.bf16.msra.mxu0 0
    %2567 = vmatprep.mubr.bf16.mxu0 0
    %2568 = vmatmul.mubr.bf16.gmra.mrb[0].mxu0 %v2488
    %v2569 = vpop.f32.mrb[0].mxu0
    %v2570 = vadd.f32 0.0, %v2569
    %v2571 = vpop.f32.mrb[0].mxu0
    %v2572 = vadd.f32 0.0, %v2571
    %v2573 = vpop.f32.mrb[0].mxu0
    %v2574 = vpop.f32.mrb[0].mxu0
    %2575 = vdwg.mxu0
    %v2576 = vadd.f32 %v2490, %v2529
    %v2577 = vadd.f32 %v2491, %v2531
    %v2578 = vadd.f32 %v2492, %v2570
    %v2579 = vadd.f32 %v2493, %v2572
    %v2580 = vsub.f32 0.0, %v2576
    %v2581 = vmul.f32 %v2580, 1.442695
    %v2582 = vpow.pop %v2581
    %v2583 = vadd.f32 %v2582, 1.0
    %v2584 = vrcp.pop %v2583
    %v2585 = vsub.f32 0.0, %v2577
    %v2586 = vmul.f32 %v2585, 1.442695
    %v2587 = vpow.pop %v2586
    %v2588 = vadd.f32 %v2587, 1.0
    %v2589 = vrcp.pop %v2588
    %v2590 = vtanh.pop %v2578
    %v2591 = vsub.f32 0.0, %v2579
    %v2592 = vmul.f32 %v2591, 1.442695
    %v2593 = vpow.pop %v2592
    %v2594 = vadd.f32 %v2593, 1.0
    %v2595 = vrcp.pop %v2594
    %v2596 = vmul.f32 %v2589, %v2485
    %v2597 = vmul.f32 %v2584, %v2590
    %v2598 = vadd.f32 %v2596, %v2597
    %v2599 = vtanh.pop %v2598
    %v2600 = vmul.f32 %v2595, %v2599
    %v2601 = vpack.c.bf16 %v2600, %v2600
    %2602 = vst [vmem:[%s1064] sm:$0xf] %v2601
    %v2603 = vld [vmem:[%s1066] sm:$0xff]
    %v2604 = vld [vmem:[%s1066 + $0x8] sm:$0xff]
    %v2605 = vld [vmem:[%s1066 + $0x10] sm:$0xff]
    %v2606 = vld [vmem:[%s1066 + $0x18] sm:$0xff]
    %2607 = vmatprep.subr.bf16.mxu0 %v2205
    %2608 = vmatpush1.bf16.msra.mxu0 %v2204
    %2609 = vmatprep.subr.bf16.mxu0 %v2209
    %2610 = vmatpush1.bf16.msra.mxu0 %v2208
    %2611 = vmatprep.subr.bf16.mxu0 %v2213
    %2612 = vmatpush1.bf16.msra.mxu0 %v2212
    %2613 = vmatprep.subr.bf16.mxu0 %v2217
    %2614 = vmatpush1.bf16.msra.mxu0 %v2216
    %2615 = vmatprep.subr.bf16.mxu0 %v2221
    %2616 = vmatpush1.bf16.msra.mxu0 %v2220
    %2617 = vmatprep.subr.bf16.mxu0 %v2225
    %2618 = vmatpush1.bf16.msra.mxu0 %v2224
    %2619 = vmatprep.subr.bf16.mxu0 %v2229
    %2620 = vmatpush1.bf16.msra.mxu0 %v2228
    %2621 = vmatprep.subr.bf16.mxu0 %v2233
    %2622 = vmatpush1.bf16.msra.mxu0 %v2232
    %2623 = vmatprep.subr.bf16.mxu0 0
    %2624 = vmatpush1.bf16.msra.mxu0 0
    %2625 = vmatprep.subr.bf16.mxu0 0
    %2626 = vmatpush1.bf16.msra.mxu0 0
    %2627 = vmatprep.subr.bf16.mxu0 0
    %2628 = vmatpush1.bf16.msra.mxu0 0
    %2629 = vmatprep.subr.bf16.mxu0 0
    %2630 = vmatpush1.bf16.msra.mxu0 0
    %2631 = vmatprep.subr.bf16.mxu0 0
    %2632 = vmatpush1.bf16.msra.mxu0 0
    %2633 = vmatprep.subr.bf16.mxu0 0
    %2634 = vmatpush1.bf16.msra.mxu0 0
    %2635 = vmatprep.subr.bf16.mxu0 0
    %2636 = vmatpush1.bf16.msra.mxu0 0
    %2637 = vmatprep.subr.bf16.mxu0 0
    %2638 = vmatpush1.bf16.msra.mxu0 0
    %2639 = vmatprep.mubr.bf16.mxu0 0
    %2640 = vmatmul.mubr.bf16.gmra.mrb[0].mxu0 %v2601
    %v2641 = vpop.f32.mrb[0].mxu0
    %v2642 = vadd.f32 0.0, %v2641
    %v2643 = vpop.f32.mrb[0].mxu0
    %v2644 = vadd.f32 0.0, %v2643
    %v2645 = vpop.f32.mrb[0].mxu0
    %v2646 = vpop.f32.mrb[0].mxu0
    %2647 = vdwg.mxu0
    %2648 = vmatprep.subr.bf16.mxu0 %v2207
    %2649 = vmatpush1.bf16.msra.mxu0 %v2206
    %2650 = vmatprep.subr.bf16.mxu0 %v2211
    %2651 = vmatpush1.bf16.msra.mxu0 %v2210
    %2652 = vmatprep.subr.bf16.mxu0 %v2215
    %2653 = vmatpush1.bf16.msra.mxu0 %v2214
    %2654 = vmatprep.subr.bf16.mxu0 %v2219
    %2655 = vmatpush1.bf16.msra.mxu0 %v2218
    %2656 = vmatprep.subr.bf16.mxu0 %v2223
    %2657 = vmatpush1.bf16.msra.mxu0 %v2222
    %2658 = vmatprep.subr.bf16.mxu0 %v2227
    %2659 = vmatpush1.bf16.msra.mxu0 %v2226
    %2660 = vmatprep.subr.bf16.mxu0 %v2231
    %2661 = vmatpush1.bf16.msra.mxu0 %v2230
    %2662 = vmatprep.subr.bf16.mxu0 %v2235
    %2663 = vmatpush1.bf16.msra.mxu0 %v2234
    %2664 = vmatprep.subr.bf16.mxu0 0
    %2665 = vmatpush1.bf16.msra.mxu0 0
    %2666 = vmatprep.subr.bf16.mxu0 0
    %2667 = vmatpush1.bf16.msra.mxu0 0
    %2668 = vmatprep.subr.bf16.mxu0 0
    %2669 = vmatpush1.bf16.msra.mxu0 0
    %2670 = vmatprep.subr.bf16.mxu0 0
    %2671 = vmatpush1.bf16.msra.mxu0 0
    %2672 = vmatprep.subr.bf16.mxu0 0
    %2673 = vmatpush1.bf16.msra.mxu0 0
    %2674 = vmatprep.subr.bf16.mxu0 0
    %2675 = vmatpush1.bf16.msra.mxu0 0
    %2676 = vmatprep.subr.bf16.mxu0 0
    %2677 = vmatpush1.bf16.msra.mxu0 0
    %2678 = vmatprep.subr.bf16.mxu0 0
    %2679 = vmatpush1.bf16.msra.mxu0 0
    %2680 = vmatprep.mubr.bf16.mxu0 0
    %2681 = vmatmul.mubr.bf16.gmra.mrb[0].mxu0 %v2601
    %v2682 = vpop.f32.mrb[0].mxu0
    %v2683 = vadd.f32 0.0, %v2682
    %v2684 = vpop.f32.mrb[0].mxu0
    %v2685 = vadd.f32 0.0, %v2684
    %v2686 = vpop.f32.mrb[0].mxu0
    %v2687 = vpop.f32.mrb[0].mxu0
    %2688 = vdwg.mxu0
    %v2689 = vadd.f32 %v2603, %v2642
    %v2690 = vadd.f32 %v2604, %v2644
    %v2691 = vadd.f32 %v2605, %v2683
    %v2692 = vadd.f32 %v2606, %v2685
    %v2693 = vsub.f32 0.0, %v2689
    %v2694 = vmul.f32 %v2693, 1.442695
    %v2695 = vpow.pop %v2694
    %v2696 = vadd.f32 %v2695, 1.0
    %v2697 = vrcp.pop %v2696
    %v2698 = vsub.f32 0.0, %v2690
    %v2699 = vmul.f32 %v2698, 1.442695
    %v2700 = vpow.pop %v2699
    %v2701 = vadd.f32 %v2700, 1.0
    %v2702 = vrcp.pop %v2701
    %v2703 = vtanh.pop %v2691
    %v2704 = vsub.f32 0.0, %v2692
    %v2705 = vmul.f32 %v2704, 1.442695
    %v2706 = vpow.pop %v2705
    %v2707 = vadd.f32 %v2706, 1.0
    %v2708 = vrcp.pop %v2707
    %v2709 = vmul.f32 %v2702, %v2598
    %v2710 = vmul.f32 %v2697, %v2703
    %v2711 = vadd.f32 %v2709, %v2710
    %v2712 = vtanh.pop %v2711
    %v2713 = vmul.f32 %v2708, %v2712
    %v2714 = vpack.c.bf16 %v2713, %v2713
    %2715 = vst [vmem:[%s1179] sm:$0xf] %v2714
    %v2716 = vld [vmem:[%s1181] sm:$0xff]
    %v2717 = vld [vmem:[%s1181 + $0x8] sm:$0xff]
    %v2718 = vld [vmem:[%s1181 + $0x10] sm:$0xff]
    %v2719 = vld [vmem:[%s1181 + $0x18] sm:$0xff]
    %2720 = vmatprep.subr.bf16.mxu0 %v2205
    %2721 = vmatpush1.bf16.msra.mxu0 %v2204
    %2722 = vmatprep.subr.bf16.mxu0 %v2209
    %2723 = vmatpush1.bf16.msra.mxu0 %v2208
    %2724 = vmatprep.subr.bf16.mxu0 %v2213
    %2725 = vmatpush1.bf16.msra.mxu0 %v2212
    %2726 = vmatprep.subr.bf16.mxu0 %v2217
    %2727 = vmatpush1.bf16.msra.mxu0 %v2216
    %2728 = vmatprep.subr.bf16.mxu0 %v2221
    %2729 = vmatpush1.bf16.msra.mxu0 %v2220
    %2730 = vmatprep.subr.bf16.mxu0 %v2225
    %2731 = vmatpush1.bf16.msra.mxu0 %v2224
    %2732 = vmatprep.subr.bf16.mxu0 %v2229
    %2733 = vmatpush1.bf16.msra.mxu0 %v2228
    %2734 = vmatprep.subr.bf16.mxu0 %v2233
    %2735 = vmatpush1.bf16.msra.mxu0 %v2232
    %2736 = vmatprep.subr.bf16.mxu0 0
    %2737 = vmatpush1.bf16.msra.mxu0 0
    %2738 = vmatprep.subr.bf16.mxu0 0
    %2739 = vmatpush1.bf16.msra.mxu0 0
    %2740 = vmatprep.subr.bf16.mxu0 0
    %2741 = vmatpush1.bf16.msra.mxu0 0
    %2742 = vmatprep.subr.bf16.mxu0 0
    %2743 = vmatpush1.bf16.msra.mxu0 0
    %2744 = vmatprep.subr.bf16.mxu0 0
    %2745 = vmatpush1.bf16.msra.mxu0 0
    %2746 = vmatprep.subr.bf16.mxu0 0
    %2747 = vmatpush1.bf16.msra.mxu0 0
    %2748 = vmatprep.subr.bf16.mxu0 0
    %2749 = vmatpush1.bf16.msra.mxu0 0
    %2750 = vmatprep.subr.bf16.mxu0 0
    %2751 = vmatpush1.bf16.msra.mxu0 0
    %2752 = vmatprep.mubr.bf16.mxu0 0
    %2753 = vmatmul.mubr.bf16.gmra.mrb[0].mxu0 %v2714
    %v2754 = vpop.f32.mrb[0].mxu0
    %v2755 = vadd.f32 0.0, %v2754
    %v2756 = vpop.f32.mrb[0].mxu0
    %v2757 = vadd.f32 0.0, %v2756
    %v2758 = vpop.f32.mrb[0].mxu0
    %v2759 = vpop.f32.mrb[0].mxu0
    %2760 = vdwg.mxu0
    %2761 = vmatprep.subr.bf16.mxu0 %v2207
    %2762 = vmatpush1.bf16.msra.mxu0 %v2206
    %2763 = vmatprep.subr.bf16.mxu0 %v2211
    %2764 = vmatpush1.bf16.msra.mxu0 %v2210
    %2765 = vmatprep.subr.bf16.mxu0 %v2215
    %2766 = vmatpush1.bf16.msra.mxu0 %v2214
    %2767 = vmatprep.subr.bf16.mxu0 %v2219
    %2768 = vmatpush1.bf16.msra.mxu0 %v2218
    %2769 = vmatprep.subr.bf16.mxu0 %v2223
    %2770 = vmatpush1.bf16.msra.mxu0 %v2222
    %2771 = vmatprep.subr.bf16.mxu0 %v2227
    %2772 = vmatpush1.bf16.msra.mxu0 %v2226
    %2773 = vmatprep.subr.bf16.mxu0 %v2231
    %2774 = vmatpush1.bf16.msra.mxu0 %v2230
    %2775 = vmatprep.subr.bf16.mxu0 %v2235
    %2776 = vmatpush1.bf16.msra.mxu0 %v2234
    %2777 = vmatprep.subr.bf16.mxu0 0
    %2778 = vmatpush1.bf16.msra.mxu0 0
    %2779 = vmatprep.subr.bf16.mxu0 0
    %2780 = vmatpush1.bf16.msra.mxu0 0
    %2781 = vmatprep.subr.bf16.mxu0 0
    %2782 = vmatpush1.bf16.msra.mxu0 0
    %2783 = vmatprep.subr.bf16.mxu0 0
    %2784 = vmatpush1.bf16.msra.mxu0 0
    %2785 = vmatprep.subr.bf16.mxu0 0
    %2786 = vmatpush1.bf16.msra.mxu0 0
    %2787 = vmatprep.subr.bf16.mxu0 0
    %2788 = vmatpush1.bf16.msra.mxu0 0
    %2789 = vmatprep.subr.bf16.mxu0 0
    %2790 = vmatpush1.bf16.msra.mxu0 0
    %2791 = vmatprep.subr.bf16.mxu0 0
    %2792 = vmatpush1.bf16.msra.mxu0 0
    %2793 = vmatprep.mubr.bf16.mxu0 0
    %2794 = vmatmul.mubr.bf16.gmra.mrb[0].mxu0 %v2714
    %v2795 = vpop.f32.mrb[0].mxu0
    %v2796 = vadd.f32 0.0, %v2795
    %v2797 = vpop.f32.mrb[0].mxu0
    %v2798 = vadd.f32 0.0, %v2797
    %v2799 = vpop.f32.mrb[0].mxu0
    %v2800 = vpop.f32.mrb[0].mxu0
    %2801 = vdwg.mxu0
    %v2802 = vadd.f32 %v2716, %v2755
    %v2803 = vadd.f32 %v2717, %v2757
    %v2804 = vadd.f32 %v2718, %v2796
    %v2805 = vadd.f32 %v2719, %v2798
    %v2806 = vsub.f32 0.0, %v2802
    %v2807 = vmul.f32 %v2806, 1.442695
    %v2808 = vpow.pop %v2807
    %v2809 = vadd.f32 %v2808, 1.0
    %v2810 = vrcp.pop %v2809
    %v2811 = vsub.f32 0.0, %v2803
    %v2812 = vmul.f32 %v2811, 1.442695
    %v2813 = vpow.pop %v2812
    %v2814 = vadd.f32 %v2813, 1.0
    %v2815 = vrcp.pop %v2814
    %v2816 = vtanh.pop %v2804
    %v2817 = vsub.f32 0.0, %v2805
    %v2818 = vmul.f32 %v2817, 1.442695
    %v2819 = vpow.pop %v2818
    %v2820 = vadd.f32 %v2819, 1.0
    %v2821 = vrcp.pop %v2820
    %v2822 = vmul.f32 %v2815, %v2711
    %v2823 = vmul.f32 %v2810, %v2816
    %v2824 = vadd.f32 %v2822, %v2823
    %v2825 = vtanh.pop %v2824
    %v2826 = vmul.f32 %v2821, %v2825
    %v2827 = vpack.c.bf16 %v2826, %v2826
    %2828 = vst [vmem:[%s1294] sm:$0xf] %v2827
    %v2829 = vld [vmem:[%s1296] sm:$0xff]
    %v2830 = vld [vmem:[%s1296 + $0x8] sm:$0xff]
    %v2831 = vld [vmem:[%s1296 + $0x10] sm:$0xff]
    %v2832 = vld [vmem:[%s1296 + $0x18] sm:$0xff]
    %2833 = vmatprep.subr.bf16.mxu0 %v2205
    %2834 = vmatpush1.bf16.msra.mxu0 %v2204
    %2835 = vmatprep.subr.bf16.mxu0 %v2209
    %2836 = vmatpush1.bf16.msra.mxu0 %v2208
    %2837 = vmatprep.subr.bf16.mxu0 %v2213
    %2838 = vmatpush1.bf16.msra.mxu0 %v2212
    %2839 = vmatprep.subr.bf16.mxu0 %v2217
    %2840 = vmatpush1.bf16.msra.mxu0 %v2216
    %2841 = vmatprep.subr.bf16.mxu0 %v2221
    %2842 = vmatpush1.bf16.msra.mxu0 %v2220
    %2843 = vmatprep.subr.bf16.mxu0 %v2225
    %2844 = vmatpush1.bf16.msra.mxu0 %v2224
    %2845 = vmatprep.subr.bf16.mxu0 %v2229
    %2846 = vmatpush1.bf16.msra.mxu0 %v2228
    %2847 = vmatprep.subr.bf16.mxu0 %v2233
    %2848 = vmatpush1.bf16.msra.mxu0 %v2232
    %2849 = vmatprep.subr.bf16.mxu0 0
    %2850 = vmatpush1.bf16.msra.mxu0 0
    %2851 = vmatprep.subr.bf16.mxu0 0
    %2852 = vmatpush1.bf16.msra.mxu0 0
    %2853 = vmatprep.subr.bf16.mxu0 0
    %2854 = vmatpush1.bf16.msra.mxu0 0
    %2855 = vmatprep.subr.bf16.mxu0 0
    %2856 = vmatpush1.bf16.msra.mxu0 0
    %2857 = vmatprep.subr.bf16.mxu0 0
    %2858 = vmatpush1.bf16.msra.mxu0 0
    %2859 = vmatprep.subr.bf16.mxu0 0
    %2860 = vmatpush1.bf16.msra.mxu0 0
    %2861 = vmatprep.subr.bf16.mxu0 0
    %2862 = vmatpush1.bf16.msra.mxu0 0
    %2863 = vmatprep.subr.bf16.mxu0 0
    %2864 = vmatpush1.bf16.msra.mxu0 0
    %2865 = vmatprep.mubr.bf16.mxu0 0
    %2866 = vmatmul.mubr.bf16.gmra.mrb[0].mxu0 %v2827
    %v2867 = vpop.f32.mrb[0].mxu0
    %v2868 = vadd.f32 0.0, %v2867
    %v2869 = vpop.f32.mrb[0].mxu0
    %v2870 = vadd.f32 0.0, %v2869
    %v2871 = vpop.f32.mrb[0].mxu0
    %v2872 = vpop.f32.mrb[0].mxu0
    %2873 = vdwg.mxu0
    %2874 = vmatprep.subr.bf16.mxu0 %v2207
    %2875 = vmatpush1.bf16.msra.mxu0 %v2206
    %2876 = vmatprep.subr.bf16.mxu0 %v2211
    %2877 = vmatpush1.bf16.msra.mxu0 %v2210
    %2878 = vmatprep.subr.bf16.mxu0 %v2215
    %2879 = vmatpush1.bf16.msra.mxu0 %v2214
    %2880 = vmatprep.subr.bf16.mxu0 %v2219
    %2881 = vmatpush1.bf16.msra.mxu0 %v2218
    %2882 = vmatprep.subr.bf16.mxu0 %v2223
    %2883 = vmatpush1.bf16.msra.mxu0 %v2222
    %2884 = vmatprep.subr.bf16.mxu0 %v2227
    %2885 = vmatpush1.bf16.msra.mxu0 %v2226
    %2886 = vmatprep.subr.bf16.mxu0 %v2231
    %2887 = vmatpush1.bf16.msra.mxu0 %v2230
    %2888 = vmatprep.subr.bf16.mxu0 %v2235
    %2889 = vmatpush1.bf16.msra.mxu0 %v2234
    %2890 = vmatprep.subr.bf16.mxu0 0
    %2891 = vmatpush1.bf16.msra.mxu0 0
    %2892 = vmatprep.subr.bf16.mxu0 0
    %2893 = vmatpush1.bf16.msra.mxu0 0
    %2894 = vmatprep.subr.bf16.mxu0 0
    %2895 = vmatpush1.bf16.msra.mxu0 0
    %2896 = vmatprep.subr.bf16.mxu0 0
    %2897 = vmatpush1.bf16.msra.mxu0 0
    %2898 = vmatprep.subr.bf16.mxu0 0
    %2899 = vmatpush1.bf16.msra.mxu0 0
    %2900 = vmatprep.subr.bf16.mxu0 0
    %2901 = vmatpush1.bf16.msra.mxu0 0
    %2902 = vmatprep.subr.bf16.mxu0 0
    %2903 = vmatpush1.bf16.msra.mxu0 0
    %2904 = vmatprep.subr.bf16.mxu0 0
    %2905 = vmatpush1.bf16.msra.mxu0 0
    %2906 = vmatprep.mubr.bf16.mxu0 0
    %2907 = vmatmul.mubr.bf16.gmra.mrb[0].mxu0 %v2827
    %v2908 = vpop.f32.mrb[0].mxu0
    %v2909 = vadd.f32 0.0, %v2908
    %v2910 = vpop.f32.mrb[0].mxu0
    %v2911 = vadd.f32 0.0, %v2910
    %v2912 = vpop.f32.mrb[0].mxu0
    %v2913 = vpop.f32.mrb[0].mxu0
    %2914 = vdwg.mxu0
    %v2915 = vadd.f32 %v2829, %v2868
    %v2916 = vadd.f32 %v2830, %v2870
    %v2917 = vadd.f32 %v2831, %v2909
    %v2918 = vadd.f32 %v2832, %v2911
    %v2919 = vsub.f32 0.0, %v2915
    %v2920 = vmul.f32 %v2919, 1.442695
    %v2921 = vpow.pop %v2920
    %v2922 = vadd.f32 %v2921, 1.0
    %v2923 = vrcp.pop %v2922
    %v2924 = vsub.f32 0.0, %v2916
    %v2925 = vmul.f32 %v2924, 1.442695
    %v2926 = vpow.pop %v2925
    %v2927 = vadd.f32 %v2926, 1.0
    %v2928 = vrcp.pop %v2927
    %v2929 = vtanh.pop %v2917
    %v2930 = vsub.f32 0.0, %v2918
    %v2931 = vmul.f32 %v2930, 1.442695
    %v2932 = vpow.pop %v2931
    %v2933 = vadd.f32 %v2932, 1.0
    %v2934 = vrcp.pop %v2933
    %v2935 = vmul.f32 %v2928, %v2824
    %v2936 = vmul.f32 %v2923, %v2929
    %v2937 = vadd.f32 %v2935, %v2936
    %v2938 = vtanh.pop %v2937
    %v2939 = vmul.f32 %v2934, %v2938
    %v2940 = vpack.c.bf16 %v2939, %v2939
    %2941 = vst [vmem:[%s1409] sm:$0xf] %v2940
    %v2942 = vld [vmem:[%s1411] sm:$0xff]
    %v2943 = vld [vmem:[%s1411 + $0x8] sm:$0xff]
    %v2944 = vld [vmem:[%s1411 + $0x10] sm:$0xff]
    %v2945 = vld [vmem:[%s1411 + $0x18] sm:$0xff]
    %2946 = vmatprep.subr.bf16.mxu0 %v2205
    %2947 = vmatpush1.bf16.msra.mxu0 %v2204
    %2948 = vmatprep.subr.bf16.mxu0 %v2209
    %2949 = vmatpush1.bf16.msra.mxu0 %v2208
    %2950 = vmatprep.subr.bf16.mxu0 %v2213
    %2951 = vmatpush1.bf16.msra.mxu0 %v2212
    %2952 = vmatprep.subr.bf16.mxu0 %v2217
    %2953 = vmatpush1.bf16.msra.mxu0 %v2216
    %2954 = vmatprep.subr.bf16.mxu0 %v2221
    %2955 = vmatpush1.bf16.msra.mxu0 %v2220
    %2956 = vmatprep.subr.bf16.mxu0 %v2225
    %2957 = vmatpush1.bf16.msra.mxu0 %v2224
    %2958 = vmatprep.subr.bf16.mxu0 %v2229
    %2959 = vmatpush1.bf16.msra.mxu0 %v2228
    %2960 = vmatprep.subr.bf16.mxu0 %v2233
    %2961 = vmatpush1.bf16.msra.mxu0 %v2232
    %2962 = vmatprep.subr.bf16.mxu0 0
    %2963 = vmatpush1.bf16.msra.mxu0 0
    %2964 = vmatprep.subr.bf16.mxu0 0
    %2965 = vmatpush1.bf16.msra.mxu0 0
    %2966 = vmatprep.subr.bf16.mxu0 0
    %2967 = vmatpush1.bf16.msra.mxu0 0
    %2968 = vmatprep.subr.bf16.mxu0 0
    %2969 = vmatpush1.bf16.msra.mxu0 0
    %2970 = vmatprep.subr.bf16.mxu0 0
    %2971 = vmatpush1.bf16.msra.mxu0 0
    %2972 = vmatprep.subr.bf16.mxu0 0
    %2973 = vmatpush1.bf16.msra.mxu0 0
    %2974 = vmatprep.subr.bf16.mxu0 0
    %2975 = vmatpush1.bf16.msra.mxu0 0
    %2976 = vmatprep.subr.bf16.mxu0 0
    %2977 = vmatpush1.bf16.msra.mxu0 0
    %2978 = vmatprep.mubr.bf16.mxu0 0
    %2979 = vmatmul.mubr.bf16.gmra.mrb[0].mxu0 %v2940
    %v2980 = vpop.f32.mrb[0].mxu0
    %v2981 = vadd.f32 0.0, %v2980
    %v2982 = vpop.f32.mrb[0].mxu0
    %v2983 = vadd.f32 0.0, %v2982
    %v2984 = vpop.f32.mrb[0].mxu0
    %v2985 = vpop.f32.mrb[0].mxu0
    %2986 = vdwg.mxu0
    %2987 = vmatprep.subr.bf16.mxu0 %v2207
    %2988 = vmatpush1.bf16.msra.mxu0 %v2206
    %2989 = vmatprep.subr.bf16.mxu0 %v2211
    %2990 = vmatpush1.bf16.msra.mxu0 %v2210
    %2991 = vmatprep.subr.bf16.mxu0 %v2215
    %2992 = vmatpush1.bf16.msra.mxu0 %v2214
    %2993 = vmatprep.subr.bf16.mxu0 %v2219
    %2994 = vmatpush1.bf16.msra.mxu0 %v2218
    %2995 = vmatprep.subr.bf16.mxu0 %v2223
    %2996 = vmatpush1.bf16.msra.mxu0 %v2222
    %2997 = vmatprep.subr.bf16.mxu0 %v2227
    %2998 = vmatpush1.bf16.msra.mxu0 %v2226
    %2999 = vmatprep.subr.bf16.mxu0 %v2231
    %3000 = vmatpush1.bf16.msra.mxu0 %v2230
    %3001 = vmatprep.subr.bf16.mxu0 %v2235
    %3002 = vmatpush1.bf16.msra.mxu0 %v2234
    %3003 = vmatprep.subr.bf16.mxu0 0
    %3004 = vmatpush1.bf16.msra.mxu0 0
    %3005 = vmatprep.subr.bf16.mxu0 0
    %3006 = vmatpush1.bf16.msra.mxu0 0
    %3007 = vmatprep.subr.bf16.mxu0 0
    %3008 = vmatpush1.bf16.msra.mxu0 0
    %3009 = vmatprep.subr.bf16.mxu0 0
    %3010 = vmatpush1.bf16.msra.mxu0 0
    %3011 = vmatprep.subr.bf16.mxu0 0
    %3012 = vmatpush1.bf16.msra.mxu0 0
    %3013 = vmatprep.subr.bf16.mxu0 0
    %3014 = vmatpush1.bf16.msra.mxu0 0
    %3015 = vmatprep.subr.bf16.mxu0 0
    %3016 = vmatpush1.bf16.msra.mxu0 0
    %3017 = vmatprep.subr.bf16.mxu0 0
    %3018 = vmatpush1.bf16.msra.mxu0 0
    %3019 = vmatprep.mubr.bf16.mxu0 0
    %3020 = vmatmul.mubr.bf16.gmra.mrb[0].mxu0 %v2940
    %v3021 = vpop.f32.mrb[0].mxu0
    %v3022 = vadd.f32 0.0, %v3021
    %v3023 = vpop.f32.mrb[0].mxu0
    %v3024 = vadd.f32 0.0, %v3023
    %v3025 = vpop.f32.mrb[0].mxu0
    %v3026 = vpop.f32.mrb[0].mxu0
    %3027 = vdwg.mxu0
    %v3028 = vadd.f32 %v2942, %v2981
    %v3029 = vadd.f32 %v2943, %v2983
    %v3030 = vadd.f32 %v2944, %v3022
    %v3031 = vadd.f32 %v2945, %v3024
    %v3032 = vsub.f32 0.0, %v3028
    %v3033 = vmul.f32 %v3032, 1.442695
    %v3034 = vpow.pop %v3033
    %v3035 = vadd.f32 %v3034, 1.0
    %v3036 = vrcp.pop %v3035
    %v3037 = vsub.f32 0.0, %v3029
    %v3038 = vmul.f32 %v3037, 1.442695
    %v3039 = vpow.pop %v3038
    %v3040 = vadd.f32 %v3039, 1.0
    %v3041 = vrcp.pop %v3040
    %v3042 = vtanh.pop %v3030
    %v3043 = vsub.f32 0.0, %v3031
    %v3044 = vmul.f32 %v3043, 1.442695
    %v3045 = vpow.pop %v3044
    %v3046 = vadd.f32 %v3045, 1.0
    %v3047 = vrcp.pop %v3046
    %v3048 = vmul.f32 %v3041, %v2937
    %v3049 = vmul.f32 %v3036, %v3042
    %v3050 = vadd.f32 %v3048, %v3049
    %v3051 = vtanh.pop %v3050
    %v3052 = vmul.f32 %v3047, %v3051
    %v3053 = vpack.c.bf16 %v3052, %v3052
    %3054 = vst [vmem:[%s1524] sm:$0xf] %v3053
    %v3055 = vld [vmem:[%s1526] sm:$0xff]
    %v3056 = vld [vmem:[%s1526 + $0x8] sm:$0xff]
    %v3057 = vld [vmem:[%s1526 + $0x10] sm:$0xff]
    %v3058 = vld [vmem:[%s1526 + $0x18] sm:$0xff]
    %3059 = vmatprep.subr.bf16.mxu0 %v2205
    %3060 = vmatpush1.bf16.msra.mxu0 %v2204
    %3061 = vmatprep.subr.bf16.mxu0 %v2209
    %3062 = vmatpush1.bf16.msra.mxu0 %v2208
    %3063 = vmatprep.subr.bf16.mxu0 %v2213
    %3064 = vmatpush1.bf16.msra.mxu0 %v2212
    %3065 = vmatprep.subr.bf16.mxu0 %v2217
    %3066 = vmatpush1.bf16.msra.mxu0 %v2216
    %3067 = vmatprep.subr.bf16.mxu0 %v2221
    %3068 = vmatpush1.bf16.msra.mxu0 %v2220
    %3069 = vmatprep.subr.bf16.mxu0 %v2225
    %3070 = vmatpush1.bf16.msra.mxu0 %v2224
    %3071 = vmatprep.subr.bf16.mxu0 %v2229
    %3072 = vmatpush1.bf16.msra.mxu0 %v2228
    %3073 = vmatprep.subr.bf16.mxu0 %v2233
    %3074 = vmatpush1.bf16.msra.mxu0 %v2232
    %3075 = vmatprep.subr.bf16.mxu0 0
    %3076 = vmatpush1.bf16.msra.mxu0 0
    %3077 = vmatprep.subr.bf16.mxu0 0
    %3078 = vmatpush1.bf16.msra.mxu0 0
    %3079 = vmatprep.subr.bf16.mxu0 0
    %3080 = vmatpush1.bf16.msra.mxu0 0
    %3081 = vmatprep.subr.bf16.mxu0 0
    %3082 = vmatpush1.bf16.msra.mxu0 0
    %3083 = vmatprep.subr.bf16.mxu0 0
    %3084 = vmatpush1.bf16.msra.mxu0 0
    %3085 = vmatprep.subr.bf16.mxu0 0
    %3086 = vmatpush1.bf16.msra.mxu0 0
    %3087 = vmatprep.subr.bf16.mxu0 0
    %3088 = vmatpush1.bf16.msra.mxu0 0
    %3089 = vmatprep.subr.bf16.mxu0 0
    %3090 = vmatpush1.bf16.msra.mxu0 0
    %3091 = vmatprep.mubr.bf16.mxu0 0
    %3092 = vmatmul.mubr.bf16.gmra.mrb[0].mxu0 %v3053
    %v3093 = vpop.f32.mrb[0].mxu0
    %v3094 = vadd.f32 0.0, %v3093
    %v3095 = vpop.f32.mrb[0].mxu0
    %v3096 = vadd.f32 0.0, %v3095
    %v3097 = vpop.f32.mrb[0].mxu0
    %v3098 = vpop.f32.mrb[0].mxu0
    %3099 = vdwg.mxu0
    %3100 = vmatprep.subr.bf16.mxu0 %v2207
    %3101 = vmatpush1.bf16.msra.mxu0 %v2206
    %3102 = vmatprep.subr.bf16.mxu0 %v2211
    %3103 = vmatpush1.bf16.msra.mxu0 %v2210
    %3104 = vmatprep.subr.bf16.mxu0 %v2215
    %3105 = vmatpush1.bf16.msra.mxu0 %v2214
    %3106 = vmatprep.subr.bf16.mxu0 %v2219
    %3107 = vmatpush1.bf16.msra.mxu0 %v2218
    %3108 = vmatprep.subr.bf16.mxu0 %v2223
    %3109 = vmatpush1.bf16.msra.mxu0 %v2222
    %3110 = vmatprep.subr.bf16.mxu0 %v2227
    %3111 = vmatpush1.bf16.msra.mxu0 %v2226
    %3112 = vmatprep.subr.bf16.mxu0 %v2231
    %3113 = vmatpush1.bf16.msra.mxu0 %v2230
    %3114 = vmatprep.subr.bf16.mxu0 %v2235
    %3115 = vmatpush1.bf16.msra.mxu0 %v2234
    %3116 = vmatprep.subr.bf16.mxu0 0
    %3117 = vmatpush1.bf16.msra.mxu0 0
    %3118 = vmatprep.subr.bf16.mxu0 0
    %3119 = vmatpush1.bf16.msra.mxu0 0
    %3120 = vmatprep.subr.bf16.mxu0 0
    %3121 = vmatpush1.bf16.msra.mxu0 0
    %3122 = vmatprep.subr.bf16.mxu0 0
    %3123 = vmatpush1.bf16.msra.mxu0 0
    %3124 = vmatprep.subr.bf16.mxu0 0
    %3125 = vmatpush1.bf16.msra.mxu0 0
    %3126 = vmatprep.subr.bf16.mxu0 0
    %3127 = vmatpush1.bf16.msra.mxu0 0
    %3128 = vmatprep.subr.bf16.mxu0 0
    %3129 = vmatpush1.bf16.msra.mxu0 0
    %3130 = vmatprep.subr.bf16.mxu0 0
    %3131 = vmatpush1.bf16.msra.mxu0 0
    %3132 = vmatprep.mubr.bf16.mxu0 0
    %3133 = vmatmul.mubr.bf16.gmra.mrb[0].mxu0 %v3053
    %v3134 = vpop.f32.mrb[0].mxu0
    %v3135 = vadd.f32 0.0, %v3134
    %v3136 = vpop.f32.mrb[0].mxu0
    %v3137 = vadd.f32 0.0, %v3136
    %v3138 = vpop.f32.mrb[0].mxu0
    %v3139 = vpop.f32.mrb[0].mxu0
    %3140 = vdwg.mxu0
    %v3141 = vadd.f32 %v3055, %v3094
    %v3142 = vadd.f32 %v3056, %v3096
    %v3143 = vadd.f32 %v3057, %v3135
    %v3144 = vadd.f32 %v3058, %v3137
    %v3145 = vsub.f32 0.0, %v3141
    %v3146 = vmul.f32 %v3145, 1.442695
    %v3147 = vpow.pop %v3146
    %v3148 = vadd.f32 %v3147, 1.0
    %v3149 = vrcp.pop %v3148
    %v3150 = vsub.f32 0.0, %v3142
    %v3151 = vmul.f32 %v3150, 1.442695
    %v3152 = vpow.pop %v3151
    %v3153 = vadd.f32 %v3152, 1.0
    %v3154 = vrcp.pop %v3153
    %v3155 = vtanh.pop %v3143
    %v3156 = vsub.f32 0.0, %v3144
    %v3157 = vmul.f32 %v3156, 1.442695
    %v3158 = vpow.pop %v3157
    %v3159 = vadd.f32 %v3158, 1.0
    %v3160 = vrcp.pop %v3159
    %v3161 = vmul.f32 %v3154, %v3050
    %v3162 = vmul.f32 %v3149, %v3155
    %v3163 = vadd.f32 %v3161, %v3162
    %v3164 = vtanh.pop %v3163
    %v3165 = vmul.f32 %v3160, %v3164
    %v3166 = vpack.c.bf16 %v3165, %v3165
    %3167 = vst [vmem:[%s1639] sm:$0xf] %v3166
    %3168 = vst [vmem:[%s2099] sm:$0xff] %v3165
    %3169 = vst [vmem:[%s2101] sm:$0xff] %v3163
    %v3170 = vld [vmem:[#allocation5] sm:$0xf]
    %v3171 = vld [vmem:[#allocation5 + $0x4] sm:$0xf]
    %v3172 = vld [vmem:[#allocation5 + $0x8] sm:$0xf]
    %v3173 = vld [vmem:[#allocation5 + $0xc] sm:$0xf]
    %v3174 = vld [vmem:[#allocation5 + $0x10] sm:$0xf]
    %v3175 = vld [vmem:[#allocation5 + $0x14] sm:$0xf]
    %v3176 = vld [vmem:[#allocation5 + $0x18] sm:$0xf]
    %v3177 = vld [vmem:[#allocation5 + $0x1c] sm:$0xf]
    %v3178 = vunpack.c.l.bf16 %v3170
    %v3179 = vunpack.c.l.bf16 %v3171
    %v3180 = vunpack.c.l.bf16 %v3172
    %v3181 = vunpack.c.l.bf16 %v3173
    %v3182 = vunpack.c.l.bf16 %v3174
    %v3183 = vunpack.c.l.bf16 %v3175
    %v3184 = vunpack.c.l.bf16 %v3176
    %v3185 = vunpack.c.l.bf16 %v3177
    %v3186 = vxor.u32 %v3178, 2147483648
    %v3187 = vxor.u32 %v3179, 2147483648
    %v3188 = vxor.u32 %v3180, 2147483648
    %v3189 = vxor.u32 %v3181, 2147483648
    %v3190 = vxor.u32 %v3182, 2147483648
    %v3191 = vxor.u32 %v3183, 2147483648
    %v3192 = vxor.u32 %v3184, 2147483648
    %v3193 = vxor.u32 %v3185, 2147483648
    %v3194 = vmul.f32 %v3186, 1.442695
    %v3195 = vpow.pop %v3194
    %v3196 = vmul.f32 %v3187, 1.442695
    %v3197 = vpow.pop %v3196
    %v3198 = vmul.f32 %v3188, 1.442695
    %v3199 = vpow.pop %v3198
    %v3200 = vmul.f32 %v3189, 1.442695
    %v3201 = vpow.pop %v3200
    %v3202 = vmul.f32 %v3190, 1.442695
    %v3203 = vpow.pop %v3202
    %v3204 = vmul.f32 %v3191, 1.442695
    %v3205 = vpow.pop %v3204
    %v3206 = vmul.f32 %v3192, 1.442695
    %v3207 = vpow.pop %v3206
    %v3208 = vmul.f32 %v3193, 1.442695
    %v3209 = vpow.pop %v3208
    %v3210 = vadd.f32 %v3195, 1.0
    %v3211 = vadd.f32 %v3197, 1.0
    %v3212 = vadd.f32 %v3199, 1.0
    %v3213 = vadd.f32 %v3201, 1.0
    %v3214 = vadd.f32 %v3203, 1.0
    %v3215 = vadd.f32 %v3205, 1.0
    %v3216 = vadd.f32 %v3207, 1.0
    %v3217 = vadd.f32 %v3209, 1.0
    %v3218 = vrcp.pop %v3210
    %v3219 = vmul.f32 1.0, %v3218
    %v3220 = vrcp.pop %v3211
    %v3221 = vmul.f32 1.0, %v3220
    %v3222 = vrcp.pop %v3212
    %v3223 = vmul.f32 1.0, %v3222
    %v3224 = vrcp.pop %v3213
    %v3225 = vmul.f32 1.0, %v3224
    %v3226 = vrcp.pop %v3214
    %v3227 = vmul.f32 1.0, %v3226
    %v3228 = vrcp.pop %v3215
    %v3229 = vmul.f32 1.0, %v3228
    %v3230 = vrcp.pop %v3216
    %v3231 = vmul.f32 1.0, %v3230
    %v3232 = vrcp.pop %v3217
    %v3233 = vmul.f32 1.0, %v3232
    %v3234 = vpack.c.bf16 %v3219, %v3219
    %v3235 = vpack.c.bf16 %v3221, %v3221
    %v3236 = vpack.c.bf16 %v3223, %v3223
    %v3237 = vpack.c.bf16 %v3225, %v3225
    %v3238 = vpack.c.bf16 %v3227, %v3227
    %v3239 = vpack.c.bf16 %v3229, %v3229
    %v3240 = vpack.c.bf16 %v3231, %v3231
    %v3241 = vpack.c.bf16 %v3233, %v3233
    %3242 = vst [vmem:[#allocation15] sm:$0xf] %v3234
    %3243 = vst [vmem:[#allocation15 + $0x4] sm:$0xf] %v3235
    %3244 = vst [vmem:[#allocation15 + $0x8] sm:$0xf] %v3236
    %3245 = vst [vmem:[#allocation15 + $0xc] sm:$0xf] %v3237
    %3246 = vst [vmem:[#allocation15 + $0x10] sm:$0xf] %v3238
    %3247 = vst [vmem:[#allocation15 + $0x14] sm:$0xf] %v3239
    %3248 = vst [vmem:[#allocation15 + $0x18] sm:$0xf] %v3240
    %3249 = vst [vmem:[#allocation15 + $0x1c] sm:$0xf] %v3241
    // Predicated region
    $region54: #{tpu_custom_call.1} parent=1 // pred_check
      _
    $region55: #{tpu_custom_call.1} parent=1 // pred_check_branch
      %3251 = sbr.rel (0) target = $region57
    $region56: #{tpu_custom_call.1} parent=1 // pred_region
      %s3253 = ssub.s32 512, 512
      %3254 = vsyncadd [#allocation8], %s3253
      %s3255 = sshll.u32 [#allocation15], 4
      %s3256 = int_to_ptr.vmem [resolvable:$true] %s3255
      %3261 = dma.vmem_to_hbm [thread:$0]  %s3256, 512, %s7, [#allocation8], 64, 64, 4
    $region57: #{tpu_custom_call.1} parent=1 // pred_fallthru
      _
    // Predicated region
    $region58: #{tpu_custom_call.1} parent=1 // pred_check
      _
    $region59: #{tpu_custom_call.1} parent=1 // pred_check_branch
      %3263 = sbr.rel (0) target = $region61
    $region60: #{tpu_custom_call.1} parent=1 // pred_region
      %3264 = dma.done [#allocation8], 512
    $region61: #{tpu_custom_call.1} parent=1 // pred_fallthru
      _
    %3265 = vsyncpa [#allocation7], 1
    %3266 = vsyncpa [#allocation10], 1
    %3267 = vsyncpa [#allocation13], 1
    %3268 = vsyncpa [#allocation8], 1

</llo_original>
